<compile_context>
chip_gen: v7x
topology: tpu7x:2x2x1
jax: 0.10.0
libtpu: 0.0.40
codegen_flags: <defaults>
</compile_context>

<pallas_src>
import functools
import math

import jax
import jax.numpy as jnp
from jax.experimental import pallas as pl
from jax.experimental.pallas import tpu as pltpu  # noqa: F401  (kept for TPU-specific tuning hooks)


# ---------------------------------------------------------------------------
# Fused Pallas kernel (specialized per static config: layer counts, T, H)
# ---------------------------------------------------------------------------
def _make_fused_kernel(num_shared, num_spec, T, H):
    n_lstm = num_shared + 2 * num_spec

    def kernel(*refs):
        # ref layout:
        #   [0]                         x          (T, B, Din)
        #   [1 .. 1+3*n_lstm)           per LSTM layer: wih (Din_l,4H), whh (H,4H), b (1,4H)
        #   [1+3*n_lstm .. +3)          head_w_act (H, P), head_w_ttne (H, P), head_b (1, P)
        #   [4+3*n_lstm]                out        (B, P)
        x_ref = refs[0]
        w_refs = refs[1:1 + 3 * n_lstm]
        head_wa_ref, head_wt_ref, head_b_ref = refs[1 + 3 * n_lstm:4 + 3 * n_lstm]
        out_ref = refs[4 + 3 * n_lstm]

        x = x_ref[...]                              # whole sequence resident in VMEM
        B = x.shape[1]

        def layer_params(k):
            return (w_refs[3 * k][...], w_refs[3 * k + 1][...], w_refs[3 * k + 2][...])

        def cell(x_t, h, c, wih, whh, b):
            # PyTorch gate order: i, f, g, o.  gates is (B, 4H) -> a full 128-lane
            # slab at H=32, so the sigmoid/tanh run full-width on the EUP.
            gates = (jnp.dot(x_t, wih, preferred_element_type=jnp.float32)
                     + jnp.dot(h, whh, preferred_element_type=jnp.float32)
                     + b)
            sg = jax.nn.sigmoid(gates)
            th = jnp.tanh(gates)
            i = sg[:, 0 * H:1 * H]
            f = sg[:, 1 * H:2 * H]
            g = th[:, 2 * H:3 * H]
            o = sg[:, 3 * H:4 * H]
            c_new = f * c + i * g
            h_new = o * jnp.tanh(c_new)
            return h_new, c_new

        def run_stack(seq_in, layer_ids, keep_seq):
            """seq_in: list of T (B, Din_l) values.  Returns (seq_out, h_last)."""
            seq = seq_in
            h_last = None
            for li, k in enumerate(layer_ids):
                wih, whh, b = layer_params(k)
                h = jnp.zeros((B, H), jnp.float32)
                c = jnp.zeros((B, H), jnp.float32)
                need_outs = keep_seq or (li < len(layer_ids) - 1)
                outs = []
                for t in range(T):                  # fully unrolled recurrence
                    h, c = cell(seq[t], h, c, wih, whh, b)
                    if need_outs:
                        outs.append(h)
                h_last = h
                if need_outs:
                    seq = outs
            return seq, h_last

        shared_ids = list(range(num_shared))
        act_ids = list(range(num_shared, num_shared + num_spec))
        ttne_ids = list(range(num_shared + num_spec, num_shared + 2 * num_spec))

        x_seq = [x[t] for t in range(T)]            # leading-axis slices (trivial reshape)
        shared_seq, _ = run_stack(x_seq, shared_ids, keep_seq=True)
        # bn_shared is already folded into the act/ttne layer-0 W_ih / bias.
        _, h_act = run_stack(shared_seq, act_ids, keep_seq=False)
        _, h_ttne = run_stack(shared_seq, ttne_ids, keep_seq=False)

        # Fused dense heads (bn_act / bn_ttne folded into the weights), one
        # lane-dense (B, P>=128) output slab: cols [0, A) = act logits, col A = ttne.
        out_ref[...] = (
            jnp.dot(h_act, head_wa_ref[...], preferred_element_type=jnp.float32)
            + jnp.dot(h_ttne, head_wt_ref[...], preferred_element_type=jnp.float32)
            + head_b_ref[...]
        )

    return kernel


def fused_sep_call(x_tm, lstm_layers, head_wa, head_wt, head_b,
                   num_shared, num_spec, H):
    T, B, _ = x_tm.shape
    P = head_wa.shape[1]
    kernel = _make_fused_kernel(num_shared, num_spec, T, H)
    args = [x_tm]
    for (wih, whh, b) in lstm_layers:
        args.extend([wih, whh, b])
    args.extend([head_wa, head_wt, head_b])
    # No grid: single invocation, every operand is a whole-array VMEM block.
    return pl.pallas_call(
        kernel,
        out_shape=jax.ShapeDtypeStruct((B, P), jnp.float32),
    )(*args)


# ---------------------------------------------------------------------------
# Parameter construction (deterministic, mirrors the PyTorch __init__)
# ---------------------------------------------------------------------------
def _xavier_uniform(key, shape):
    fan_out, fan_in = shape
    bound = math.sqrt(6.0 / (fan_in + fan_out))
    return jax.random.uniform(key, shape, jnp.float32, -bound, bound)


def _orthogonal(key, shape):
    # TODO(synk): PyTorch's orthogonal_ applies a sign correction from QR's R
    # diagonal; initialization fidelity only, no runtime impact.
    a = jax.random.normal(key, shape, jnp.float32)
    q, _ = jnp.linalg.qr(a)
    return q


def _init_lstm_stack(key, num_layers, input_size, hidden):
    layers = []
    kinv = 1.0 / math.sqrt(hidden)
    for l in range(num_layers):
        in_sz = input_size if l == 0 else hidden
        key, k1, k2, k3, k4 = jax.random.split(key, 5)
        w_ih = _xavier_uniform(k1, (4 * hidden, in_sz))      # xavier_uniform_
        w_hh = _orthogonal(k2, (4 * hidden, hidden))         # orthogonal_
        b_ih = jax.random.uniform(k3, (4 * hidden,), jnp.float32, -kinv, kinv)
        b_hh = jax.random.uniform(k4, (4 * hidden,), jnp.float32, -kinv, kinv)
        # pre-transposed to (Din, 4H) / (H, 4H); biases combined
        layers.append((w_ih.T, w_hh.T, (b_ih + b_hh)[None, :]))
    return layers, key


def init_params(key, d_model, num_activities, num_shared_layers, num_specialized_layers):
    emb_size_acts = min(600, round(1.6 * (num_activities - 2) ** 0.56))
    dim_init_prefix = emb_size_acts + 2

    key, k_emb = jax.random.split(key)
    emb = jax.random.normal(k_emb, (num_activities - 1, emb_size_acts), jnp.float32)
    emb = emb.at[0].set(0.0)                                 # padding_idx=0

    lstm_shared, key = _init_lstm_stack(key, num_shared_layers, dim_init_prefix, d_model)
    lstm_act, key = _init_lstm_stack(key, num_specialized_layers, d_model, d_model)
    lstm_ttne, key = _init_lstm_stack(key, num_specialized_layers, d_model, d_model)

    def bn_params(h):   # (gamma, beta, running_mean, running_var) -- eval mode
        return (jnp.ones((h,), jnp.float32), jnp.zeros((h,), jnp.float32),
                jnp.zeros((h,), jnp.float32), jnp.ones((h,), jnp.float32))

    key, k_wa, k_ba, k_wt, k_bt = jax.random.split(key, 5)
    kinv = 1.0 / math.sqrt(d_model)
    fc_act_w = _xavier_uniform(k_wa, (num_activities, d_model))
    fc_act_b = jax.random.uniform(k_ba, (num_activities,), jnp.float32, -kinv, kinv)
    fc_ttne_w = _xavier_uniform(k_wt, (1, d_model))
    fc_ttne_b = jax.random.uniform(k_bt, (1,), jnp.float32, -kinv, kinv)

    return {
        "act_embedding": emb,
        "lstm_shared": lstm_shared,
        "lstm_act": lstm_act,
        "lstm_ttne": lstm_ttne,
        "bn_shared": bn_params(d_model),
        "bn_act": bn_params(d_model),
        "bn_ttne": bn_params(d_model),
        "fc_act": (fc_act_w.T, fc_act_b[None, :]),
        "fc_ttne": (fc_ttne_w.T, fc_ttne_b[None, :]),
    }


# ---------------------------------------------------------------------------
# Compile-time re-parameterization: fold eval-mode BatchNorm into weights,
# build the combined lane-dense dense-head slab.
# ---------------------------------------------------------------------------
def _bn_scale_shift(bn, eps=1e-5):
    gamma, beta, mean, var = bn
    scale = gamma * jax.lax.rsqrt(var + eps)
    shift = beta - mean * scale
    return scale, shift


def _fold_bn_into_lstm_input(layer, bn, eps=1e-5):
    # LSTM input x' = x*scale + shift  =>  x' @ W = x @ (scale[:,None]*W) + shift @ W
    wih_t, whh_t, b = layer
    scale, shift = _bn_scale_shift(bn, eps)
    wih_f = wih_t * scale[:, None]
    b_f = b + (shift @ wih_t)[None, :]
    return (wih_f, whh_t, b_f)


def _fold_bn_into_fc(w_t, b, bn, eps=1e-5):
    scale, shift = _bn_scale_shift(bn, eps)
    w_f = w_t * scale[:, None]
    b_f = b + (shift @ w_t)[None, :]
    return w_f, b_f


def prepare_fused_params(params, d_model, num_activities):
    H = d_model
    lstm_act = list(params["lstm_act"])
    lstm_ttne = list(params["lstm_ttne"])
    # bn_shared acts on the input of BOTH specialized stacks' first layer.
    lstm_act[0] = _fold_bn_into_lstm_input(lstm_act[0], params["bn_shared"])
    lstm_ttne[0] = _fold_bn_into_lstm_input(lstm_ttne[0], params["bn_shared"])

    # bn_act / bn_ttne fold into the dense heads.
    wa_t, ba = _fold_bn_into_fc(*params["fc_act"], params["bn_act"])
    wt_t, bt = _fold_bn_into_fc(*params["fc_ttne"], params["bn_ttne"])

    total = num_activities + 1
    out_pad = max(128, ((total + 127) // 128) * 128)         # lane-dense output slab
    head_wa = jnp.zeros((H, out_pad), jnp.float32).at[:, :num_activities].set(wa_t)
    head_wt = (jnp.zeros((H, out_pad), jnp.float32)
               .at[:, num_activities:num_activities + 1].set(wt_t))
    head_b = (jnp.zeros((1, out_pad), jnp.float32)
              .at[:, :num_activities].set(ba)
              .at[:, num_activities:num_activities + 1].set(bt))

    return {
        "act_embedding": params["act_embedding"],
        "lstm_layers": list(params["lstm_shared"]) + lstm_act + lstm_ttne,
        "num_shared": len(params["lstm_shared"]),
        "num_spec": len(params["lstm_act"]),
        "head_wa": head_wa,
        "head_wt": head_wt,
        "head_b": head_b,
        "d_model": d_model,
        "num_activities": num_activities,
    }


# ---------------------------------------------------------------------------
# Forward pass (mirrors SEP_Benchmarks_time.forward, eval mode)
# ---------------------------------------------------------------------------
def sep_forward(fp, prefix_acts, time_features):
    A = fp["num_activities"]
    # Embedding gather kept in XLA; indices transposed first so the gather
    # directly produces the time-major layout (no standalone activation transpose).
    x_emb_tm = jnp.take(fp["act_embedding"], prefix_acts.T, axis=0)        # (T, B, E)
    tf_tm = jnp.transpose(time_features.astype(jnp.float32), (1, 0, 2))    # (T, B, 2)
    x_tm = jnp.concatenate([x_emb_tm, tf_tm], axis=-1)                     # (T, B, Din)
    # dropout: eval mode -> identity; BatchNorm: eval mode, folded into weights.

    out = fused_sep_call(x_tm, fp["lstm_layers"], fp["head_wa"], fp["head_wt"],
                         fp["head_b"], fp["num_shared"], fp["num_spec"], fp["d_model"])

    act_probs = out[:, :A]                   # raw logits, same as the reference
    ttne_pred = out[:, A:A + 1]
    return act_probs, ttne_pred


# ---------------------------------------------------------------------------
if __name__ == "__main__":
    B, T = 2, 8
    d_model = 32
    num_activities = 12
    num_shared_layers = 1
    num_specialized_layers = 1

    params = init_params(jax.random.PRNGKey(0), d_model, num_activities,
                         num_shared_layers, num_specialized_layers)
    fused = prepare_fused_params(params, d_model, num_activities)

    k_acts, k_time = jax.random.split(jax.random.PRNGKey(0))
    # activity labels in [0, num_activities-2] (embedding has num_activities-1 rows)
    prefix_acts = jax.random.randint(k_acts, (B, T), 0, num_activities - 1)
    time_features = jax.random.normal(k_time, (B, T, 2), jnp.float32)

    fwd = jax.jit(functools.partial(sep_forward, fused))
    act_probs, ttne_pred = fwd(prefix_acts, time_features)
    jax.block_until_ready((act_probs, ttne_pred))

    assert act_probs.shape == (B, num_activities)
    assert ttne_pred.shape == (B, 1)
    assert bool(jnp.all(jnp.isfinite(act_probs))) and bool(jnp.all(jnp.isfinite(ttne_pred)))
    print("KERNEL_OK")
</pallas_src>

<mosaic_0001>
module attributes {stable_mosaic.version = 11 : i64} {
  func.func @kernel(%arg0: memref<8x2x8xf32, #tpu.memory_space<vmem>>, %arg1: memref<8x128xf32, #tpu.memory_space<vmem>>, %arg2: memref<32x128xf32, #tpu.memory_space<vmem>>, %arg3: memref<1x128xf32, #tpu.memory_space<vmem>>, %arg4: memref<32x128xf32, #tpu.memory_space<vmem>>, %arg5: memref<32x128xf32, #tpu.memory_space<vmem>>, %arg6: memref<1x128xf32, #tpu.memory_space<vmem>>, %arg7: memref<32x128xf32, #tpu.memory_space<vmem>>, %arg8: memref<32x128xf32, #tpu.memory_space<vmem>>, %arg9: memref<1x128xf32, #tpu.memory_space<vmem>>, %arg10: memref<32x128xf32, #tpu.memory_space<vmem>>, %arg11: memref<32x128xf32, #tpu.memory_space<vmem>>, %arg12: memref<1x128xf32, #tpu.memory_space<vmem>>, %arg13: memref<2x128xf32, #tpu.memory_space<vmem>>) attributes {dimension_semantics = [], scalar_prefetch = 0 : i64, scratch_operands = 0 : i64, tpu.core_type = #tpu.core_type<tc>} {
    %c0 = arith.constant 0 : index
    %c0_0 = arith.constant 0 : index
    %c0_1 = arith.constant 0 : index
    %0 = vector.load %arg0[%c0, %c0_0, %c0_1] : memref<8x2x8xf32, #tpu.memory_space<vmem>>, vector<8x2x8xf32>
    %1 = vector.extract_strided_slice %0 {offsets = [0, 0, 0], sizes = [1, 2, 8], strides = [1, 1, 1]} : vector<8x2x8xf32> to vector<1x2x8xf32>
    %2 = vector.shape_cast %1 : vector<1x2x8xf32> to vector<2x8xf32>
    %3 = vector.extract_strided_slice %0 {offsets = [1, 0, 0], sizes = [1, 2, 8], strides = [1, 1, 1]} : vector<8x2x8xf32> to vector<1x2x8xf32>
    %4 = vector.shape_cast %3 : vector<1x2x8xf32> to vector<2x8xf32>
    %5 = vector.extract_strided_slice %0 {offsets = [2, 0, 0], sizes = [1, 2, 8], strides = [1, 1, 1]} : vector<8x2x8xf32> to vector<1x2x8xf32>
    %6 = vector.shape_cast %5 : vector<1x2x8xf32> to vector<2x8xf32>
    %7 = vector.extract_strided_slice %0 {offsets = [3, 0, 0], sizes = [1, 2, 8], strides = [1, 1, 1]} : vector<8x2x8xf32> to vector<1x2x8xf32>
    %8 = vector.shape_cast %7 : vector<1x2x8xf32> to vector<2x8xf32>
    %9 = vector.extract_strided_slice %0 {offsets = [4, 0, 0], sizes = [1, 2, 8], strides = [1, 1, 1]} : vector<8x2x8xf32> to vector<1x2x8xf32>
    %10 = vector.shape_cast %9 : vector<1x2x8xf32> to vector<2x8xf32>
    %11 = vector.extract_strided_slice %0 {offsets = [5, 0, 0], sizes = [1, 2, 8], strides = [1, 1, 1]} : vector<8x2x8xf32> to vector<1x2x8xf32>
    %12 = vector.shape_cast %11 : vector<1x2x8xf32> to vector<2x8xf32>
    %13 = vector.extract_strided_slice %0 {offsets = [6, 0, 0], sizes = [1, 2, 8], strides = [1, 1, 1]} : vector<8x2x8xf32> to vector<1x2x8xf32>
    %14 = vector.shape_cast %13 : vector<1x2x8xf32> to vector<2x8xf32>
    %15 = vector.extract_strided_slice %0 {offsets = [7, 0, 0], sizes = [1, 2, 8], strides = [1, 1, 1]} : vector<8x2x8xf32> to vector<1x2x8xf32>
    %16 = vector.shape_cast %15 : vector<1x2x8xf32> to vector<2x8xf32>
    %c0_2 = arith.constant 0 : index
    %c0_3 = arith.constant 0 : index
    %17 = vector.load %arg1[%c0_2, %c0_3] : memref<8x128xf32, #tpu.memory_space<vmem>>, vector<8x128xf32>
    %c0_4 = arith.constant 0 : index
    %c0_5 = arith.constant 0 : index
    %18 = vector.load %arg2[%c0_4, %c0_5] : memref<32x128xf32, #tpu.memory_space<vmem>>, vector<32x128xf32>
    %c0_6 = arith.constant 0 : index
    %c0_7 = arith.constant 0 : index
    %19 = vector.load %arg3[%c0_6, %c0_7] : memref<1x128xf32, #tpu.memory_space<vmem>>, vector<1x128xf32>
    %cst = arith.constant 0.000000e+00 : f32
    %20 = vector.broadcast %cst : f32 to vector<2x32xf32>
    %cst_8 = arith.constant 0.000000e+00 : f32
    %21 = vector.broadcast %cst_8 : f32 to vector<2x32xf32>
    %cst_9 = arith.constant dense<0.000000e+00> : vector<2x128xf32>
    %22 = tpu.matmul %2, %17, %cst_9 {dimension_numbers = #tpu.dot_dimension_numbers<[1], [0], [0], [1], [0, 0, 1, 1], [], []>} : vector<2x8xf32>, vector<8x128xf32>, vector<2x128xf32> -> vector<2x128xf32>
    %cst_10 = arith.constant dense<0.000000e+00> : vector<2x128xf32>
    %23 = tpu.matmul %20, %18, %cst_10 {dimension_numbers = #tpu.dot_dimension_numbers<[1], [0], [0], [1], [0, 0, 1, 1], [], []>} : vector<2x32xf32>, vector<32x128xf32>, vector<2x128xf32> -> vector<2x128xf32>
    %24 = arith.addf %22, %23 : vector<2x128xf32>
    %25 = vector.broadcast %19 : vector<1x128xf32> to vector<2x128xf32>
    %26 = arith.addf %24, %25 : vector<2x128xf32>
    %27 = arith.negf %26 : vector<2x128xf32>
    %28 = math.exp %27 : vector<2x128xf32>
    %cst_11 = arith.constant 1.000000e+00 : f32
    %29 = vector.broadcast %cst_11 : f32 to vector<2x128xf32>
    %30 = arith.addf %29, %28 : vector<2x128xf32>
    %31 = arith.divf %29, %30 : vector<2x128xf32>
    %32 = math.tanh %26 : vector<2x128xf32>
    %33 = vector.extract_strided_slice %31 {offsets = [0, 0], sizes = [2, 32], strides = [1, 1]} : vector<2x128xf32> to vector<2x32xf32>
    %34 = vector.extract_strided_slice %31 {offsets = [0, 32], sizes = [2, 32], strides = [1, 1]} : vector<2x128xf32> to vector<2x32xf32>
    %35 = vector.extract_strided_slice %32 {offsets = [0, 64], sizes = [2, 32], strides = [1, 1]} : vector<2x128xf32> to vector<2x32xf32>
    %36 = vector.extract_strided_slice %31 {offsets = [0, 96], sizes = [2, 32], strides = [1, 1]} : vector<2x128xf32> to vector<2x32xf32>
    %37 = arith.mulf %34, %21 : vector<2x32xf32>
    %38 = arith.mulf %33, %35 : vector<2x32xf32>
    %39 = arith.addf %37, %38 : vector<2x32xf32>
    %40 = math.tanh %39 : vector<2x32xf32>
    %41 = arith.mulf %36, %40 : vector<2x32xf32>
    %cst_12 = arith.constant dense<0.000000e+00> : vector<2x128xf32>
    %42 = tpu.matmul %4, %17, %cst_12 {dimension_numbers = #tpu.dot_dimension_numbers<[1], [0], [0], [1], [0, 0, 1, 1], [], []>} : vector<2x8xf32>, vector<8x128xf32>, vector<2x128xf32> -> vector<2x128xf32>
    %cst_13 = arith.constant dense<0.000000e+00> : vector<2x128xf32>
    %43 = tpu.matmul %41, %18, %cst_13 {dimension_numbers = #tpu.dot_dimension_numbers<[1], [0], [0], [1], [0, 0, 1, 1], [], []>} : vector<2x32xf32>, vector<32x128xf32>, vector<2x128xf32> -> vector<2x128xf32>
    %44 = arith.addf %42, %43 : vector<2x128xf32>
    %45 = vector.broadcast %19 : vector<1x128xf32> to vector<2x128xf32>
    %46 = arith.addf %44, %45 : vector<2x128xf32>
    %47 = arith.negf %46 : vector<2x128xf32>
    %48 = math.exp %47 : vector<2x128xf32>
    %cst_14 = arith.constant 1.000000e+00 : f32
    %49 = vector.broadcast %cst_14 : f32 to vector<2x128xf32>
    %50 = arith.addf %49, %48 : vector<2x128xf32>
    %51 = arith.divf %49, %50 : vector<2x128xf32>
    %52 = math.tanh %46 : vector<2x128xf32>
    %53 = vector.extract_strided_slice %51 {offsets = [0, 0], sizes = [2, 32], strides = [1, 1]} : vector<2x128xf32> to vector<2x32xf32>
    %54 = vector.extract_strided_slice %51 {offsets = [0, 32], sizes = [2, 32], strides = [1, 1]} : vector<2x128xf32> to vector<2x32xf32>
    %55 = vector.extract_strided_slice %52 {offsets = [0, 64], sizes = [2, 32], strides = [1, 1]} : vector<2x128xf32> to vector<2x32xf32>
    %56 = vector.extract_strided_slice %51 {offsets = [0, 96], sizes = [2, 32], strides = [1, 1]} : vector<2x128xf32> to vector<2x32xf32>
    %57 = arith.mulf %54, %39 : vector<2x32xf32>
    %58 = arith.mulf %53, %55 : vector<2x32xf32>
    %59 = arith.addf %57, %58 : vector<2x32xf32>
    %60 = math.tanh %59 : vector<2x32xf32>
    %61 = arith.mulf %56, %60 : vector<2x32xf32>
    %cst_15 = arith.constant dense<0.000000e+00> : vector<2x128xf32>
    %62 = tpu.matmul %6, %17, %cst_15 {dimension_numbers = #tpu.dot_dimension_numbers<[1], [0], [0], [1], [0, 0, 1, 1], [], []>} : vector<2x8xf32>, vector<8x128xf32>, vector<2x128xf32> -> vector<2x128xf32>
    %cst_16 = arith.constant dense<0.000000e+00> : vector<2x128xf32>
    %63 = tpu.matmul %61, %18, %cst_16 {dimension_numbers = #tpu.dot_dimension_numbers<[1], [0], [0], [1], [0, 0, 1, 1], [], []>} : vector<2x32xf32>, vector<32x128xf32>, vector<2x128xf32> -> vector<2x128xf32>
    %64 = arith.addf %62, %63 : vector<2x128xf32>
    %65 = vector.broadcast %19 : vector<1x128xf32> to vector<2x128xf32>
    %66 = arith.addf %64, %65 : vector<2x128xf32>
    %67 = arith.negf %66 : vector<2x128xf32>
    %68 = math.exp %67 : vector<2x128xf32>
    %cst_17 = arith.constant 1.000000e+00 : f32
    %69 = vector.broadcast %cst_17 : f32 to vector<2x128xf32>
    %70 = arith.addf %69, %68 : vector<2x128xf32>
    %71 = arith.divf %69, %70 : vector<2x128xf32>
    %72 = math.tanh %66 : vector<2x128xf32>
    %73 = vector.extract_strided_slice %71 {offsets = [0, 0], sizes = [2, 32], strides = [1, 1]} : vector<2x128xf32> to vector<2x32xf32>
    %74 = vector.extract_strided_slice %71 {offsets = [0, 32], sizes = [2, 32], strides = [1, 1]} : vector<2x128xf32> to vector<2x32xf32>
    %75 = vector.extract_strided_slice %72 {offsets = [0, 64], sizes = [2, 32], strides = [1, 1]} : vector<2x128xf32> to vector<2x32xf32>
    %76 = vector.extract_strided_slice %71 {offsets = [0, 96], sizes = [2, 32], strides = [1, 1]} : vector<2x128xf32> to vector<2x32xf32>
    %77 = arith.mulf %74, %59 : vector<2x32xf32>
    %78 = arith.mulf %73, %75 : vector<2x32xf32>
    %79 = arith.addf %77, %78 : vector<2x32xf32>
    %80 = math.tanh %79 : vector<2x32xf32>
    %81 = arith.mulf %76, %80 : vector<2x32xf32>
    %cst_18 = arith.constant dense<0.000000e+00> : vector<2x128xf32>
    %82 = tpu.matmul %8, %17, %cst_18 {dimension_numbers = #tpu.dot_dimension_numbers<[1], [0], [0], [1], [0, 0, 1, 1], [], []>} : vector<2x8xf32>, vector<8x128xf32>, vector<2x128xf32> -> vector<2x128xf32>
    %cst_19 = arith.constant dense<0.000000e+00> : vector<2x128xf32>
    %83 = tpu.matmul %81, %18, %cst_19 {dimension_numbers = #tpu.dot_dimension_numbers<[1], [0], [0], [1], [0, 0, 1, 1], [], []>} : vector<2x32xf32>, vector<32x128xf32>, vector<2x128xf32> -> vector<2x128xf32>
    %84 = arith.addf %82, %83 : vector<2x128xf32>
    %85 = vector.broadcast %19 : vector<1x128xf32> to vector<2x128xf32>
    %86 = arith.addf %84, %85 : vector<2x128xf32>
    %87 = arith.negf %86 : vector<2x128xf32>
    %88 = math.exp %87 : vector<2x128xf32>
    %cst_20 = arith.constant 1.000000e+00 : f32
    %89 = vector.broadcast %cst_20 : f32 to vector<2x128xf32>
    %90 = arith.addf %89, %88 : vector<2x128xf32>
    %91 = arith.divf %89, %90 : vector<2x128xf32>
    %92 = math.tanh %86 : vector<2x128xf32>
    %93 = vector.extract_strided_slice %91 {offsets = [0, 0], sizes = [2, 32], strides = [1, 1]} : vector<2x128xf32> to vector<2x32xf32>
    %94 = vector.extract_strided_slice %91 {offsets = [0, 32], sizes = [2, 32], strides = [1, 1]} : vector<2x128xf32> to vector<2x32xf32>
    %95 = vector.extract_strided_slice %92 {offsets = [0, 64], sizes = [2, 32], strides = [1, 1]} : vector<2x128xf32> to vector<2x32xf32>
    %96 = vector.extract_strided_slice %91 {offsets = [0, 96], sizes = [2, 32], strides = [1, 1]} : vector<2x128xf32> to vector<2x32xf32>
    %97 = arith.mulf %94, %79 : vector<2x32xf32>
    %98 = arith.mulf %93, %95 : vector<2x32xf32>
    %99 = arith.addf %97, %98 : vector<2x32xf32>
    %100 = math.tanh %99 : vector<2x32xf32>
    %101 = arith.mulf %96, %100 : vector<2x32xf32>
    %cst_21 = arith.constant dense<0.000000e+00> : vector<2x128xf32>
    %102 = tpu.matmul %10, %17, %cst_21 {dimension_numbers = #tpu.dot_dimension_numbers<[1], [0], [0], [1], [0, 0, 1, 1], [], []>} : vector<2x8xf32>, vector<8x128xf32>, vector<2x128xf32> -> vector<2x128xf32>
    %cst_22 = arith.constant dense<0.000000e+00> : vector<2x128xf32>
    %103 = tpu.matmul %101, %18, %cst_22 {dimension_numbers = #tpu.dot_dimension_numbers<[1], [0], [0], [1], [0, 0, 1, 1], [], []>} : vector<2x32xf32>, vector<32x128xf32>, vector<2x128xf32> -> vector<2x128xf32>
    %104 = arith.addf %102, %103 : vector<2x128xf32>
    %105 = vector.broadcast %19 : vector<1x128xf32> to vector<2x128xf32>
    %106 = arith.addf %104, %105 : vector<2x128xf32>
    %107 = arith.negf %106 : vector<2x128xf32>
    %108 = math.exp %107 : vector<2x128xf32>
    %cst_23 = arith.constant 1.000000e+00 : f32
    %109 = vector.broadcast %cst_23 : f32 to vector<2x128xf32>
    %110 = arith.addf %109, %108 : vector<2x128xf32>
    %111 = arith.divf %109, %110 : vector<2x128xf32>
    %112 = math.tanh %106 : vector<2x128xf32>
    %113 = vector.extract_strided_slice %111 {offsets = [0, 0], sizes = [2, 32], strides = [1, 1]} : vector<2x128xf32> to vector<2x32xf32>
    %114 = vector.extract_strided_slice %111 {offsets = [0, 32], sizes = [2, 32], strides = [1, 1]} : vector<2x128xf32> to vector<2x32xf32>
    %115 = vector.extract_strided_slice %112 {offsets = [0, 64], sizes = [2, 32], strides = [1, 1]} : vector<2x128xf32> to vector<2x32xf32>
    %116 = vector.extract_strided_slice %111 {offsets = [0, 96], sizes = [2, 32], strides = [1, 1]} : vector<2x128xf32> to vector<2x32xf32>
    %117 = arith.mulf %114, %99 : vector<2x32xf32>
    %118 = arith.mulf %113, %115 : vector<2x32xf32>
    %119 = arith.addf %117, %118 : vector<2x32xf32>
    %120 = math.tanh %119 : vector<2x32xf32>
    %121 = arith.mulf %116, %120 : vector<2x32xf32>
    %cst_24 = arith.constant dense<0.000000e+00> : vector<2x128xf32>
    %122 = tpu.matmul %12, %17, %cst_24 {dimension_numbers = #tpu.dot_dimension_numbers<[1], [0], [0], [1], [0, 0, 1, 1], [], []>} : vector<2x8xf32>, vector<8x128xf32>, vector<2x128xf32> -> vector<2x128xf32>
    %cst_25 = arith.constant dense<0.000000e+00> : vector<2x128xf32>
    %123 = tpu.matmul %121, %18, %cst_25 {dimension_numbers = #tpu.dot_dimension_numbers<[1], [0], [0], [1], [0, 0, 1, 1], [], []>} : vector<2x32xf32>, vector<32x128xf32>, vector<2x128xf32> -> vector<2x128xf32>
    %124 = arith.addf %122, %123 : vector<2x128xf32>
    %125 = vector.broadcast %19 : vector<1x128xf32> to vector<2x128xf32>
    %126 = arith.addf %124, %125 : vector<2x128xf32>
    %127 = arith.negf %126 : vector<2x128xf32>
    %128 = math.exp %127 : vector<2x128xf32>
    %cst_26 = arith.constant 1.000000e+00 : f32
    %129 = vector.broadcast %cst_26 : f32 to vector<2x128xf32>
    %130 = arith.addf %129, %128 : vector<2x128xf32>
    %131 = arith.divf %129, %130 : vector<2x128xf32>
    %132 = math.tanh %126 : vector<2x128xf32>
    %133 = vector.extract_strided_slice %131 {offsets = [0, 0], sizes = [2, 32], strides = [1, 1]} : vector<2x128xf32> to vector<2x32xf32>
    %134 = vector.extract_strided_slice %131 {offsets = [0, 32], sizes = [2, 32], strides = [1, 1]} : vector<2x128xf32> to vector<2x32xf32>
    %135 = vector.extract_strided_slice %132 {offsets = [0, 64], sizes = [2, 32], strides = [1, 1]} : vector<2x128xf32> to vector<2x32xf32>
    %136 = vector.extract_strided_slice %131 {offsets = [0, 96], sizes = [2, 32], strides = [1, 1]} : vector<2x128xf32> to vector<2x32xf32>
    %137 = arith.mulf %134, %119 : vector<2x32xf32>
    %138 = arith.mulf %133, %135 : vector<2x32xf32>
    %139 = arith.addf %137, %138 : vector<2x32xf32>
    %140 = math.tanh %139 : vector<2x32xf32>
    %141 = arith.mulf %136, %140 : vector<2x32xf32>
    %cst_27 = arith.constant dense<0.000000e+00> : vector<2x128xf32>
    %142 = tpu.matmul %14, %17, %cst_27 {dimension_numbers = #tpu.dot_dimension_numbers<[1], [0], [0], [1], [0, 0, 1, 1], [], []>} : vector<2x8xf32>, vector<8x128xf32>, vector<2x128xf32> -> vector<2x128xf32>
    %cst_28 = arith.constant dense<0.000000e+00> : vector<2x128xf32>
    %143 = tpu.matmul %141, %18, %cst_28 {dimension_numbers = #tpu.dot_dimension_numbers<[1], [0], [0], [1], [0, 0, 1, 1], [], []>} : vector<2x32xf32>, vector<32x128xf32>, vector<2x128xf32> -> vector<2x128xf32>
    %144 = arith.addf %142, %143 : vector<2x128xf32>
    %145 = vector.broadcast %19 : vector<1x128xf32> to vector<2x128xf32>
    %146 = arith.addf %144, %145 : vector<2x128xf32>
    %147 = arith.negf %146 : vector<2x128xf32>
    %148 = math.exp %147 : vector<2x128xf32>
    %cst_29 = arith.constant 1.000000e+00 : f32
    %149 = vector.broadcast %cst_29 : f32 to vector<2x128xf32>
    %150 = arith.addf %149, %148 : vector<2x128xf32>
    %151 = arith.divf %149, %150 : vector<2x128xf32>
    %152 = math.tanh %146 : vector<2x128xf32>
    %153 = vector.extract_strided_slice %151 {offsets = [0, 0], sizes = [2, 32], strides = [1, 1]} : vector<2x128xf32> to vector<2x32xf32>
    %154 = vector.extract_strided_slice %151 {offsets = [0, 32], sizes = [2, 32], strides = [1, 1]} : vector<2x128xf32> to vector<2x32xf32>
    %155 = vector.extract_strided_slice %152 {offsets = [0, 64], sizes = [2, 32], strides = [1, 1]} : vector<2x128xf32> to vector<2x32xf32>
    %156 = vector.extract_strided_slice %151 {offsets = [0, 96], sizes = [2, 32], strides = [1, 1]} : vector<2x128xf32> to vector<2x32xf32>
    %157 = arith.mulf %154, %139 : vector<2x32xf32>
    %158 = arith.mulf %153, %155 : vector<2x32xf32>
    %159 = arith.addf %157, %158 : vector<2x32xf32>
    %160 = math.tanh %159 : vector<2x32xf32>
    %161 = arith.mulf %156, %160 : vector<2x32xf32>
    %cst_30 = arith.constant dense<0.000000e+00> : vector<2x128xf32>
    %162 = tpu.matmul %16, %17, %cst_30 {dimension_numbers = #tpu.dot_dimension_numbers<[1], [0], [0], [1], [0, 0, 1, 1], [], []>} : vector<2x8xf32>, vector<8x128xf32>, vector<2x128xf32> -> vector<2x128xf32>
    %cst_31 = arith.constant dense<0.000000e+00> : vector<2x128xf32>
    %163 = tpu.matmul %161, %18, %cst_31 {dimension_numbers = #tpu.dot_dimension_numbers<[1], [0], [0], [1], [0, 0, 1, 1], [], []>} : vector<2x32xf32>, vector<32x128xf32>, vector<2x128xf32> -> vector<2x128xf32>
    %164 = arith.addf %162, %163 : vector<2x128xf32>
    %165 = vector.broadcast %19 : vector<1x128xf32> to vector<2x128xf32>
    %166 = arith.addf %164, %165 : vector<2x128xf32>
    %167 = arith.negf %166 : vector<2x128xf32>
    %168 = math.exp %167 : vector<2x128xf32>
    %cst_32 = arith.constant 1.000000e+00 : f32
    %169 = vector.broadcast %cst_32 : f32 to vector<2x128xf32>
    %170 = arith.addf %169, %168 : vector<2x128xf32>
    %171 = arith.divf %169, %170 : vector<2x128xf32>
    %172 = math.tanh %166 : vector<2x128xf32>
    %173 = vector.extract_strided_slice %171 {offsets = [0, 0], sizes = [2, 32], strides = [1, 1]} : vector<2x128xf32> to vector<2x32xf32>
    %174 = vector.extract_strided_slice %171 {offsets = [0, 32], sizes = [2, 32], strides = [1, 1]} : vector<2x128xf32> to vector<2x32xf32>
    %175 = vector.extract_strided_slice %172 {offsets = [0, 64], sizes = [2, 32], strides = [1, 1]} : vector<2x128xf32> to vector<2x32xf32>
    %176 = vector.extract_strided_slice %171 {offsets = [0, 96], sizes = [2, 32], strides = [1, 1]} : vector<2x128xf32> to vector<2x32xf32>
    %177 = arith.mulf %174, %159 : vector<2x32xf32>
    %178 = arith.mulf %173, %175 : vector<2x32xf32>
    %179 = arith.addf %177, %178 : vector<2x32xf32>
    %180 = math.tanh %179 : vector<2x32xf32>
    %181 = arith.mulf %176, %180 : vector<2x32xf32>
    %c0_33 = arith.constant 0 : index
    %c0_34 = arith.constant 0 : index
    %182 = vector.load %arg4[%c0_33, %c0_34] : memref<32x128xf32, #tpu.memory_space<vmem>>, vector<32x128xf32>
    %c0_35 = arith.constant 0 : index
    %c0_36 = arith.constant 0 : index
    %183 = vector.load %arg5[%c0_35, %c0_36] : memref<32x128xf32, #tpu.memory_space<vmem>>, vector<32x128xf32>
    %c0_37 = arith.constant 0 : index
    %c0_38 = arith.constant 0 : index
    %184 = vector.load %arg6[%c0_37, %c0_38] : memref<1x128xf32, #tpu.memory_space<vmem>>, vector<1x128xf32>
    %cst_39 = arith.constant 0.000000e+00 : f32
    %185 = vector.broadcast %cst_39 : f32 to vector<2x32xf32>
    %cst_40 = arith.constant 0.000000e+00 : f32
    %186 = vector.broadcast %cst_40 : f32 to vector<2x32xf32>
    %cst_41 = arith.constant dense<0.000000e+00> : vector<2x128xf32>
    %187 = tpu.matmul %41, %182, %cst_41 {dimension_numbers = #tpu.dot_dimension_numbers<[1], [0], [0], [1], [0, 0, 1, 1], [], []>} : vector<2x32xf32>, vector<32x128xf32>, vector<2x128xf32> -> vector<2x128xf32>
    %cst_42 = arith.constant dense<0.000000e+00> : vector<2x128xf32>
    %188 = tpu.matmul %185, %183, %cst_42 {dimension_numbers = #tpu.dot_dimension_numbers<[1], [0], [0], [1], [0, 0, 1, 1], [], []>} : vector<2x32xf32>, vector<32x128xf32>, vector<2x128xf32> -> vector<2x128xf32>
    %189 = arith.addf %187, %188 : vector<2x128xf32>
    %190 = vector.broadcast %184 : vector<1x128xf32> to vector<2x128xf32>
    %191 = arith.addf %189, %190 : vector<2x128xf32>
    %192 = arith.negf %191 : vector<2x128xf32>
    %193 = math.exp %192 : vector<2x128xf32>
    %cst_43 = arith.constant 1.000000e+00 : f32
    %194 = vector.broadcast %cst_43 : f32 to vector<2x128xf32>
    %195 = arith.addf %194, %193 : vector<2x128xf32>
    %196 = arith.divf %194, %195 : vector<2x128xf32>
    %197 = math.tanh %191 : vector<2x128xf32>
    %198 = vector.extract_strided_slice %196 {offsets = [0, 0], sizes = [2, 32], strides = [1, 1]} : vector<2x128xf32> to vector<2x32xf32>
    %199 = vector.extract_strided_slice %196 {offsets = [0, 32], sizes = [2, 32], strides = [1, 1]} : vector<2x128xf32> to vector<2x32xf32>
    %200 = vector.extract_strided_slice %197 {offsets = [0, 64], sizes = [2, 32], strides = [1, 1]} : vector<2x128xf32> to vector<2x32xf32>
    %201 = vector.extract_strided_slice %196 {offsets = [0, 96], sizes = [2, 32], strides = [1, 1]} : vector<2x128xf32> to vector<2x32xf32>
    %202 = arith.mulf %199, %186 : vector<2x32xf32>
    %203 = arith.mulf %198, %200 : vector<2x32xf32>
    %204 = arith.addf %202, %203 : vector<2x32xf32>
    %205 = math.tanh %204 : vector<2x32xf32>
    %206 = arith.mulf %201, %205 : vector<2x32xf32>
    %cst_44 = arith.constant dense<0.000000e+00> : vector<2x128xf32>
    %207 = tpu.matmul %61, %182, %cst_44 {dimension_numbers = #tpu.dot_dimension_numbers<[1], [0], [0], [1], [0, 0, 1, 1], [], []>} : vector<2x32xf32>, vector<32x128xf32>, vector<2x128xf32> -> vector<2x128xf32>
    %cst_45 = arith.constant dense<0.000000e+00> : vector<2x128xf32>
    %208 = tpu.matmul %206, %183, %cst_45 {dimension_numbers = #tpu.dot_dimension_numbers<[1], [0], [0], [1], [0, 0, 1, 1], [], []>} : vector<2x32xf32>, vector<32x128xf32>, vector<2x128xf32> -> vector<2x128xf32>
    %209 = arith.addf %207, %208 : vector<2x128xf32>
    %210 = vector.broadcast %184 : vector<1x128xf32> to vector<2x128xf32>
    %211 = arith.addf %209, %210 : vector<2x128xf32>
    %212 = arith.negf %211 : vector<2x128xf32>
    %213 = math.exp %212 : vector<2x128xf32>
    %cst_46 = arith.constant 1.000000e+00 : f32
    %214 = vector.broadcast %cst_46 : f32 to vector<2x128xf32>
    %215 = arith.addf %214, %213 : vector<2x128xf32>
    %216 = arith.divf %214, %215 : vector<2x128xf32>
    %217 = math.tanh %211 : vector<2x128xf32>
    %218 = vector.extract_strided_slice %216 {offsets = [0, 0], sizes = [2, 32], strides = [1, 1]} : vector<2x128xf32> to vector<2x32xf32>
    %219 = vector.extract_strided_slice %216 {offsets = [0, 32], sizes = [2, 32], strides = [1, 1]} : vector<2x128xf32> to vector<2x32xf32>
    %220 = vector.extract_strided_slice %217 {offsets = [0, 64], sizes = [2, 32], strides = [1, 1]} : vector<2x128xf32> to vector<2x32xf32>
    %221 = vector.extract_strided_slice %216 {offsets = [0, 96], sizes = [2, 32], strides = [1, 1]} : vector<2x128xf32> to vector<2x32xf32>
    %222 = arith.mulf %219, %204 : vector<2x32xf32>
    %223 = arith.mulf %218, %220 : vector<2x32xf32>
    %224 = arith.addf %222, %223 : vector<2x32xf32>
    %225 = math.tanh %224 : vector<2x32xf32>
    %226 = arith.mulf %221, %225 : vector<2x32xf32>
    %cst_47 = arith.constant dense<0.000000e+00> : vector<2x128xf32>
    %227 = tpu.matmul %81, %182, %cst_47 {dimension_numbers = #tpu.dot_dimension_numbers<[1], [0], [0], [1], [0, 0, 1, 1], [], []>} : vector<2x32xf32>, vector<32x128xf32>, vector<2x128xf32> -> vector<2x128xf32>
    %cst_48 = arith.constant dense<0.000000e+00> : vector<2x128xf32>
    %228 = tpu.matmul %226, %183, %cst_48 {dimension_numbers = #tpu.dot_dimension_numbers<[1], [0], [0], [1], [0, 0, 1, 1], [], []>} : vector<2x32xf32>, vector<32x128xf32>, vector<2x128xf32> -> vector<2x128xf32>
    %229 = arith.addf %227, %228 : vector<2x128xf32>
    %230 = vector.broadcast %184 : vector<1x128xf32> to vector<2x128xf32>
    %231 = arith.addf %229, %230 : vector<2x128xf32>
    %232 = arith.negf %231 : vector<2x128xf32>
    %233 = math.exp %232 : vector<2x128xf32>
    %cst_49 = arith.constant 1.000000e+00 : f32
    %234 = vector.broadcast %cst_49 : f32 to vector<2x128xf32>
    %235 = arith.addf %234, %233 : vector<2x128xf32>
    %236 = arith.divf %234, %235 : vector<2x128xf32>
    %237 = math.tanh %231 : vector<2x128xf32>
    %238 = vector.extract_strided_slice %236 {offsets = [0, 0], sizes = [2, 32], strides = [1, 1]} : vector<2x128xf32> to vector<2x32xf32>
    %239 = vector.extract_strided_slice %236 {offsets = [0, 32], sizes = [2, 32], strides = [1, 1]} : vector<2x128xf32> to vector<2x32xf32>
    %240 = vector.extract_strided_slice %237 {offsets = [0, 64], sizes = [2, 32], strides = [1, 1]} : vector<2x128xf32> to vector<2x32xf32>
    %241 = vector.extract_strided_slice %236 {offsets = [0, 96], sizes = [2, 32], strides = [1, 1]} : vector<2x128xf32> to vector<2x32xf32>
    %242 = arith.mulf %239, %224 : vector<2x32xf32>
    %243 = arith.mulf %238, %240 : vector<2x32xf32>
    %244 = arith.addf %242, %243 : vector<2x32xf32>
    %245 = math.tanh %244 : vector<2x32xf32>
    %246 = arith.mulf %241, %245 : vector<2x32xf32>
    %cst_50 = arith.constant dense<0.000000e+00> : vector<2x128xf32>
    %247 = tpu.matmul %101, %182, %cst_50 {dimension_numbers = #tpu.dot_dimension_numbers<[1], [0], [0], [1], [0, 0, 1, 1], [], []>} : vector<2x32xf32>, vector<32x128xf32>, vector<2x128xf32> -> vector<2x128xf32>
    %cst_51 = arith.constant dense<0.000000e+00> : vector<2x128xf32>
    %248 = tpu.matmul %246, %183, %cst_51 {dimension_numbers = #tpu.dot_dimension_numbers<[1], [0], [0], [1], [0, 0, 1, 1], [], []>} : vector<2x32xf32>, vector<32x128xf32>, vector<2x128xf32> -> vector<2x128xf32>
    %249 = arith.addf %247, %248 : vector<2x128xf32>
    %250 = vector.broadcast %184 : vector<1x128xf32> to vector<2x128xf32>
    %251 = arith.addf %249, %250 : vector<2x128xf32>
    %252 = arith.negf %251 : vector<2x128xf32>
    %253 = math.exp %252 : vector<2x128xf32>
    %cst_52 = arith.constant 1.000000e+00 : f32
    %254 = vector.broadcast %cst_52 : f32 to vector<2x128xf32>
    %255 = arith.addf %254, %253 : vector<2x128xf32>
    %256 = arith.divf %254, %255 : vector<2x128xf32>
    %257 = math.tanh %251 : vector<2x128xf32>
    %258 = vector.extract_strided_slice %256 {offsets = [0, 0], sizes = [2, 32], strides = [1, 1]} : vector<2x128xf32> to vector<2x32xf32>
    %259 = vector.extract_strided_slice %256 {offsets = [0, 32], sizes = [2, 32], strides = [1, 1]} : vector<2x128xf32> to vector<2x32xf32>
    %260 = vector.extract_strided_slice %257 {offsets = [0, 64], sizes = [2, 32], strides = [1, 1]} : vector<2x128xf32> to vector<2x32xf32>
    %261 = vector.extract_strided_slice %256 {offsets = [0, 96], sizes = [2, 32], strides = [1, 1]} : vector<2x128xf32> to vector<2x32xf32>
    %262 = arith.mulf %259, %244 : vector<2x32xf32>
    %263 = arith.mulf %258, %260 : vector<2x32xf32>
    %264 = arith.addf %262, %263 : vector<2x32xf32>
    %265 = math.tanh %264 : vector<2x32xf32>
    %266 = arith.mulf %261, %265 : vector<2x32xf32>
    %cst_53 = arith.constant dense<0.000000e+00> : vector<2x128xf32>
    %267 = tpu.matmul %121, %182, %cst_53 {dimension_numbers = #tpu.dot_dimension_numbers<[1], [0], [0], [1], [0, 0, 1, 1], [], []>} : vector<2x32xf32>, vector<32x128xf32>, vector<2x128xf32> -> vector<2x128xf32>
    %cst_54 = arith.constant dense<0.000000e+00> : vector<2x128xf32>
    %268 = tpu.matmul %266, %183, %cst_54 {dimension_numbers = #tpu.dot_dimension_numbers<[1], [0], [0], [1], [0, 0, 1, 1], [], []>} : vector<2x32xf32>, vector<32x128xf32>, vector<2x128xf32> -> vector<2x128xf32>
    %269 = arith.addf %267, %268 : vector<2x128xf32>
    %270 = vector.broadcast %184 : vector<1x128xf32> to vector<2x128xf32>
    %271 = arith.addf %269, %270 : vector<2x128xf32>
    %272 = arith.negf %271 : vector<2x128xf32>
    %273 = math.exp %272 : vector<2x128xf32>
    %cst_55 = arith.constant 1.000000e+00 : f32
    %274 = vector.broadcast %cst_55 : f32 to vector<2x128xf32>
    %275 = arith.addf %274, %273 : vector<2x128xf32>
    %276 = arith.divf %274, %275 : vector<2x128xf32>
    %277 = math.tanh %271 : vector<2x128xf32>
    %278 = vector.extract_strided_slice %276 {offsets = [0, 0], sizes = [2, 32], strides = [1, 1]} : vector<2x128xf32> to vector<2x32xf32>
    %279 = vector.extract_strided_slice %276 {offsets = [0, 32], sizes = [2, 32], strides = [1, 1]} : vector<2x128xf32> to vector<2x32xf32>
    %280 = vector.extract_strided_slice %277 {offsets = [0, 64], sizes = [2, 32], strides = [1, 1]} : vector<2x128xf32> to vector<2x32xf32>
    %281 = vector.extract_strided_slice %276 {offsets = [0, 96], sizes = [2, 32], strides = [1, 1]} : vector<2x128xf32> to vector<2x32xf32>
    %282 = arith.mulf %279, %264 : vector<2x32xf32>
    %283 = arith.mulf %278, %280 : vector<2x32xf32>
    %284 = arith.addf %282, %283 : vector<2x32xf32>
    %285 = math.tanh %284 : vector<2x32xf32>
    %286 = arith.mulf %281, %285 : vector<2x32xf32>
    %cst_56 = arith.constant dense<0.000000e+00> : vector<2x128xf32>
    %287 = tpu.matmul %141, %182, %cst_56 {dimension_numbers = #tpu.dot_dimension_numbers<[1], [0], [0], [1], [0, 0, 1, 1], [], []>} : vector<2x32xf32>, vector<32x128xf32>, vector<2x128xf32> -> vector<2x128xf32>
    %cst_57 = arith.constant dense<0.000000e+00> : vector<2x128xf32>
    %288 = tpu.matmul %286, %183, %cst_57 {dimension_numbers = #tpu.dot_dimension_numbers<[1], [0], [0], [1], [0, 0, 1, 1], [], []>} : vector<2x32xf32>, vector<32x128xf32>, vector<2x128xf32> -> vector<2x128xf32>
    %289 = arith.addf %287, %288 : vector<2x128xf32>
    %290 = vector.broadcast %184 : vector<1x128xf32> to vector<2x128xf32>
    %291 = arith.addf %289, %290 : vector<2x128xf32>
    %292 = arith.negf %291 : vector<2x128xf32>
    %293 = math.exp %292 : vector<2x128xf32>
    %cst_58 = arith.constant 1.000000e+00 : f32
    %294 = vector.broadcast %cst_58 : f32 to vector<2x128xf32>
    %295 = arith.addf %294, %293 : vector<2x128xf32>
    %296 = arith.divf %294, %295 : vector<2x128xf32>
    %297 = math.tanh %291 : vector<2x128xf32>
    %298 = vector.extract_strided_slice %296 {offsets = [0, 0], sizes = [2, 32], strides = [1, 1]} : vector<2x128xf32> to vector<2x32xf32>
    %299 = vector.extract_strided_slice %296 {offsets = [0, 32], sizes = [2, 32], strides = [1, 1]} : vector<2x128xf32> to vector<2x32xf32>
    %300 = vector.extract_strided_slice %297 {offsets = [0, 64], sizes = [2, 32], strides = [1, 1]} : vector<2x128xf32> to vector<2x32xf32>
    %301 = vector.extract_strided_slice %296 {offsets = [0, 96], sizes = [2, 32], strides = [1, 1]} : vector<2x128xf32> to vector<2x32xf32>
    %302 = arith.mulf %299, %284 : vector<2x32xf32>
    %303 = arith.mulf %298, %300 : vector<2x32xf32>
    %304 = arith.addf %302, %303 : vector<2x32xf32>
    %305 = math.tanh %304 : vector<2x32xf32>
    %306 = arith.mulf %301, %305 : vector<2x32xf32>
    %cst_59 = arith.constant dense<0.000000e+00> : vector<2x128xf32>
    %307 = tpu.matmul %161, %182, %cst_59 {dimension_numbers = #tpu.dot_dimension_numbers<[1], [0], [0], [1], [0, 0, 1, 1], [], []>} : vector<2x32xf32>, vector<32x128xf32>, vector<2x128xf32> -> vector<2x128xf32>
    %cst_60 = arith.constant dense<0.000000e+00> : vector<2x128xf32>
    %308 = tpu.matmul %306, %183, %cst_60 {dimension_numbers = #tpu.dot_dimension_numbers<[1], [0], [0], [1], [0, 0, 1, 1], [], []>} : vector<2x32xf32>, vector<32x128xf32>, vector<2x128xf32> -> vector<2x128xf32>
    %309 = arith.addf %307, %308 : vector<2x128xf32>
    %310 = vector.broadcast %184 : vector<1x128xf32> to vector<2x128xf32>
    %311 = arith.addf %309, %310 : vector<2x128xf32>
    %312 = arith.negf %311 : vector<2x128xf32>
    %313 = math.exp %312 : vector<2x128xf32>
    %cst_61 = arith.constant 1.000000e+00 : f32
    %314 = vector.broadcast %cst_61 : f32 to vector<2x128xf32>
    %315 = arith.addf %314, %313 : vector<2x128xf32>
    %316 = arith.divf %314, %315 : vector<2x128xf32>
    %317 = math.tanh %311 : vector<2x128xf32>
    %318 = vector.extract_strided_slice %316 {offsets = [0, 0], sizes = [2, 32], strides = [1, 1]} : vector<2x128xf32> to vector<2x32xf32>
    %319 = vector.extract_strided_slice %316 {offsets = [0, 32], sizes = [2, 32], strides = [1, 1]} : vector<2x128xf32> to vector<2x32xf32>
    %320 = vector.extract_strided_slice %317 {offsets = [0, 64], sizes = [2, 32], strides = [1, 1]} : vector<2x128xf32> to vector<2x32xf32>
    %321 = vector.extract_strided_slice %316 {offsets = [0, 96], sizes = [2, 32], strides = [1, 1]} : vector<2x128xf32> to vector<2x32xf32>
    %322 = arith.mulf %319, %304 : vector<2x32xf32>
    %323 = arith.mulf %318, %320 : vector<2x32xf32>
    %324 = arith.addf %322, %323 : vector<2x32xf32>
    %325 = math.tanh %324 : vector<2x32xf32>
    %326 = arith.mulf %321, %325 : vector<2x32xf32>
    %cst_62 = arith.constant dense<0.000000e+00> : vector<2x128xf32>
    %327 = tpu.matmul %181, %182, %cst_62 {dimension_numbers = #tpu.dot_dimension_numbers<[1], [0], [0], [1], [0, 0, 1, 1], [], []>} : vector<2x32xf32>, vector<32x128xf32>, vector<2x128xf32> -> vector<2x128xf32>
    %cst_63 = arith.constant dense<0.000000e+00> : vector<2x128xf32>
    %328 = tpu.matmul %326, %183, %cst_63 {dimension_numbers = #tpu.dot_dimension_numbers<[1], [0], [0], [1], [0, 0, 1, 1], [], []>} : vector<2x32xf32>, vector<32x128xf32>, vector<2x128xf32> -> vector<2x128xf32>
    %329 = arith.addf %327, %328 : vector<2x128xf32>
    %330 = vector.broadcast %184 : vector<1x128xf32> to vector<2x128xf32>
    %331 = arith.addf %329, %330 : vector<2x128xf32>
    %332 = arith.negf %331 : vector<2x128xf32>
    %333 = math.exp %332 : vector<2x128xf32>
    %cst_64 = arith.constant 1.000000e+00 : f32
    %334 = vector.broadcast %cst_64 : f32 to vector<2x128xf32>
    %335 = arith.addf %334, %333 : vector<2x128xf32>
    %336 = arith.divf %334, %335 : vector<2x128xf32>
    %337 = math.tanh %331 : vector<2x128xf32>
    %338 = vector.extract_strided_slice %336 {offsets = [0, 0], sizes = [2, 32], strides = [1, 1]} : vector<2x128xf32> to vector<2x32xf32>
    %339 = vector.extract_strided_slice %336 {offsets = [0, 32], sizes = [2, 32], strides = [1, 1]} : vector<2x128xf32> to vector<2x32xf32>
    %340 = vector.extract_strided_slice %337 {offsets = [0, 64], sizes = [2, 32], strides = [1, 1]} : vector<2x128xf32> to vector<2x32xf32>
    %341 = vector.extract_strided_slice %336 {offsets = [0, 96], sizes = [2, 32], strides = [1, 1]} : vector<2x128xf32> to vector<2x32xf32>
    %342 = arith.mulf %339, %324 : vector<2x32xf32>
    %343 = arith.mulf %338, %340 : vector<2x32xf32>
    %344 = arith.addf %342, %343 : vector<2x32xf32>
    %345 = math.tanh %344 : vector<2x32xf32>
    %346 = arith.mulf %341, %345 : vector<2x32xf32>
    %c0_65 = arith.constant 0 : index
    %c0_66 = arith.constant 0 : index
    %347 = vector.load %arg7[%c0_65, %c0_66] : memref<32x128xf32, #tpu.memory_space<vmem>>, vector<32x128xf32>
    %c0_67 = arith.constant 0 : index
    %c0_68 = arith.constant 0 : index
    %348 = vector.load %arg8[%c0_67, %c0_68] : memref<32x128xf32, #tpu.memory_space<vmem>>, vector<32x128xf32>
    %c0_69 = arith.constant 0 : index
    %c0_70 = arith.constant 0 : index
    %349 = vector.load %arg9[%c0_69, %c0_70] : memref<1x128xf32, #tpu.memory_space<vmem>>, vector<1x128xf32>
    %cst_71 = arith.constant 0.000000e+00 : f32
    %350 = vector.broadcast %cst_71 : f32 to vector<2x32xf32>
    %cst_72 = arith.constant 0.000000e+00 : f32
    %351 = vector.broadcast %cst_72 : f32 to vector<2x32xf32>
    %cst_73 = arith.constant dense<0.000000e+00> : vector<2x128xf32>
    %352 = tpu.matmul %41, %347, %cst_73 {dimension_numbers = #tpu.dot_dimension_numbers<[1], [0], [0], [1], [0, 0, 1, 1], [], []>} : vector<2x32xf32>, vector<32x128xf32>, vector<2x128xf32> -> vector<2x128xf32>
    %cst_74 = arith.constant dense<0.000000e+00> : vector<2x128xf32>
    %353 = tpu.matmul %350, %348, %cst_74 {dimension_numbers = #tpu.dot_dimension_numbers<[1], [0], [0], [1], [0, 0, 1, 1], [], []>} : vector<2x32xf32>, vector<32x128xf32>, vector<2x128xf32> -> vector<2x128xf32>
    %354 = arith.addf %352, %353 : vector<2x128xf32>
    %355 = vector.broadcast %349 : vector<1x128xf32> to vector<2x128xf32>
    %356 = arith.addf %354, %355 : vector<2x128xf32>
    %357 = arith.negf %356 : vector<2x128xf32>
    %358 = math.exp %357 : vector<2x128xf32>
    %cst_75 = arith.constant 1.000000e+00 : f32
    %359 = vector.broadcast %cst_75 : f32 to vector<2x128xf32>
    %360 = arith.addf %359, %358 : vector<2x128xf32>
    %361 = arith.divf %359, %360 : vector<2x128xf32>
    %362 = math.tanh %356 : vector<2x128xf32>
    %363 = vector.extract_strided_slice %361 {offsets = [0, 0], sizes = [2, 32], strides = [1, 1]} : vector<2x128xf32> to vector<2x32xf32>
    %364 = vector.extract_strided_slice %361 {offsets = [0, 32], sizes = [2, 32], strides = [1, 1]} : vector<2x128xf32> to vector<2x32xf32>
    %365 = vector.extract_strided_slice %362 {offsets = [0, 64], sizes = [2, 32], strides = [1, 1]} : vector<2x128xf32> to vector<2x32xf32>
    %366 = vector.extract_strided_slice %361 {offsets = [0, 96], sizes = [2, 32], strides = [1, 1]} : vector<2x128xf32> to vector<2x32xf32>
    %367 = arith.mulf %364, %351 : vector<2x32xf32>
    %368 = arith.mulf %363, %365 : vector<2x32xf32>
    %369 = arith.addf %367, %368 : vector<2x32xf32>
    %370 = math.tanh %369 : vector<2x32xf32>
    %371 = arith.mulf %366, %370 : vector<2x32xf32>
    %cst_76 = arith.constant dense<0.000000e+00> : vector<2x128xf32>
    %372 = tpu.matmul %61, %347, %cst_76 {dimension_numbers = #tpu.dot_dimension_numbers<[1], [0], [0], [1], [0, 0, 1, 1], [], []>} : vector<2x32xf32>, vector<32x128xf32>, vector<2x128xf32> -> vector<2x128xf32>
    %cst_77 = arith.constant dense<0.000000e+00> : vector<2x128xf32>
    %373 = tpu.matmul %371, %348, %cst_77 {dimension_numbers = #tpu.dot_dimension_numbers<[1], [0], [0], [1], [0, 0, 1, 1], [], []>} : vector<2x32xf32>, vector<32x128xf32>, vector<2x128xf32> -> vector<2x128xf32>
    %374 = arith.addf %372, %373 : vector<2x128xf32>
    %375 = vector.broadcast %349 : vector<1x128xf32> to vector<2x128xf32>
    %376 = arith.addf %374, %375 : vector<2x128xf32>
    %377 = arith.negf %376 : vector<2x128xf32>
    %378 = math.exp %377 : vector<2x128xf32>
    %cst_78 = arith.constant 1.000000e+00 : f32
    %379 = vector.broadcast %cst_78 : f32 to vector<2x128xf32>
    %380 = arith.addf %379, %378 : vector<2x128xf32>
    %381 = arith.divf %379, %380 : vector<2x128xf32>
    %382 = math.tanh %376 : vector<2x128xf32>
    %383 = vector.extract_strided_slice %381 {offsets = [0, 0], sizes = [2, 32], strides = [1, 1]} : vector<2x128xf32> to vector<2x32xf32>
    %384 = vector.extract_strided_slice %381 {offsets = [0, 32], sizes = [2, 32], strides = [1, 1]} : vector<2x128xf32> to vector<2x32xf32>
    %385 = vector.extract_strided_slice %382 {offsets = [0, 64], sizes = [2, 32], strides = [1, 1]} : vector<2x128xf32> to vector<2x32xf32>
    %386 = vector.extract_strided_slice %381 {offsets = [0, 96], sizes = [2, 32], strides = [1, 1]} : vector<2x128xf32> to vector<2x32xf32>
    %387 = arith.mulf %384, %369 : vector<2x32xf32>
    %388 = arith.mulf %383, %385 : vector<2x32xf32>
    %389 = arith.addf %387, %388 : vector<2x32xf32>
    %390 = math.tanh %389 : vector<2x32xf32>
    %391 = arith.mulf %386, %390 : vector<2x32xf32>
    %cst_79 = arith.constant dense<0.000000e+00> : vector<2x128xf32>
    %392 = tpu.matmul %81, %347, %cst_79 {dimension_numbers = #tpu.dot_dimension_numbers<[1], [0], [0], [1], [0, 0, 1, 1], [], []>} : vector<2x32xf32>, vector<32x128xf32>, vector<2x128xf32> -> vector<2x128xf32>
    %cst_80 = arith.constant dense<0.000000e+00> : vector<2x128xf32>
    %393 = tpu.matmul %391, %348, %cst_80 {dimension_numbers = #tpu.dot_dimension_numbers<[1], [0], [0], [1], [0, 0, 1, 1], [], []>} : vector<2x32xf32>, vector<32x128xf32>, vector<2x128xf32> -> vector<2x128xf32>
    %394 = arith.addf %392, %393 : vector<2x128xf32>
    %395 = vector.broadcast %349 : vector<1x128xf32> to vector<2x128xf32>
    %396 = arith.addf %394, %395 : vector<2x128xf32>
    %397 = arith.negf %396 : vector<2x128xf32>
    %398 = math.exp %397 : vector<2x128xf32>
    %cst_81 = arith.constant 1.000000e+00 : f32
    %399 = vector.broadcast %cst_81 : f32 to vector<2x128xf32>
    %400 = arith.addf %399, %398 : vector<2x128xf32>
    %401 = arith.divf %399, %400 : vector<2x128xf32>
    %402 = math.tanh %396 : vector<2x128xf32>
    %403 = vector.extract_strided_slice %401 {offsets = [0, 0], sizes = [2, 32], strides = [1, 1]} : vector<2x128xf32> to vector<2x32xf32>
    %404 = vector.extract_strided_slice %401 {offsets = [0, 32], sizes = [2, 32], strides = [1, 1]} : vector<2x128xf32> to vector<2x32xf32>
    %405 = vector.extract_strided_slice %402 {offsets = [0, 64], sizes = [2, 32], strides = [1, 1]} : vector<2x128xf32> to vector<2x32xf32>
    %406 = vector.extract_strided_slice %401 {offsets = [0, 96], sizes = [2, 32], strides = [1, 1]} : vector<2x128xf32> to vector<2x32xf32>
    %407 = arith.mulf %404, %389 : vector<2x32xf32>
    %408 = arith.mulf %403, %405 : vector<2x32xf32>
    %409 = arith.addf %407, %408 : vector<2x32xf32>
    %410 = math.tanh %409 : vector<2x32xf32>
    %411 = arith.mulf %406, %410 : vector<2x32xf32>
    %cst_82 = arith.constant dense<0.000000e+00> : vector<2x128xf32>
    %412 = tpu.matmul %101, %347, %cst_82 {dimension_numbers = #tpu.dot_dimension_numbers<[1], [0], [0], [1], [0, 0, 1, 1], [], []>} : vector<2x32xf32>, vector<32x128xf32>, vector<2x128xf32> -> vector<2x128xf32>
    %cst_83 = arith.constant dense<0.000000e+00> : vector<2x128xf32>
    %413 = tpu.matmul %411, %348, %cst_83 {dimension_numbers = #tpu.dot_dimension_numbers<[1], [0], [0], [1], [0, 0, 1, 1], [], []>} : vector<2x32xf32>, vector<32x128xf32>, vector<2x128xf32> -> vector<2x128xf32>
    %414 = arith.addf %412, %413 : vector<2x128xf32>
    %415 = vector.broadcast %349 : vector<1x128xf32> to vector<2x128xf32>
    %416 = arith.addf %414, %415 : vector<2x128xf32>
    %417 = arith.negf %416 : vector<2x128xf32>
    %418 = math.exp %417 : vector<2x128xf32>
    %cst_84 = arith.constant 1.000000e+00 : f32
    %419 = vector.broadcast %cst_84 : f32 to vector<2x128xf32>
    %420 = arith.addf %419, %418 : vector<2x128xf32>
    %421 = arith.divf %419, %420 : vector<2x128xf32>
    %422 = math.tanh %416 : vector<2x128xf32>
    %423 = vector.extract_strided_slice %421 {offsets = [0, 0], sizes = [2, 32], strides = [1, 1]} : vector<2x128xf32> to vector<2x32xf32>
    %424 = vector.extract_strided_slice %421 {offsets = [0, 32], sizes = [2, 32], strides = [1, 1]} : vector<2x128xf32> to vector<2x32xf32>
    %425 = vector.extract_strided_slice %422 {offsets = [0, 64], sizes = [2, 32], strides = [1, 1]} : vector<2x128xf32> to vector<2x32xf32>
    %426 = vector.extract_strided_slice %421 {offsets = [0, 96], sizes = [2, 32], strides = [1, 1]} : vector<2x128xf32> to vector<2x32xf32>
    %427 = arith.mulf %424, %409 : vector<2x32xf32>
    %428 = arith.mulf %423, %425 : vector<2x32xf32>
    %429 = arith.addf %427, %428 : vector<2x32xf32>
    %430 = math.tanh %429 : vector<2x32xf32>
    %431 = arith.mulf %426, %430 : vector<2x32xf32>
    %cst_85 = arith.constant dense<0.000000e+00> : vector<2x128xf32>
    %432 = tpu.matmul %121, %347, %cst_85 {dimension_numbers = #tpu.dot_dimension_numbers<[1], [0], [0], [1], [0, 0, 1, 1], [], []>} : vector<2x32xf32>, vector<32x128xf32>, vector<2x128xf32> -> vector<2x128xf32>
    %cst_86 = arith.constant dense<0.000000e+00> : vector<2x128xf32>
    %433 = tpu.matmul %431, %348, %cst_86 {dimension_numbers = #tpu.dot_dimension_numbers<[1], [0], [0], [1], [0, 0, 1, 1], [], []>} : vector<2x32xf32>, vector<32x128xf32>, vector<2x128xf32> -> vector<2x128xf32>
    %434 = arith.addf %432, %433 : vector<2x128xf32>
    %435 = vector.broadcast %349 : vector<1x128xf32> to vector<2x128xf32>
    %436 = arith.addf %434, %435 : vector<2x128xf32>
    %437 = arith.negf %436 : vector<2x128xf32>
    %438 = math.exp %437 : vector<2x128xf32>
    %cst_87 = arith.constant 1.000000e+00 : f32
    %439 = vector.broadcast %cst_87 : f32 to vector<2x128xf32>
    %440 = arith.addf %439, %438 : vector<2x128xf32>
    %441 = arith.divf %439, %440 : vector<2x128xf32>
    %442 = math.tanh %436 : vector<2x128xf32>
    %443 = vector.extract_strided_slice %441 {offsets = [0, 0], sizes = [2, 32], strides = [1, 1]} : vector<2x128xf32> to vector<2x32xf32>
    %444 = vector.extract_strided_slice %441 {offsets = [0, 32], sizes = [2, 32], strides = [1, 1]} : vector<2x128xf32> to vector<2x32xf32>
    %445 = vector.extract_strided_slice %442 {offsets = [0, 64], sizes = [2, 32], strides = [1, 1]} : vector<2x128xf32> to vector<2x32xf32>
    %446 = vector.extract_strided_slice %441 {offsets = [0, 96], sizes = [2, 32], strides = [1, 1]} : vector<2x128xf32> to vector<2x32xf32>
    %447 = arith.mulf %444, %429 : vector<2x32xf32>
    %448 = arith.mulf %443, %445 : vector<2x32xf32>
    %449 = arith.addf %447, %448 : vector<2x32xf32>
    %450 = math.tanh %449 : vector<2x32xf32>
    %451 = arith.mulf %446, %450 : vector<2x32xf32>
    %cst_88 = arith.constant dense<0.000000e+00> : vector<2x128xf32>
    %452 = tpu.matmul %141, %347, %cst_88 {dimension_numbers = #tpu.dot_dimension_numbers<[1], [0], [0], [1], [0, 0, 1, 1], [], []>} : vector<2x32xf32>, vector<32x128xf32>, vector<2x128xf32> -> vector<2x128xf32>
    %cst_89 = arith.constant dense<0.000000e+00> : vector<2x128xf32>
    %453 = tpu.matmul %451, %348, %cst_89 {dimension_numbers = #tpu.dot_dimension_numbers<[1], [0], [0], [1], [0, 0, 1, 1], [], []>} : vector<2x32xf32>, vector<32x128xf32>, vector<2x128xf32> -> vector<2x128xf32>
    %454 = arith.addf %452, %453 : vector<2x128xf32>
    %455 = vector.broadcast %349 : vector<1x128xf32> to vector<2x128xf32>
    %456 = arith.addf %454, %455 : vector<2x128xf32>
    %457 = arith.negf %456 : vector<2x128xf32>
    %458 = math.exp %457 : vector<2x128xf32>
    %cst_90 = arith.constant 1.000000e+00 : f32
    %459 = vector.broadcast %cst_90 : f32 to vector<2x128xf32>
    %460 = arith.addf %459, %458 : vector<2x128xf32>
    %461 = arith.divf %459, %460 : vector<2x128xf32>
    %462 = math.tanh %456 : vector<2x128xf32>
    %463 = vector.extract_strided_slice %461 {offsets = [0, 0], sizes = [2, 32], strides = [1, 1]} : vector<2x128xf32> to vector<2x32xf32>
    %464 = vector.extract_strided_slice %461 {offsets = [0, 32], sizes = [2, 32], strides = [1, 1]} : vector<2x128xf32> to vector<2x32xf32>
    %465 = vector.extract_strided_slice %462 {offsets = [0, 64], sizes = [2, 32], strides = [1, 1]} : vector<2x128xf32> to vector<2x32xf32>
    %466 = vector.extract_strided_slice %461 {offsets = [0, 96], sizes = [2, 32], strides = [1, 1]} : vector<2x128xf32> to vector<2x32xf32>
    %467 = arith.mulf %464, %449 : vector<2x32xf32>
    %468 = arith.mulf %463, %465 : vector<2x32xf32>
    %469 = arith.addf %467, %468 : vector<2x32xf32>
    %470 = math.tanh %469 : vector<2x32xf32>
    %471 = arith.mulf %466, %470 : vector<2x32xf32>
    %cst_91 = arith.constant dense<0.000000e+00> : vector<2x128xf32>
    %472 = tpu.matmul %161, %347, %cst_91 {dimension_numbers = #tpu.dot_dimension_numbers<[1], [0], [0], [1], [0, 0, 1, 1], [], []>} : vector<2x32xf32>, vector<32x128xf32>, vector<2x128xf32> -> vector<2x128xf32>
    %cst_92 = arith.constant dense<0.000000e+00> : vector<2x128xf32>
    %473 = tpu.matmul %471, %348, %cst_92 {dimension_numbers = #tpu.dot_dimension_numbers<[1], [0], [0], [1], [0, 0, 1, 1], [], []>} : vector<2x32xf32>, vector<32x128xf32>, vector<2x128xf32> -> vector<2x128xf32>
    %474 = arith.addf %472, %473 : vector<2x128xf32>
    %475 = vector.broadcast %349 : vector<1x128xf32> to vector<2x128xf32>
    %476 = arith.addf %474, %475 : vector<2x128xf32>
    %477 = arith.negf %476 : vector<2x128xf32>
    %478 = math.exp %477 : vector<2x128xf32>
    %cst_93 = arith.constant 1.000000e+00 : f32
    %479 = vector.broadcast %cst_93 : f32 to vector<2x128xf32>
    %480 = arith.addf %479, %478 : vector<2x128xf32>
    %481 = arith.divf %479, %480 : vector<2x128xf32>
    %482 = math.tanh %476 : vector<2x128xf32>
    %483 = vector.extract_strided_slice %481 {offsets = [0, 0], sizes = [2, 32], strides = [1, 1]} : vector<2x128xf32> to vector<2x32xf32>
    %484 = vector.extract_strided_slice %481 {offsets = [0, 32], sizes = [2, 32], strides = [1, 1]} : vector<2x128xf32> to vector<2x32xf32>
    %485 = vector.extract_strided_slice %482 {offsets = [0, 64], sizes = [2, 32], strides = [1, 1]} : vector<2x128xf32> to vector<2x32xf32>
    %486 = vector.extract_strided_slice %481 {offsets = [0, 96], sizes = [2, 32], strides = [1, 1]} : vector<2x128xf32> to vector<2x32xf32>
    %487 = arith.mulf %484, %469 : vector<2x32xf32>
    %488 = arith.mulf %483, %485 : vector<2x32xf32>
    %489 = arith.addf %487, %488 : vector<2x32xf32>
    %490 = math.tanh %489 : vector<2x32xf32>
    %491 = arith.mulf %486, %490 : vector<2x32xf32>
    %cst_94 = arith.constant dense<0.000000e+00> : vector<2x128xf32>
    %492 = tpu.matmul %181, %347, %cst_94 {dimension_numbers = #tpu.dot_dimension_numbers<[1], [0], [0], [1], [0, 0, 1, 1], [], []>} : vector<2x32xf32>, vector<32x128xf32>, vector<2x128xf32> -> vector<2x128xf32>
    %cst_95 = arith.constant dense<0.000000e+00> : vector<2x128xf32>
    %493 = tpu.matmul %491, %348, %cst_95 {dimension_numbers = #tpu.dot_dimension_numbers<[1], [0], [0], [1], [0, 0, 1, 1], [], []>} : vector<2x32xf32>, vector<32x128xf32>, vector<2x128xf32> -> vector<2x128xf32>
    %494 = arith.addf %492, %493 : vector<2x128xf32>
    %495 = vector.broadcast %349 : vector<1x128xf32> to vector<2x128xf32>
    %496 = arith.addf %494, %495 : vector<2x128xf32>
    %497 = arith.negf %496 : vector<2x128xf32>
    %498 = math.exp %497 : vector<2x128xf32>
    %cst_96 = arith.constant 1.000000e+00 : f32
    %499 = vector.broadcast %cst_96 : f32 to vector<2x128xf32>
    %500 = arith.addf %499, %498 : vector<2x128xf32>
    %501 = arith.divf %499, %500 : vector<2x128xf32>
    %502 = math.tanh %496 : vector<2x128xf32>
    %503 = vector.extract_strided_slice %501 {offsets = [0, 0], sizes = [2, 32], strides = [1, 1]} : vector<2x128xf32> to vector<2x32xf32>
    %504 = vector.extract_strided_slice %501 {offsets = [0, 32], sizes = [2, 32], strides = [1, 1]} : vector<2x128xf32> to vector<2x32xf32>
    %505 = vector.extract_strided_slice %502 {offsets = [0, 64], sizes = [2, 32], strides = [1, 1]} : vector<2x128xf32> to vector<2x32xf32>
    %506 = vector.extract_strided_slice %501 {offsets = [0, 96], sizes = [2, 32], strides = [1, 1]} : vector<2x128xf32> to vector<2x32xf32>
    %507 = arith.mulf %504, %489 : vector<2x32xf32>
    %508 = arith.mulf %503, %505 : vector<2x32xf32>
    %509 = arith.addf %507, %508 : vector<2x32xf32>
    %510 = math.tanh %509 : vector<2x32xf32>
    %511 = arith.mulf %506, %510 : vector<2x32xf32>
    %c0_97 = arith.constant 0 : index
    %c0_98 = arith.constant 0 : index
    %512 = vector.load %arg10[%c0_97, %c0_98] : memref<32x128xf32, #tpu.memory_space<vmem>>, vector<32x128xf32>
    %cst_99 = arith.constant dense<0.000000e+00> : vector<2x128xf32>
    %513 = tpu.matmul %346, %512, %cst_99 {dimension_numbers = #tpu.dot_dimension_numbers<[1], [0], [0], [1], [0, 0, 1, 1], [], []>} : vector<2x32xf32>, vector<32x128xf32>, vector<2x128xf32> -> vector<2x128xf32>
    %c0_100 = arith.constant 0 : index
    %c0_101 = arith.constant 0 : index
    %514 = vector.load %arg11[%c0_100, %c0_101] : memref<32x128xf32, #tpu.memory_space<vmem>>, vector<32x128xf32>
    %cst_102 = arith.constant dense<0.000000e+00> : vector<2x128xf32>
    %515 = tpu.matmul %511, %514, %cst_102 {dimension_numbers = #tpu.dot_dimension_numbers<[1], [0], [0], [1], [0, 0, 1, 1], [], []>} : vector<2x32xf32>, vector<32x128xf32>, vector<2x128xf32> -> vector<2x128xf32>
    %516 = arith.addf %513, %515 : vector<2x128xf32>
    %c0_103 = arith.constant 0 : index
    %c0_104 = arith.constant 0 : index
    %517 = vector.load %arg12[%c0_103, %c0_104] : memref<1x128xf32, #tpu.memory_space<vmem>>, vector<1x128xf32>
    %518 = vector.broadcast %517 : vector<1x128xf32> to vector<2x128xf32>
    %519 = arith.addf %516, %518 : vector<2x128xf32>
    %c0_105 = arith.constant 0 : index
    %c0_106 = arith.constant 0 : index
    %520 = vector.load %arg13[%c0_105, %c0_106] : memref<2x128xf32, #tpu.memory_space<vmem>>, vector<2x128xf32>
    tpu.vector_store %arg13[%c0_105, %c0_106], %519 {strides = array<i32>} : memref<2x128xf32, #tpu.memory_space<vmem>>, vector<2x128xf32>,
    return
  }
}

</mosaic_0001>

<llo_original>
// kernel: sep_forward.1
$region0: #{sep_forward.1}
  #allocation0 [shape = 'u32[]', space=smem, size = 0x4, offset = 0x4, fixed_abs, tag = 'smem constant byte address 0x4 - core index']
  #allocation1 [shape = 'u32[144,128]{1,0:T(1,128)}', space=vmem, size = 0x12000, scoped, tag = 'internal scratch']
  %s0 = inlined_call_operand.vmem [shape: f32[8,2,8], index: 0, kind: input, shape index: {}]
  %s1 = inlined_call_operand.vmem [shape: f32[8,128], index: 1, kind: input, shape index: {}]
  %s2 = inlined_call_operand.vmem [shape: f32[32,128], index: 2, kind: input, shape index: {}]
  %s3 = inlined_call_operand.vmem [shape: f32[1,128], index: 3, kind: input, shape index: {}]
  %s4 = inlined_call_operand.vmem [shape: f32[32,128], index: 4, kind: input, shape index: {}]
  %s5 = inlined_call_operand.vmem [shape: f32[32,128], index: 5, kind: input, shape index: {}]
  %s6 = inlined_call_operand.vmem [shape: f32[1,128], index: 6, kind: input, shape index: {}]
  %s7 = inlined_call_operand.vmem [shape: f32[32,128], index: 7, kind: input, shape index: {}]
  %s8 = inlined_call_operand.vmem [shape: f32[32,128], index: 8, kind: input, shape index: {}]
  %s9 = inlined_call_operand.vmem [shape: f32[1,128], index: 9, kind: input, shape index: {}]
  %s10 = inlined_call_operand.vmem [shape: f32[32,128], index: 10, kind: input, shape index: {}]
  %s11 = inlined_call_operand.vmem [shape: f32[32,128], index: 11, kind: input, shape index: {}]
  %s12 = inlined_call_operand.vmem [shape: f32[1,128], index: 12, kind: input, shape index: {}]
  %s13 = inlined_call_operand.vmem [shape: f32[2,128], index: 13, kind: output, shape index: {}]
  %s14 = sld [smem:[#allocation0]]
  $region62: #{sep_forward.1} parent=0
    _
  %s16 = ssub.s32 1, %s14
  %s17 = scalar_select 0, %s16, %s14
  // Predicated region
  $region2: #{sep_forward.1} parent=0 // pred_check
    _
  $region3: #{sep_forward.1} parent=0 // pred_check_branch
    %19 = sbr.rel (0) target = $region5
  $region4: #{sep_forward.1} parent=0 // pred_region
    _
  $region5: #{sep_forward.1} parent=0 // pred_fallthru
    _
  // Predicated region
  $region6: #{sep_forward.1} parent=0 // pred_check
    _
  $region7: #{sep_forward.1} parent=0 // pred_check_branch
    %21 = sbr.rel (0) target = $region9
  $region8: #{sep_forward.1} parent=0 // pred_region
    _
  $region9: #{sep_forward.1} parent=0 // pred_fallthru
    _
  // Predicated region
  $region10: #{sep_forward.1} parent=0 // pred_check
    _
  $region11: #{sep_forward.1} parent=0 // pred_check_branch
    %23 = sbr.rel (0) target = $region13
  $region12: #{sep_forward.1} parent=0 // pred_region
    _
  $region13: #{sep_forward.1} parent=0 // pred_fallthru
    _
  // Predicated region
  $region14: #{sep_forward.1} parent=0 // pred_check
    _
  $region15: #{sep_forward.1} parent=0 // pred_check_branch
    %25 = sbr.rel (0) target = $region17
  $region16: #{sep_forward.1} parent=0 // pred_region
    _
  $region17: #{sep_forward.1} parent=0 // pred_fallthru
    _
  // Predicated region
  $region18: #{sep_forward.1} parent=0 // pred_check
    _
  $region19: #{sep_forward.1} parent=0 // pred_check_branch
    %27 = sbr.rel (0) target = $region21
  $region20: #{sep_forward.1} parent=0 // pred_region
    _
  $region21: #{sep_forward.1} parent=0 // pred_fallthru
    _
  // Predicated region
  $region22: #{sep_forward.1} parent=0 // pred_check
    _
  $region23: #{sep_forward.1} parent=0 // pred_check_branch
    %29 = sbr.rel (0) target = $region25
  $region24: #{sep_forward.1} parent=0 // pred_region
    _
  $region25: #{sep_forward.1} parent=0 // pred_fallthru
    _
  // Predicated region
  $region26: #{sep_forward.1} parent=0 // pred_check
    _
  $region27: #{sep_forward.1} parent=0 // pred_check_branch
    %31 = sbr.rel (0) target = $region29
  $region28: #{sep_forward.1} parent=0 // pred_region
    _
  $region29: #{sep_forward.1} parent=0 // pred_fallthru
    _
  // Predicated region
  $region30: #{sep_forward.1} parent=0 // pred_check
    _
  $region31: #{sep_forward.1} parent=0 // pred_check_branch
    %33 = sbr.rel (0) target = $region33
  $region32: #{sep_forward.1} parent=0 // pred_region
    _
  $region33: #{sep_forward.1} parent=0 // pred_fallthru
    _
  // Predicated region
  $region34: #{sep_forward.1} parent=0 // pred_check
    _
  $region35: #{sep_forward.1} parent=0 // pred_check_branch
    %35 = sbr.rel (0) target = $region37
  $region36: #{sep_forward.1} parent=0 // pred_region
    _
  $region37: #{sep_forward.1} parent=0 // pred_fallthru
    _
  // Predicated region
  $region38: #{sep_forward.1} parent=0 // pred_check
    _
  $region39: #{sep_forward.1} parent=0 // pred_check_branch
    %37 = sbr.rel (0) target = $region41
  $region40: #{sep_forward.1} parent=0 // pred_region
    _
  $region41: #{sep_forward.1} parent=0 // pred_fallthru
    _
  // Predicated region
  $region42: #{sep_forward.1} parent=0 // pred_check
    _
  $region43: #{sep_forward.1} parent=0 // pred_check_branch
    %39 = sbr.rel (0) target = $region45
  $region44: #{sep_forward.1} parent=0 // pred_region
    _
  $region45: #{sep_forward.1} parent=0 // pred_fallthru
    _
  // Predicated region
  $region46: #{sep_forward.1} parent=0 // pred_check
    _
  $region47: #{sep_forward.1} parent=0 // pred_check_branch
    %41 = sbr.rel (0) target = $region49
  $region48: #{sep_forward.1} parent=0 // pred_region
    _
  $region49: #{sep_forward.1} parent=0 // pred_fallthru
    _
  // Predicated region
  $region50: #{sep_forward.1} parent=0 // pred_check
    _
  $region51: #{sep_forward.1} parent=0 // pred_check_branch
    %43 = sbr.rel (0) target = $region53
  $region52: #{sep_forward.1} parent=0 // pred_region
    _
  $region53: #{sep_forward.1} parent=0 // pred_fallthru
    _
  %v44 = vld [vmem:[%s0] sm:$0x3]
  %v45 = vld [vmem:[%s0 + $0x2] sm:$0x3]
  %v46 = vld [vmem:[%s0 + $0x4] sm:$0x3]
  %v47 = vld [vmem:[%s0 + $0x6] sm:$0x3]
  %v48 = vld [vmem:[%s0 + $0x8] sm:$0x3]
  %v49 = vld [vmem:[%s0 + $0xa] sm:$0x3]
  %v50 = vld [vmem:[%s0 + $0xc] sm:$0x3]
  %v51 = vld [vmem:[%s0 + $0xe] sm:$0x3]
  %v52 = vld [vmem:[%s1] sm:$0xff]
  %v53 = vld [vmem:[%s2] sm:$0xff]
  %v54 = vld [vmem:[%s2 + $0x8] sm:$0xff]
  %v55 = vld [vmem:[%s2 + $0x10] sm:$0xff]
  %v56 = vld [vmem:[%s2 + $0x18] sm:$0xff]
  %v57 = vld [vmem:[%s3] sm:$0x1]
  %vm58 = vcmask 261120
  %v60 = vsel %vm58, 0.0, 0
  %62 = vmatprep.subr.mxu0 0.0
  %63 = vmatpush1.msra.mxu0 %v53
  %64 = vmatprep.subr.mxu0 0.0
  %65 = vmatpush1.msra.mxu0 %v54
  %66 = vmatprep.subr.mxu0 0.0
  %67 = vmatpush1.msra.mxu0 %v55
  %68 = vmatprep.subr.mxu0 0.0
  %69 = vmatpush1.msra.mxu0 %v56
  %70 = vmatprep.subr.mxu0 0.0
  %71 = vmatpush1.msra.mxu0 0.0
  %72 = vmatprep.subr.mxu0 0.0
  %73 = vmatpush1.msra.mxu0 0.0
  %74 = vmatprep.subr.mxu0 0.0
  %75 = vmatpush1.msra.mxu0 0.0
  %76 = vmatprep.subr.mxu0 0.0
  %77 = vmatpush1.msra.mxu0 0.0
  %78 = vmatprep.subr.mxu0 0.0
  %79 = vmatpush1.msra.mxu0 0.0
  %80 = vmatprep.subr.mxu0 0.0
  %81 = vmatpush1.msra.mxu0 0.0
  %82 = vmatprep.subr.mxu0 0.0
  %83 = vmatpush1.msra.mxu0 0.0
  %84 = vmatprep.subr.mxu0 0.0
  %85 = vmatpush1.msra.mxu0 0.0
  %86 = vmatprep.subr.mxu0 0.0
  %87 = vmatpush1.msra.mxu0 0.0
  %88 = vmatprep.subr.mxu0 0.0
  %89 = vmatpush1.msra.mxu0 0.0
  %90 = vmatprep.subr.mxu0 0.0
  %91 = vmatpush1.msra.mxu0 0.0
  %92 = vmatprep.subr.mxu0 0.0
  %93 = vmatpush1.msra.mxu0 0.0
  %94 = vmatprep.subr.mxu0 0.0
  %95 = vmatpush1.msra.mxu0 0.0
  %96 = vmatprep.subr.mxu0 0.0
  %97 = vmatpush1.msra.mxu0 0.0
  %98 = vmatprep.subr.mxu0 0.0
  %99 = vmatpush1.msra.mxu0 0.0
  %100 = vmatprep.subr.mxu0 0.0
  %101 = vmatpush1.msra.mxu0 0.0
  %102 = vmatprep.subr.mxu0 0.0
  %103 = vmatpush1.msra.mxu0 0.0
  %104 = vmatprep.subr.mxu0 0.0
  %105 = vmatpush1.msra.mxu0 0.0
  %106 = vmatprep.subr.mxu0 0.0
  %107 = vmatpush1.msra.mxu0 0.0
  %108 = vmatprep.subr.mxu0 0.0
  %109 = vmatpush1.msra.mxu0 0.0
  %110 = vmatprep.subr.mxu0 0.0
  %111 = vmatpush1.msra.mxu0 0.0
  %112 = vmatprep.subr.mxu0 0.0
  %113 = vmatpush1.msra.mxu0 0.0
  %114 = vmatprep.subr.mxu0 0.0
  %115 = vmatpush1.msra.mxu0 0.0
  %116 = vmatprep.subr.mxu0 0.0
  %117 = vmatpush1.msra.mxu0 0.0
  %118 = vmatprep.subr.mxu0 0.0
  %119 = vmatpush1.msra.mxu0 0.0
  %120 = vmatprep.subr.mxu0 0.0
  %121 = vmatpush1.msra.mxu0 0.0
  %122 = vmatprep.subr.mxu0 0.0
  %123 = vmatpush1.msra.mxu0 0.0
  %124 = vmatprep.subr.mxu0 0.0
  %125 = vmatpush1.msra.mxu0 0.0
  %126 = vmatprep.mubr.f32.mxu0 0.0
  %127 = vmatmul.mubr.f32.gmra.mrb[0].mxu0 %v60
  %v128 = vpop.f32.mrb[0].mxu0
  %v129 = vadd.f32 0.0, %v128
  %v130 = vpop.f32.mrb[0].mxu0
  %131 = vdwg.mxu0
  %vm132 = vcmask 64512
  %v134 = vsel %vm132, %v44, 0
  %136 = vmatprep.subr.mxu0 0.0
  %137 = vmatpush1.msra.mxu0 %v52
  %138 = vmatprep.subr.mxu0 0.0
  %139 = vmatpush1.msra.mxu0 0.0
  %140 = vmatprep.subr.mxu0 0.0
  %141 = vmatpush1.msra.mxu0 0.0
  %142 = vmatprep.subr.mxu0 0.0
  %143 = vmatpush1.msra.mxu0 0.0
  %144 = vmatprep.subr.mxu0 0.0
  %145 = vmatpush1.msra.mxu0 0.0
  %146 = vmatprep.subr.mxu0 0.0
  %147 = vmatpush1.msra.mxu0 0.0
  %148 = vmatprep.subr.mxu0 0.0
  %149 = vmatpush1.msra.mxu0 0.0
  %150 = vmatprep.subr.mxu0 0.0
  %151 = vmatpush1.msra.mxu0 0.0
  %152 = vmatprep.subr.mxu0 0.0
  %153 = vmatpush1.msra.mxu0 0.0
  %154 = vmatprep.subr.mxu0 0.0
  %155 = vmatpush1.msra.mxu0 0.0
  %156 = vmatprep.subr.mxu0 0.0
  %157 = vmatpush1.msra.mxu0 0.0
  %158 = vmatprep.subr.mxu0 0.0
  %159 = vmatpush1.msra.mxu0 0.0
  %160 = vmatprep.subr.mxu0 0.0
  %161 = vmatpush1.msra.mxu0 0.0
  %162 = vmatprep.subr.mxu0 0.0
  %163 = vmatpush1.msra.mxu0 0.0
  %164 = vmatprep.subr.mxu0 0.0
  %165 = vmatpush1.msra.mxu0 0.0
  %166 = vmatprep.subr.mxu0 0.0
  %167 = vmatpush1.msra.mxu0 0.0
  %168 = vmatprep.subr.mxu0 0.0
  %169 = vmatpush1.msra.mxu0 0.0
  %170 = vmatprep.subr.mxu0 0.0
  %171 = vmatpush1.msra.mxu0 0.0
  %172 = vmatprep.subr.mxu0 0.0
  %173 = vmatpush1.msra.mxu0 0.0
  %174 = vmatprep.subr.mxu0 0.0
  %175 = vmatpush1.msra.mxu0 0.0
  %176 = vmatprep.subr.mxu0 0.0
  %177 = vmatpush1.msra.mxu0 0.0
  %178 = vmatprep.subr.mxu0 0.0
  %179 = vmatpush1.msra.mxu0 0.0
  %180 = vmatprep.subr.mxu0 0.0
  %181 = vmatpush1.msra.mxu0 0.0
  %182 = vmatprep.subr.mxu0 0.0
  %183 = vmatpush1.msra.mxu0 0.0
  %184 = vmatprep.subr.mxu0 0.0
  %185 = vmatpush1.msra.mxu0 0.0
  %186 = vmatprep.subr.mxu0 0.0
  %187 = vmatpush1.msra.mxu0 0.0
  %188 = vmatprep.subr.mxu0 0.0
  %189 = vmatpush1.msra.mxu0 0.0
  %190 = vmatprep.subr.mxu0 0.0
  %191 = vmatpush1.msra.mxu0 0.0
  %192 = vmatprep.subr.mxu0 0.0
  %193 = vmatpush1.msra.mxu0 0.0
  %194 = vmatprep.subr.mxu0 0.0
  %195 = vmatpush1.msra.mxu0 0.0
  %196 = vmatprep.subr.mxu0 0.0
  %197 = vmatpush1.msra.mxu0 0.0
  %198 = vmatprep.subr.mxu0 0.0
  %199 = vmatpush1.msra.mxu0 0.0
  %200 = vmatprep.mubr.f32.mxu0 0.0
  %201 = vmatmul.mubr.f32.gmra.mrb[0].mxu0 %v134
  %v202 = vpop.f32.mrb[0].mxu0
  %v203 = vadd.f32 %v129, %v202
  %v204 = vpop.f32.mrb[0].mxu0
  %205 = vdwg.mxu0
  %v207 = vlaneseq
  %v208 = vshrl.u32 %v207, 7
  %v209 = vsub.s32 0, %v208
  %v210 = vrot.slane %v57, %v209
  %v212 = vadd.f32 %v203, %v210
  %v213 = vxor.u32 %v212, 2147483648
  %v214 = vmul.f32 %v213, 1.442695
  %v215 = vpow.pop %v214
  %v216 = vadd.f32 %v215, 1.0
  %v217 = vrcp.pop %v216
  %v218 = vmul.f32 1.0, %v217
  %v219 = vtanh.pop %v212
  %v220 = vmul.f32 %v218, 0.0
  %222 = vrot.lane.b32.xlu0 %v219, 64
  %v223 = vpop.permute.xlu0 %222
  %v225 = vmul.f32 %v218, %v223
  %227 = vrot.lane.b32.xlu0 %v225, 32
  %v228 = vpop.permute.xlu0 %227
  %v230 = vadd.f32 %v220, %v228
  %v231 = vtanh.pop %v230
  %233 = vrot.lane.b32.xlu0 %v231, 64
  %v234 = vpop.permute.xlu0 %233
  %v236 = vmul.f32 %v218, %v234
  %238 = vrot.lane.b32.xlu0 %v236, 32
  %v239 = vpop.permute.xlu0 %238
  %v240 = vsel %vm58, %v239, 0
  %242 = vmatprep.subr.mxu0 0.0
  %243 = vmatpush1.msra.mxu0 %v53
  %244 = vmatprep.subr.mxu0 0.0
  %245 = vmatpush1.msra.mxu0 %v54
  %246 = vmatprep.subr.mxu0 0.0
  %247 = vmatpush1.msra.mxu0 %v55
  %248 = vmatprep.subr.mxu0 0.0
  %249 = vmatpush1.msra.mxu0 %v56
  %250 = vmatprep.subr.mxu0 0.0
  %251 = vmatpush1.msra.mxu0 0.0
  %252 = vmatprep.subr.mxu0 0.0
  %253 = vmatpush1.msra.mxu0 0.0
  %254 = vmatprep.subr.mxu0 0.0
  %255 = vmatpush1.msra.mxu0 0.0
  %256 = vmatprep.subr.mxu0 0.0
  %257 = vmatpush1.msra.mxu0 0.0
  %258 = vmatprep.subr.mxu0 0.0
  %259 = vmatpush1.msra.mxu0 0.0
  %260 = vmatprep.subr.mxu0 0.0
  %261 = vmatpush1.msra.mxu0 0.0
  %262 = vmatprep.subr.mxu0 0.0
  %263 = vmatpush1.msra.mxu0 0.0
  %264 = vmatprep.subr.mxu0 0.0
  %265 = vmatpush1.msra.mxu0 0.0
  %266 = vmatprep.subr.mxu0 0.0
  %267 = vmatpush1.msra.mxu0 0.0
  %268 = vmatprep.subr.mxu0 0.0
  %269 = vmatpush1.msra.mxu0 0.0
  %270 = vmatprep.subr.mxu0 0.0
  %271 = vmatpush1.msra.mxu0 0.0
  %272 = vmatprep.subr.mxu0 0.0
  %273 = vmatpush1.msra.mxu0 0.0
  %274 = vmatprep.subr.mxu0 0.0
  %275 = vmatpush1.msra.mxu0 0.0
  %276 = vmatprep.subr.mxu0 0.0
  %277 = vmatpush1.msra.mxu0 0.0
  %278 = vmatprep.subr.mxu0 0.0
  %279 = vmatpush1.msra.mxu0 0.0
  %280 = vmatprep.subr.mxu0 0.0
  %281 = vmatpush1.msra.mxu0 0.0
  %282 = vmatprep.subr.mxu0 0.0
  %283 = vmatpush1.msra.mxu0 0.0
  %284 = vmatprep.subr.mxu0 0.0
  %285 = vmatpush1.msra.mxu0 0.0
  %286 = vmatprep.subr.mxu0 0.0
  %287 = vmatpush1.msra.mxu0 0.0
  %288 = vmatprep.subr.mxu0 0.0
  %289 = vmatpush1.msra.mxu0 0.0
  %290 = vmatprep.subr.mxu0 0.0
  %291 = vmatpush1.msra.mxu0 0.0
  %292 = vmatprep.subr.mxu0 0.0
  %293 = vmatpush1.msra.mxu0 0.0
  %294 = vmatprep.subr.mxu0 0.0
  %295 = vmatpush1.msra.mxu0 0.0
  %296 = vmatprep.subr.mxu0 0.0
  %297 = vmatpush1.msra.mxu0 0.0
  %298 = vmatprep.subr.mxu0 0.0
  %299 = vmatpush1.msra.mxu0 0.0
  %300 = vmatprep.subr.mxu0 0.0
  %301 = vmatpush1.msra.mxu0 0.0
  %302 = vmatprep.subr.mxu0 0.0
  %303 = vmatpush1.msra.mxu0 0.0
  %304 = vmatprep.subr.mxu0 0.0
  %305 = vmatpush1.msra.mxu0 0.0
  %306 = vmatprep.mubr.f32.mxu0 0.0
  %307 = vmatmul.mubr.f32.gmra.mrb[0].mxu0 %v240
  %v308 = vpop.f32.mrb[0].mxu0
  %v309 = vadd.f32 0.0, %v308
  %v310 = vpop.f32.mrb[0].mxu0
  %311 = vdwg.mxu0
  %v313 = vsel %vm132, %v45, 0
  %315 = vmatprep.subr.mxu0 0.0
  %316 = vmatpush1.msra.mxu0 %v52
  %317 = vmatprep.subr.mxu0 0.0
  %318 = vmatpush1.msra.mxu0 0.0
  %319 = vmatprep.subr.mxu0 0.0
  %320 = vmatpush1.msra.mxu0 0.0
  %321 = vmatprep.subr.mxu0 0.0
  %322 = vmatpush1.msra.mxu0 0.0
  %323 = vmatprep.subr.mxu0 0.0
  %324 = vmatpush1.msra.mxu0 0.0
  %325 = vmatprep.subr.mxu0 0.0
  %326 = vmatpush1.msra.mxu0 0.0
  %327 = vmatprep.subr.mxu0 0.0
  %328 = vmatpush1.msra.mxu0 0.0
  %329 = vmatprep.subr.mxu0 0.0
  %330 = vmatpush1.msra.mxu0 0.0
  %331 = vmatprep.subr.mxu0 0.0
  %332 = vmatpush1.msra.mxu0 0.0
  %333 = vmatprep.subr.mxu0 0.0
  %334 = vmatpush1.msra.mxu0 0.0
  %335 = vmatprep.subr.mxu0 0.0
  %336 = vmatpush1.msra.mxu0 0.0
  %337 = vmatprep.subr.mxu0 0.0
  %338 = vmatpush1.msra.mxu0 0.0
  %339 = vmatprep.subr.mxu0 0.0
  %340 = vmatpush1.msra.mxu0 0.0
  %341 = vmatprep.subr.mxu0 0.0
  %342 = vmatpush1.msra.mxu0 0.0
  %343 = vmatprep.subr.mxu0 0.0
  %344 = vmatpush1.msra.mxu0 0.0
  %345 = vmatprep.subr.mxu0 0.0
  %346 = vmatpush1.msra.mxu0 0.0
  %347 = vmatprep.subr.mxu0 0.0
  %348 = vmatpush1.msra.mxu0 0.0
  %349 = vmatprep.subr.mxu0 0.0
  %350 = vmatpush1.msra.mxu0 0.0
  %351 = vmatprep.subr.mxu0 0.0
  %352 = vmatpush1.msra.mxu0 0.0
  %353 = vmatprep.subr.mxu0 0.0
  %354 = vmatpush1.msra.mxu0 0.0
  %355 = vmatprep.subr.mxu0 0.0
  %356 = vmatpush1.msra.mxu0 0.0
  %357 = vmatprep.subr.mxu0 0.0
  %358 = vmatpush1.msra.mxu0 0.0
  %359 = vmatprep.subr.mxu0 0.0
  %360 = vmatpush1.msra.mxu0 0.0
  %361 = vmatprep.subr.mxu0 0.0
  %362 = vmatpush1.msra.mxu0 0.0
  %363 = vmatprep.subr.mxu0 0.0
  %364 = vmatpush1.msra.mxu0 0.0
  %365 = vmatprep.subr.mxu0 0.0
  %366 = vmatpush1.msra.mxu0 0.0
  %367 = vmatprep.subr.mxu0 0.0
  %368 = vmatpush1.msra.mxu0 0.0
  %369 = vmatprep.subr.mxu0 0.0
  %370 = vmatpush1.msra.mxu0 0.0
  %371 = vmatprep.subr.mxu0 0.0
  %372 = vmatpush1.msra.mxu0 0.0
  %373 = vmatprep.subr.mxu0 0.0
  %374 = vmatpush1.msra.mxu0 0.0
  %375 = vmatprep.subr.mxu0 0.0
  %376 = vmatpush1.msra.mxu0 0.0
  %377 = vmatprep.subr.mxu0 0.0
  %378 = vmatpush1.msra.mxu0 0.0
  %379 = vmatprep.mubr.f32.mxu0 0.0
  %380 = vmatmul.mubr.f32.gmra.mrb[0].mxu0 %v313
  %v381 = vpop.f32.mrb[0].mxu0
  %v382 = vadd.f32 %v309, %v381
  %v383 = vpop.f32.mrb[0].mxu0
  %384 = vdwg.mxu0
  %v385 = vadd.f32 %v382, %v210
  %v386 = vxor.u32 %v385, 2147483648
  %v387 = vmul.f32 %v386, 1.442695
  %v388 = vpow.pop %v387
  %v389 = vadd.f32 %v388, 1.0
  %v390 = vrcp.pop %v389
  %v391 = vmul.f32 1.0, %v390
  %v392 = vtanh.pop %v385
  %v393 = vmul.f32 %v391, %v230
  %395 = vrot.lane.b32.xlu0 %v392, 64
  %v396 = vpop.permute.xlu0 %395
  %v398 = vmul.f32 %v391, %v396
  %400 = vrot.lane.b32.xlu0 %v398, 32
  %v401 = vpop.permute.xlu0 %400
  %v403 = vadd.f32 %v393, %v401
  %v404 = vtanh.pop %v403
  %406 = vrot.lane.b32.xlu0 %v404, 64
  %v407 = vpop.permute.xlu0 %406
  %v409 = vmul.f32 %v391, %v407
  %411 = vrot.lane.b32.xlu0 %v409, 32
  %v412 = vpop.permute.xlu0 %411
  %v413 = vsel %vm58, %v412, 0
  %415 = vmatprep.subr.mxu0 0.0
  %416 = vmatpush1.msra.mxu0 %v53
  %417 = vmatprep.subr.mxu0 0.0
  %418 = vmatpush1.msra.mxu0 %v54
  %419 = vmatprep.subr.mxu0 0.0
  %420 = vmatpush1.msra.mxu0 %v55
  %421 = vmatprep.subr.mxu0 0.0
  %422 = vmatpush1.msra.mxu0 %v56
  %423 = vmatprep.subr.mxu0 0.0
  %424 = vmatpush1.msra.mxu0 0.0
  %425 = vmatprep.subr.mxu0 0.0
  %426 = vmatpush1.msra.mxu0 0.0
  %427 = vmatprep.subr.mxu0 0.0
  %428 = vmatpush1.msra.mxu0 0.0
  %429 = vmatprep.subr.mxu0 0.0
  %430 = vmatpush1.msra.mxu0 0.0
  %431 = vmatprep.subr.mxu0 0.0
  %432 = vmatpush1.msra.mxu0 0.0
  %433 = vmatprep.subr.mxu0 0.0
  %434 = vmatpush1.msra.mxu0 0.0
  %435 = vmatprep.subr.mxu0 0.0
  %436 = vmatpush1.msra.mxu0 0.0
  %437 = vmatprep.subr.mxu0 0.0
  %438 = vmatpush1.msra.mxu0 0.0
  %439 = vmatprep.subr.mxu0 0.0
  %440 = vmatpush1.msra.mxu0 0.0
  %441 = vmatprep.subr.mxu0 0.0
  %442 = vmatpush1.msra.mxu0 0.0
  %443 = vmatprep.subr.mxu0 0.0
  %444 = vmatpush1.msra.mxu0 0.0
  %445 = vmatprep.subr.mxu0 0.0
  %446 = vmatpush1.msra.mxu0 0.0
  %447 = vmatprep.subr.mxu0 0.0
  %448 = vmatpush1.msra.mxu0 0.0
  %449 = vmatprep.subr.mxu0 0.0
  %450 = vmatpush1.msra.mxu0 0.0
  %451 = vmatprep.subr.mxu0 0.0
  %452 = vmatpush1.msra.mxu0 0.0
  %453 = vmatprep.subr.mxu0 0.0
  %454 = vmatpush1.msra.mxu0 0.0
  %455 = vmatprep.subr.mxu0 0.0
  %456 = vmatpush1.msra.mxu0 0.0
  %457 = vmatprep.subr.mxu0 0.0
  %458 = vmatpush1.msra.mxu0 0.0
  %459 = vmatprep.subr.mxu0 0.0
  %460 = vmatpush1.msra.mxu0 0.0
  %461 = vmatprep.subr.mxu0 0.0
  %462 = vmatpush1.msra.mxu0 0.0
  %463 = vmatprep.subr.mxu0 0.0
  %464 = vmatpush1.msra.mxu0 0.0
  %465 = vmatprep.subr.mxu0 0.0
  %466 = vmatpush1.msra.mxu0 0.0
  %467 = vmatprep.subr.mxu0 0.0
  %468 = vmatpush1.msra.mxu0 0.0
  %469 = vmatprep.subr.mxu0 0.0
  %470 = vmatpush1.msra.mxu0 0.0
  %471 = vmatprep.subr.mxu0 0.0
  %472 = vmatpush1.msra.mxu0 0.0
  %473 = vmatprep.subr.mxu0 0.0
  %474 = vmatpush1.msra.mxu0 0.0
  %475 = vmatprep.subr.mxu0 0.0
  %476 = vmatpush1.msra.mxu0 0.0
  %477 = vmatprep.subr.mxu0 0.0
  %478 = vmatpush1.msra.mxu0 0.0
  %479 = vmatprep.mubr.f32.mxu0 0.0
  %480 = vmatmul.mubr.f32.gmra.mrb[0].mxu0 %v413
  %v481 = vpop.f32.mrb[0].mxu0
  %v482 = vadd.f32 0.0, %v481
  %v483 = vpop.f32.mrb[0].mxu0
  %484 = vdwg.mxu0
  %v486 = vsel %vm132, %v46, 0
  %488 = vmatprep.subr.mxu0 0.0
  %489 = vmatpush1.msra.mxu0 %v52
  %490 = vmatprep.subr.mxu0 0.0
  %491 = vmatpush1.msra.mxu0 0.0
  %492 = vmatprep.subr.mxu0 0.0
  %493 = vmatpush1.msra.mxu0 0.0
  %494 = vmatprep.subr.mxu0 0.0
  %495 = vmatpush1.msra.mxu0 0.0
  %496 = vmatprep.subr.mxu0 0.0
  %497 = vmatpush1.msra.mxu0 0.0
  %498 = vmatprep.subr.mxu0 0.0
  %499 = vmatpush1.msra.mxu0 0.0
  %500 = vmatprep.subr.mxu0 0.0
  %501 = vmatpush1.msra.mxu0 0.0
  %502 = vmatprep.subr.mxu0 0.0
  %503 = vmatpush1.msra.mxu0 0.0
  %504 = vmatprep.subr.mxu0 0.0
  %505 = vmatpush1.msra.mxu0 0.0
  %506 = vmatprep.subr.mxu0 0.0
  %507 = vmatpush1.msra.mxu0 0.0
  %508 = vmatprep.subr.mxu0 0.0
  %509 = vmatpush1.msra.mxu0 0.0
  %510 = vmatprep.subr.mxu0 0.0
  %511 = vmatpush1.msra.mxu0 0.0
  %512 = vmatprep.subr.mxu0 0.0
  %513 = vmatpush1.msra.mxu0 0.0
  %514 = vmatprep.subr.mxu0 0.0
  %515 = vmatpush1.msra.mxu0 0.0
  %516 = vmatprep.subr.mxu0 0.0
  %517 = vmatpush1.msra.mxu0 0.0
  %518 = vmatprep.subr.mxu0 0.0
  %519 = vmatpush1.msra.mxu0 0.0
  %520 = vmatprep.subr.mxu0 0.0
  %521 = vmatpush1.msra.mxu0 0.0
  %522 = vmatprep.subr.mxu0 0.0
  %523 = vmatpush1.msra.mxu0 0.0
  %524 = vmatprep.subr.mxu0 0.0
  %525 = vmatpush1.msra.mxu0 0.0
  %526 = vmatprep.subr.mxu0 0.0
  %527 = vmatpush1.msra.mxu0 0.0
  %528 = vmatprep.subr.mxu0 0.0
  %529 = vmatpush1.msra.mxu0 0.0
  %530 = vmatprep.subr.mxu0 0.0
  %531 = vmatpush1.msra.mxu0 0.0
  %532 = vmatprep.subr.mxu0 0.0
  %533 = vmatpush1.msra.mxu0 0.0
  %534 = vmatprep.subr.mxu0 0.0
  %535 = vmatpush1.msra.mxu0 0.0
  %536 = vmatprep.subr.mxu0 0.0
  %537 = vmatpush1.msra.mxu0 0.0
  %538 = vmatprep.subr.mxu0 0.0
  %539 = vmatpush1.msra.mxu0 0.0
  %540 = vmatprep.subr.mxu0 0.0
  %541 = vmatpush1.msra.mxu0 0.0
  %542 = vmatprep.subr.mxu0 0.0
  %543 = vmatpush1.msra.mxu0 0.0
  %544 = vmatprep.subr.mxu0 0.0
  %545 = vmatpush1.msra.mxu0 0.0
  %546 = vmatprep.subr.mxu0 0.0
  %547 = vmatpush1.msra.mxu0 0.0
  %548 = vmatprep.subr.mxu0 0.0
  %549 = vmatpush1.msra.mxu0 0.0
  %550 = vmatprep.subr.mxu0 0.0
  %551 = vmatpush1.msra.mxu0 0.0
  %552 = vmatprep.mubr.f32.mxu0 0.0
  %553 = vmatmul.mubr.f32.gmra.mrb[0].mxu0 %v486
  %v554 = vpop.f32.mrb[0].mxu0
  %v555 = vadd.f32 %v482, %v554
  %v556 = vpop.f32.mrb[0].mxu0
  %557 = vdwg.mxu0
  %v558 = vadd.f32 %v555, %v210
  %v559 = vxor.u32 %v558, 2147483648
  %v560 = vmul.f32 %v559, 1.442695
  %v561 = vpow.pop %v560
  %v562 = vadd.f32 %v561, 1.0
  %v563 = vrcp.pop %v562
  %v564 = vmul.f32 1.0, %v563
  %v565 = vtanh.pop %v558
  %v566 = vmul.f32 %v564, %v403
  %568 = vrot.lane.b32.xlu0 %v565, 64
  %v569 = vpop.permute.xlu0 %568
  %v571 = vmul.f32 %v564, %v569
  %573 = vrot.lane.b32.xlu0 %v571, 32
  %v574 = vpop.permute.xlu0 %573
  %v576 = vadd.f32 %v566, %v574
  %v577 = vtanh.pop %v576
  %579 = vrot.lane.b32.xlu0 %v577, 64
  %v580 = vpop.permute.xlu0 %579
  %v582 = vmul.f32 %v564, %v580
  %584 = vrot.lane.b32.xlu0 %v582, 32
  %v585 = vpop.permute.xlu0 %584
  %v586 = vsel %vm58, %v585, 0
  %588 = vmatprep.subr.mxu0 0.0
  %589 = vmatpush1.msra.mxu0 %v53
  %590 = vmatprep.subr.mxu0 0.0
  %591 = vmatpush1.msra.mxu0 %v54
  %592 = vmatprep.subr.mxu0 0.0
  %593 = vmatpush1.msra.mxu0 %v55
  %594 = vmatprep.subr.mxu0 0.0
  %595 = vmatpush1.msra.mxu0 %v56
  %596 = vmatprep.subr.mxu0 0.0
  %597 = vmatpush1.msra.mxu0 0.0
  %598 = vmatprep.subr.mxu0 0.0
  %599 = vmatpush1.msra.mxu0 0.0
  %600 = vmatprep.subr.mxu0 0.0
  %601 = vmatpush1.msra.mxu0 0.0
  %602 = vmatprep.subr.mxu0 0.0
  %603 = vmatpush1.msra.mxu0 0.0
  %604 = vmatprep.subr.mxu0 0.0
  %605 = vmatpush1.msra.mxu0 0.0
  %606 = vmatprep.subr.mxu0 0.0
  %607 = vmatpush1.msra.mxu0 0.0
  %608 = vmatprep.subr.mxu0 0.0
  %609 = vmatpush1.msra.mxu0 0.0
  %610 = vmatprep.subr.mxu0 0.0
  %611 = vmatpush1.msra.mxu0 0.0
  %612 = vmatprep.subr.mxu0 0.0
  %613 = vmatpush1.msra.mxu0 0.0
  %614 = vmatprep.subr.mxu0 0.0
  %615 = vmatpush1.msra.mxu0 0.0
  %616 = vmatprep.subr.mxu0 0.0
  %617 = vmatpush1.msra.mxu0 0.0
  %618 = vmatprep.subr.mxu0 0.0
  %619 = vmatpush1.msra.mxu0 0.0
  %620 = vmatprep.subr.mxu0 0.0
  %621 = vmatpush1.msra.mxu0 0.0
  %622 = vmatprep.subr.mxu0 0.0
  %623 = vmatpush1.msra.mxu0 0.0
  %624 = vmatprep.subr.mxu0 0.0
  %625 = vmatpush1.msra.mxu0 0.0
  %626 = vmatprep.subr.mxu0 0.0
  %627 = vmatpush1.msra.mxu0 0.0
  %628 = vmatprep.subr.mxu0 0.0
  %629 = vmatpush1.msra.mxu0 0.0
  %630 = vmatprep.subr.mxu0 0.0
  %631 = vmatpush1.msra.mxu0 0.0
  %632 = vmatprep.subr.mxu0 0.0
  %633 = vmatpush1.msra.mxu0 0.0
  %634 = vmatprep.subr.mxu0 0.0
  %635 = vmatpush1.msra.mxu0 0.0
  %636 = vmatprep.subr.mxu0 0.0
  %637 = vmatpush1.msra.mxu0 0.0
  %638 = vmatprep.subr.mxu0 0.0
  %639 = vmatpush1.msra.mxu0 0.0
  %640 = vmatprep.subr.mxu0 0.0
  %641 = vmatpush1.msra.mxu0 0.0
  %642 = vmatprep.subr.mxu0 0.0
  %643 = vmatpush1.msra.mxu0 0.0
  %644 = vmatprep.subr.mxu0 0.0
  %645 = vmatpush1.msra.mxu0 0.0
  %646 = vmatprep.subr.mxu0 0.0
  %647 = vmatpush1.msra.mxu0 0.0
  %648 = vmatprep.subr.mxu0 0.0
  %649 = vmatpush1.msra.mxu0 0.0
  %650 = vmatprep.subr.mxu0 0.0
  %651 = vmatpush1.msra.mxu0 0.0
  %652 = vmatprep.mubr.f32.mxu0 0.0
  %653 = vmatmul.mubr.f32.gmra.mrb[0].mxu0 %v586
  %v654 = vpop.f32.mrb[0].mxu0
  %v655 = vadd.f32 0.0, %v654
  %v656 = vpop.f32.mrb[0].mxu0
  %657 = vdwg.mxu0
  %v659 = vsel %vm132, %v47, 0
  %661 = vmatprep.subr.mxu0 0.0
  %662 = vmatpush1.msra.mxu0 %v52
  %663 = vmatprep.subr.mxu0 0.0
  %664 = vmatpush1.msra.mxu0 0.0
  %665 = vmatprep.subr.mxu0 0.0
  %666 = vmatpush1.msra.mxu0 0.0
  %667 = vmatprep.subr.mxu0 0.0
  %668 = vmatpush1.msra.mxu0 0.0
  %669 = vmatprep.subr.mxu0 0.0
  %670 = vmatpush1.msra.mxu0 0.0
  %671 = vmatprep.subr.mxu0 0.0
  %672 = vmatpush1.msra.mxu0 0.0
  %673 = vmatprep.subr.mxu0 0.0
  %674 = vmatpush1.msra.mxu0 0.0
  %675 = vmatprep.subr.mxu0 0.0
  %676 = vmatpush1.msra.mxu0 0.0
  %677 = vmatprep.subr.mxu0 0.0
  %678 = vmatpush1.msra.mxu0 0.0
  %679 = vmatprep.subr.mxu0 0.0
  %680 = vmatpush1.msra.mxu0 0.0
  %681 = vmatprep.subr.mxu0 0.0
  %682 = vmatpush1.msra.mxu0 0.0
  %683 = vmatprep.subr.mxu0 0.0
  %684 = vmatpush1.msra.mxu0 0.0
  %685 = vmatprep.subr.mxu0 0.0
  %686 = vmatpush1.msra.mxu0 0.0
  %687 = vmatprep.subr.mxu0 0.0
  %688 = vmatpush1.msra.mxu0 0.0
  %689 = vmatprep.subr.mxu0 0.0
  %690 = vmatpush1.msra.mxu0 0.0
  %691 = vmatprep.subr.mxu0 0.0
  %692 = vmatpush1.msra.mxu0 0.0
  %693 = vmatprep.subr.mxu0 0.0
  %694 = vmatpush1.msra.mxu0 0.0
  %695 = vmatprep.subr.mxu0 0.0
  %696 = vmatpush1.msra.mxu0 0.0
  %697 = vmatprep.subr.mxu0 0.0
  %698 = vmatpush1.msra.mxu0 0.0
  %699 = vmatprep.subr.mxu0 0.0
  %700 = vmatpush1.msra.mxu0 0.0
  %701 = vmatprep.subr.mxu0 0.0
  %702 = vmatpush1.msra.mxu0 0.0
  %703 = vmatprep.subr.mxu0 0.0
  %704 = vmatpush1.msra.mxu0 0.0
  %705 = vmatprep.subr.mxu0 0.0
  %706 = vmatpush1.msra.mxu0 0.0
  %707 = vmatprep.subr.mxu0 0.0
  %708 = vmatpush1.msra.mxu0 0.0
  %709 = vmatprep.subr.mxu0 0.0
  %710 = vmatpush1.msra.mxu0 0.0
  %711 = vmatprep.subr.mxu0 0.0
  %712 = vmatpush1.msra.mxu0 0.0
  %713 = vmatprep.subr.mxu0 0.0
  %714 = vmatpush1.msra.mxu0 0.0
  %715 = vmatprep.subr.mxu0 0.0
  %716 = vmatpush1.msra.mxu0 0.0
  %717 = vmatprep.subr.mxu0 0.0
  %718 = vmatpush1.msra.mxu0 0.0
  %719 = vmatprep.subr.mxu0 0.0
  %720 = vmatpush1.msra.mxu0 0.0
  %721 = vmatprep.subr.mxu0 0.0
  %722 = vmatpush1.msra.mxu0 0.0
  %723 = vmatprep.subr.mxu0 0.0
  %724 = vmatpush1.msra.mxu0 0.0
  %725 = vmatprep.mubr.f32.mxu0 0.0
  %726 = vmatmul.mubr.f32.gmra.mrb[0].mxu0 %v659
  %v727 = vpop.f32.mrb[0].mxu0
  %v728 = vadd.f32 %v655, %v727
  %v729 = vpop.f32.mrb[0].mxu0
  %730 = vdwg.mxu0
  %v731 = vadd.f32 %v728, %v210
  %v732 = vxor.u32 %v731, 2147483648
  %v733 = vmul.f32 %v732, 1.442695
  %v734 = vpow.pop %v733
  %v735 = vadd.f32 %v734, 1.0
  %v736 = vrcp.pop %v735
  %v737 = vmul.f32 1.0, %v736
  %v738 = vtanh.pop %v731
  %v739 = vmul.f32 %v737, %v576
  %741 = vrot.lane.b32.xlu0 %v738, 64
  %v742 = vpop.permute.xlu0 %741
  %v744 = vmul.f32 %v737, %v742
  %746 = vrot.lane.b32.xlu0 %v744, 32
  %v747 = vpop.permute.xlu0 %746
  %v749 = vadd.f32 %v739, %v747
  %v750 = vtanh.pop %v749
  %752 = vrot.lane.b32.xlu0 %v750, 64
  %v753 = vpop.permute.xlu0 %752
  %v755 = vmul.f32 %v737, %v753
  %757 = vrot.lane.b32.xlu0 %v755, 32
  %v758 = vpop.permute.xlu0 %757
  %v759 = vsel %vm58, %v758, 0
  %761 = vmatprep.subr.mxu0 0.0
  %762 = vmatpush1.msra.mxu0 %v53
  %763 = vmatprep.subr.mxu0 0.0
  %764 = vmatpush1.msra.mxu0 %v54
  %765 = vmatprep.subr.mxu0 0.0
  %766 = vmatpush1.msra.mxu0 %v55
  %767 = vmatprep.subr.mxu0 0.0
  %768 = vmatpush1.msra.mxu0 %v56
  %769 = vmatprep.subr.mxu0 0.0
  %770 = vmatpush1.msra.mxu0 0.0
  %771 = vmatprep.subr.mxu0 0.0
  %772 = vmatpush1.msra.mxu0 0.0
  %773 = vmatprep.subr.mxu0 0.0
  %774 = vmatpush1.msra.mxu0 0.0
  %775 = vmatprep.subr.mxu0 0.0
  %776 = vmatpush1.msra.mxu0 0.0
  %777 = vmatprep.subr.mxu0 0.0
  %778 = vmatpush1.msra.mxu0 0.0
  %779 = vmatprep.subr.mxu0 0.0
  %780 = vmatpush1.msra.mxu0 0.0
  %781 = vmatprep.subr.mxu0 0.0
  %782 = vmatpush1.msra.mxu0 0.0
  %783 = vmatprep.subr.mxu0 0.0
  %784 = vmatpush1.msra.mxu0 0.0
  %785 = vmatprep.subr.mxu0 0.0
  %786 = vmatpush1.msra.mxu0 0.0
  %787 = vmatprep.subr.mxu0 0.0
  %788 = vmatpush1.msra.mxu0 0.0
  %789 = vmatprep.subr.mxu0 0.0
  %790 = vmatpush1.msra.mxu0 0.0
  %791 = vmatprep.subr.mxu0 0.0
  %792 = vmatpush1.msra.mxu0 0.0
  %793 = vmatprep.subr.mxu0 0.0
  %794 = vmatpush1.msra.mxu0 0.0
  %795 = vmatprep.subr.mxu0 0.0
  %796 = vmatpush1.msra.mxu0 0.0
  %797 = vmatprep.subr.mxu0 0.0
  %798 = vmatpush1.msra.mxu0 0.0
  %799 = vmatprep.subr.mxu0 0.0
  %800 = vmatpush1.msra.mxu0 0.0
  %801 = vmatprep.subr.mxu0 0.0
  %802 = vmatpush1.msra.mxu0 0.0
  %803 = vmatprep.subr.mxu0 0.0
  %804 = vmatpush1.msra.mxu0 0.0
  %805 = vmatprep.subr.mxu0 0.0
  %806 = vmatpush1.msra.mxu0 0.0
  %807 = vmatprep.subr.mxu0 0.0
  %808 = vmatpush1.msra.mxu0 0.0
  %809 = vmatprep.subr.mxu0 0.0
  %810 = vmatpush1.msra.mxu0 0.0
  %811 = vmatprep.subr.mxu0 0.0
  %812 = vmatpush1.msra.mxu0 0.0
  %813 = vmatprep.subr.mxu0 0.0
  %814 = vmatpush1.msra.mxu0 0.0
  %815 = vmatprep.subr.mxu0 0.0
  %816 = vmatpush1.msra.mxu0 0.0
  %817 = vmatprep.subr.mxu0 0.0
  %818 = vmatpush1.msra.mxu0 0.0
  %819 = vmatprep.subr.mxu0 0.0
  %820 = vmatpush1.msra.mxu0 0.0
  %821 = vmatprep.subr.mxu0 0.0
  %822 = vmatpush1.msra.mxu0 0.0
  %823 = vmatprep.subr.mxu0 0.0
  %824 = vmatpush1.msra.mxu0 0.0
  %825 = vmatprep.mubr.f32.mxu0 0.0
  %826 = vmatmul.mubr.f32.gmra.mrb[0].mxu0 %v759
  %v827 = vpop.f32.mrb[0].mxu0
  %v828 = vadd.f32 0.0, %v827
  %v829 = vpop.f32.mrb[0].mxu0
  %830 = vdwg.mxu0
  %v832 = vsel %vm132, %v48, 0
  %834 = vmatprep.subr.mxu0 0.0
  %835 = vmatpush1.msra.mxu0 %v52
  %836 = vmatprep.subr.mxu0 0.0
  %837 = vmatpush1.msra.mxu0 0.0
  %838 = vmatprep.subr.mxu0 0.0
  %839 = vmatpush1.msra.mxu0 0.0
  %840 = vmatprep.subr.mxu0 0.0
  %841 = vmatpush1.msra.mxu0 0.0
  %842 = vmatprep.subr.mxu0 0.0
  %843 = vmatpush1.msra.mxu0 0.0
  %844 = vmatprep.subr.mxu0 0.0
  %845 = vmatpush1.msra.mxu0 0.0
  %846 = vmatprep.subr.mxu0 0.0
  %847 = vmatpush1.msra.mxu0 0.0
  %848 = vmatprep.subr.mxu0 0.0
  %849 = vmatpush1.msra.mxu0 0.0
  %850 = vmatprep.subr.mxu0 0.0
  %851 = vmatpush1.msra.mxu0 0.0
  %852 = vmatprep.subr.mxu0 0.0
  %853 = vmatpush1.msra.mxu0 0.0
  %854 = vmatprep.subr.mxu0 0.0
  %855 = vmatpush1.msra.mxu0 0.0
  %856 = vmatprep.subr.mxu0 0.0
  %857 = vmatpush1.msra.mxu0 0.0
  %858 = vmatprep.subr.mxu0 0.0
  %859 = vmatpush1.msra.mxu0 0.0
  %860 = vmatprep.subr.mxu0 0.0
  %861 = vmatpush1.msra.mxu0 0.0
  %862 = vmatprep.subr.mxu0 0.0
  %863 = vmatpush1.msra.mxu0 0.0
  %864 = vmatprep.subr.mxu0 0.0
  %865 = vmatpush1.msra.mxu0 0.0
  %866 = vmatprep.subr.mxu0 0.0
  %867 = vmatpush1.msra.mxu0 0.0
  %868 = vmatprep.subr.mxu0 0.0
  %869 = vmatpush1.msra.mxu0 0.0
  %870 = vmatprep.subr.mxu0 0.0
  %871 = vmatpush1.msra.mxu0 0.0
  %872 = vmatprep.subr.mxu0 0.0
  %873 = vmatpush1.msra.mxu0 0.0
  %874 = vmatprep.subr.mxu0 0.0
  %875 = vmatpush1.msra.mxu0 0.0
  %876 = vmatprep.subr.mxu0 0.0
  %877 = vmatpush1.msra.mxu0 0.0
  %878 = vmatprep.subr.mxu0 0.0
  %879 = vmatpush1.msra.mxu0 0.0
  %880 = vmatprep.subr.mxu0 0.0
  %881 = vmatpush1.msra.mxu0 0.0
  %882 = vmatprep.subr.mxu0 0.0
  %883 = vmatpush1.msra.mxu0 0.0
  %884 = vmatprep.subr.mxu0 0.0
  %885 = vmatpush1.msra.mxu0 0.0
  %886 = vmatprep.subr.mxu0 0.0
  %887 = vmatpush1.msra.mxu0 0.0
  %888 = vmatprep.subr.mxu0 0.0
  %889 = vmatpush1.msra.mxu0 0.0
  %890 = vmatprep.subr.mxu0 0.0
  %891 = vmatpush1.msra.mxu0 0.0
  %892 = vmatprep.subr.mxu0 0.0
  %893 = vmatpush1.msra.mxu0 0.0
  %894 = vmatprep.subr.mxu0 0.0
  %895 = vmatpush1.msra.mxu0 0.0
  %896 = vmatprep.subr.mxu0 0.0
  %897 = vmatpush1.msra.mxu0 0.0
  %898 = vmatprep.mubr.f32.mxu0 0.0
  %899 = vmatmul.mubr.f32.gmra.mrb[0].mxu0 %v832
  %v900 = vpop.f32.mrb[0].mxu0
  %v901 = vadd.f32 %v828, %v900
  %v902 = vpop.f32.mrb[0].mxu0
  %903 = vdwg.mxu0
  %v904 = vadd.f32 %v901, %v210
  %v905 = vxor.u32 %v904, 2147483648
  %v906 = vmul.f32 %v905, 1.442695
  %v907 = vpow.pop %v906
  %v908 = vadd.f32 %v907, 1.0
  %v909 = vrcp.pop %v908
  %v910 = vmul.f32 1.0, %v909
  %v911 = vtanh.pop %v904
  %v912 = vmul.f32 %v910, %v749
  %914 = vrot.lane.b32.xlu0 %v911, 64
  %v915 = vpop.permute.xlu0 %914
  %v917 = vmul.f32 %v910, %v915
  %919 = vrot.lane.b32.xlu0 %v917, 32
  %v920 = vpop.permute.xlu0 %919
  %v922 = vadd.f32 %v912, %v920
  %v923 = vtanh.pop %v922
  %925 = vrot.lane.b32.xlu0 %v923, 64
  %v926 = vpop.permute.xlu0 %925
  %v928 = vmul.f32 %v910, %v926
  %930 = vrot.lane.b32.xlu0 %v928, 32
  %v931 = vpop.permute.xlu0 %930
  %v932 = vsel %vm58, %v931, 0
  %934 = vmatprep.subr.mxu0 0.0
  %935 = vmatpush1.msra.mxu0 %v53
  %936 = vmatprep.subr.mxu0 0.0
  %937 = vmatpush1.msra.mxu0 %v54
  %938 = vmatprep.subr.mxu0 0.0
  %939 = vmatpush1.msra.mxu0 %v55
  %940 = vmatprep.subr.mxu0 0.0
  %941 = vmatpush1.msra.mxu0 %v56
  %942 = vmatprep.subr.mxu0 0.0
  %943 = vmatpush1.msra.mxu0 0.0
  %944 = vmatprep.subr.mxu0 0.0
  %945 = vmatpush1.msra.mxu0 0.0
  %946 = vmatprep.subr.mxu0 0.0
  %947 = vmatpush1.msra.mxu0 0.0
  %948 = vmatprep.subr.mxu0 0.0
  %949 = vmatpush1.msra.mxu0 0.0
  %950 = vmatprep.subr.mxu0 0.0
  %951 = vmatpush1.msra.mxu0 0.0
  %952 = vmatprep.subr.mxu0 0.0
  %953 = vmatpush1.msra.mxu0 0.0
  %954 = vmatprep.subr.mxu0 0.0
  %955 = vmatpush1.msra.mxu0 0.0
  %956 = vmatprep.subr.mxu0 0.0
  %957 = vmatpush1.msra.mxu0 0.0
  %958 = vmatprep.subr.mxu0 0.0
  %959 = vmatpush1.msra.mxu0 0.0
  %960 = vmatprep.subr.mxu0 0.0
  %961 = vmatpush1.msra.mxu0 0.0
  %962 = vmatprep.subr.mxu0 0.0
  %963 = vmatpush1.msra.mxu0 0.0
  %964 = vmatprep.subr.mxu0 0.0
  %965 = vmatpush1.msra.mxu0 0.0
  %966 = vmatprep.subr.mxu0 0.0
  %967 = vmatpush1.msra.mxu0 0.0
  %968 = vmatprep.subr.mxu0 0.0
  %969 = vmatpush1.msra.mxu0 0.0
  %970 = vmatprep.subr.mxu0 0.0
  %971 = vmatpush1.msra.mxu0 0.0
  %972 = vmatprep.subr.mxu0 0.0
  %973 = vmatpush1.msra.mxu0 0.0
  %974 = vmatprep.subr.mxu0 0.0
  %975 = vmatpush1.msra.mxu0 0.0
  %976 = vmatprep.subr.mxu0 0.0
  %977 = vmatpush1.msra.mxu0 0.0
  %978 = vmatprep.subr.mxu0 0.0
  %979 = vmatpush1.msra.mxu0 0.0
  %980 = vmatprep.subr.mxu0 0.0
  %981 = vmatpush1.msra.mxu0 0.0
  %982 = vmatprep.subr.mxu0 0.0
  %983 = vmatpush1.msra.mxu0 0.0
  %984 = vmatprep.subr.mxu0 0.0
  %985 = vmatpush1.msra.mxu0 0.0
  %986 = vmatprep.subr.mxu0 0.0
  %987 = vmatpush1.msra.mxu0 0.0
  %988 = vmatprep.subr.mxu0 0.0
  %989 = vmatpush1.msra.mxu0 0.0
  %990 = vmatprep.subr.mxu0 0.0
  %991 = vmatpush1.msra.mxu0 0.0
  %992 = vmatprep.subr.mxu0 0.0
  %993 = vmatpush1.msra.mxu0 0.0
  %994 = vmatprep.subr.mxu0 0.0
  %995 = vmatpush1.msra.mxu0 0.0
  %996 = vmatprep.subr.mxu0 0.0
  %997 = vmatpush1.msra.mxu0 0.0
  %998 = vmatprep.mubr.f32.mxu0 0.0
  %999 = vmatmul.mubr.f32.gmra.mrb[0].mxu0 %v932
  %v1000 = vpop.f32.mrb[0].mxu0
  %v1001 = vadd.f32 0.0, %v1000
  %v1002 = vpop.f32.mrb[0].mxu0
  %1003 = vdwg.mxu0
  %v1005 = vsel %vm132, %v49, 0
  %1007 = vmatprep.subr.mxu0 0.0
  %1008 = vmatpush1.msra.mxu0 %v52
  %1009 = vmatprep.subr.mxu0 0.0
  %1010 = vmatpush1.msra.mxu0 0.0
  %1011 = vmatprep.subr.mxu0 0.0
  %1012 = vmatpush1.msra.mxu0 0.0
  %1013 = vmatprep.subr.mxu0 0.0
  %1014 = vmatpush1.msra.mxu0 0.0
  %1015 = vmatprep.subr.mxu0 0.0
  %1016 = vmatpush1.msra.mxu0 0.0
  %1017 = vmatprep.subr.mxu0 0.0
  %1018 = vmatpush1.msra.mxu0 0.0
  %1019 = vmatprep.subr.mxu0 0.0
  %1020 = vmatpush1.msra.mxu0 0.0
  %1021 = vmatprep.subr.mxu0 0.0
  %1022 = vmatpush1.msra.mxu0 0.0
  %1023 = vmatprep.subr.mxu0 0.0
  %1024 = vmatpush1.msra.mxu0 0.0
  %1025 = vmatprep.subr.mxu0 0.0
  %1026 = vmatpush1.msra.mxu0 0.0
  %1027 = vmatprep.subr.mxu0 0.0
  %1028 = vmatpush1.msra.mxu0 0.0
  %1029 = vmatprep.subr.mxu0 0.0
  %1030 = vmatpush1.msra.mxu0 0.0
  %1031 = vmatprep.subr.mxu0 0.0
  %1032 = vmatpush1.msra.mxu0 0.0
  %1033 = vmatprep.subr.mxu0 0.0
  %1034 = vmatpush1.msra.mxu0 0.0
  %1035 = vmatprep.subr.mxu0 0.0
  %1036 = vmatpush1.msra.mxu0 0.0
  %1037 = vmatprep.subr.mxu0 0.0
  %1038 = vmatpush1.msra.mxu0 0.0
  %1039 = vmatprep.subr.mxu0 0.0
  %1040 = vmatpush1.msra.mxu0 0.0
  %1041 = vmatprep.subr.mxu0 0.0
  %1042 = vmatpush1.msra.mxu0 0.0
  %1043 = vmatprep.subr.mxu0 0.0
  %1044 = vmatpush1.msra.mxu0 0.0
  %1045 = vmatprep.subr.mxu0 0.0
  %1046 = vmatpush1.msra.mxu0 0.0
  %1047 = vmatprep.subr.mxu0 0.0
  %1048 = vmatpush1.msra.mxu0 0.0
  %1049 = vmatprep.subr.mxu0 0.0
  %1050 = vmatpush1.msra.mxu0 0.0
  %1051 = vmatprep.subr.mxu0 0.0
  %1052 = vmatpush1.msra.mxu0 0.0
  %1053 = vmatprep.subr.mxu0 0.0
  %1054 = vmatpush1.msra.mxu0 0.0
  %1055 = vmatprep.subr.mxu0 0.0
  %1056 = vmatpush1.msra.mxu0 0.0
  %1057 = vmatprep.subr.mxu0 0.0
  %1058 = vmatpush1.msra.mxu0 0.0
  %1059 = vmatprep.subr.mxu0 0.0
  %1060 = vmatpush1.msra.mxu0 0.0
  %1061 = vmatprep.subr.mxu0 0.0
  %1062 = vmatpush1.msra.mxu0 0.0
  %1063 = vmatprep.subr.mxu0 0.0
  %1064 = vmatpush1.msra.mxu0 0.0
  %1065 = vmatprep.subr.mxu0 0.0
  %1066 = vmatpush1.msra.mxu0 0.0
  %1067 = vmatprep.subr.mxu0 0.0
  %1068 = vmatpush1.msra.mxu0 0.0
  %1069 = vmatprep.subr.mxu0 0.0
  %1070 = vmatpush1.msra.mxu0 0.0
  %1071 = vmatprep.mubr.f32.mxu0 0.0
  %1072 = vmatmul.mubr.f32.gmra.mrb[0].mxu0 %v1005
  %v1073 = vpop.f32.mrb[0].mxu0
  %v1074 = vadd.f32 %v1001, %v1073
  %v1075 = vpop.f32.mrb[0].mxu0
  %1076 = vdwg.mxu0
  %v1077 = vadd.f32 %v1074, %v210
  %v1078 = vxor.u32 %v1077, 2147483648
  %v1079 = vmul.f32 %v1078, 1.442695
  %v1080 = vpow.pop %v1079
  %v1081 = vadd.f32 %v1080, 1.0
  %v1082 = vrcp.pop %v1081
  %v1083 = vmul.f32 1.0, %v1082
  %v1084 = vtanh.pop %v1077
  %v1085 = vmul.f32 %v1083, %v922
  %1087 = vrot.lane.b32.xlu0 %v1084, 64
  %v1088 = vpop.permute.xlu0 %1087
  %v1090 = vmul.f32 %v1083, %v1088
  %1092 = vrot.lane.b32.xlu0 %v1090, 32
  %v1093 = vpop.permute.xlu0 %1092
  %v1095 = vadd.f32 %v1085, %v1093
  %v1096 = vtanh.pop %v1095
  %1098 = vrot.lane.b32.xlu0 %v1096, 64
  %v1099 = vpop.permute.xlu0 %1098
  %v1101 = vmul.f32 %v1083, %v1099
  %1103 = vrot.lane.b32.xlu0 %v1101, 32
  %v1104 = vpop.permute.xlu0 %1103
  %v1105 = vsel %vm58, %v1104, 0
  %1107 = vmatprep.subr.mxu0 0.0
  %1108 = vmatpush1.msra.mxu0 %v53
  %1109 = vmatprep.subr.mxu0 0.0
  %1110 = vmatpush1.msra.mxu0 %v54
  %1111 = vmatprep.subr.mxu0 0.0
  %1112 = vmatpush1.msra.mxu0 %v55
  %1113 = vmatprep.subr.mxu0 0.0
  %1114 = vmatpush1.msra.mxu0 %v56
  %1115 = vmatprep.subr.mxu0 0.0
  %1116 = vmatpush1.msra.mxu0 0.0
  %1117 = vmatprep.subr.mxu0 0.0
  %1118 = vmatpush1.msra.mxu0 0.0
  %1119 = vmatprep.subr.mxu0 0.0
  %1120 = vmatpush1.msra.mxu0 0.0
  %1121 = vmatprep.subr.mxu0 0.0
  %1122 = vmatpush1.msra.mxu0 0.0
  %1123 = vmatprep.subr.mxu0 0.0
  %1124 = vmatpush1.msra.mxu0 0.0
  %1125 = vmatprep.subr.mxu0 0.0
  %1126 = vmatpush1.msra.mxu0 0.0
  %1127 = vmatprep.subr.mxu0 0.0
  %1128 = vmatpush1.msra.mxu0 0.0
  %1129 = vmatprep.subr.mxu0 0.0
  %1130 = vmatpush1.msra.mxu0 0.0
  %1131 = vmatprep.subr.mxu0 0.0
  %1132 = vmatpush1.msra.mxu0 0.0
  %1133 = vmatprep.subr.mxu0 0.0
  %1134 = vmatpush1.msra.mxu0 0.0
  %1135 = vmatprep.subr.mxu0 0.0
  %1136 = vmatpush1.msra.mxu0 0.0
  %1137 = vmatprep.subr.mxu0 0.0
  %1138 = vmatpush1.msra.mxu0 0.0
  %1139 = vmatprep.subr.mxu0 0.0
  %1140 = vmatpush1.msra.mxu0 0.0
  %1141 = vmatprep.subr.mxu0 0.0
  %1142 = vmatpush1.msra.mxu0 0.0
  %1143 = vmatprep.subr.mxu0 0.0
  %1144 = vmatpush1.msra.mxu0 0.0
  %1145 = vmatprep.subr.mxu0 0.0
  %1146 = vmatpush1.msra.mxu0 0.0
  %1147 = vmatprep.subr.mxu0 0.0
  %1148 = vmatpush1.msra.mxu0 0.0
  %1149 = vmatprep.subr.mxu0 0.0
  %1150 = vmatpush1.msra.mxu0 0.0
  %1151 = vmatprep.subr.mxu0 0.0
  %1152 = vmatpush1.msra.mxu0 0.0
  %1153 = vmatprep.subr.mxu0 0.0
  %1154 = vmatpush1.msra.mxu0 0.0
  %1155 = vmatprep.subr.mxu0 0.0
  %1156 = vmatpush1.msra.mxu0 0.0
  %1157 = vmatprep.subr.mxu0 0.0
  %1158 = vmatpush1.msra.mxu0 0.0
  %1159 = vmatprep.subr.mxu0 0.0
  %1160 = vmatpush1.msra.mxu0 0.0
  %1161 = vmatprep.subr.mxu0 0.0
  %1162 = vmatpush1.msra.mxu0 0.0
  %1163 = vmatprep.subr.mxu0 0.0
  %1164 = vmatpush1.msra.mxu0 0.0
  %1165 = vmatprep.subr.mxu0 0.0
  %1166 = vmatpush1.msra.mxu0 0.0
  %1167 = vmatprep.subr.mxu0 0.0
  %1168 = vmatpush1.msra.mxu0 0.0
  %1169 = vmatprep.subr.mxu0 0.0
  %1170 = vmatpush1.msra.mxu0 0.0
  %1171 = vmatprep.mubr.f32.mxu0 0.0
  %1172 = vmatmul.mubr.f32.gmra.mrb[0].mxu0 %v1105
  %v1173 = vpop.f32.mrb[0].mxu0
  %v1174 = vadd.f32 0.0, %v1173
  %v1175 = vpop.f32.mrb[0].mxu0
  %1176 = vdwg.mxu0
  %v1178 = vsel %vm132, %v50, 0
  %1180 = vmatprep.subr.mxu0 0.0
  %1181 = vmatpush1.msra.mxu0 %v52
  %1182 = vmatprep.subr.mxu0 0.0
  %1183 = vmatpush1.msra.mxu0 0.0
  %1184 = vmatprep.subr.mxu0 0.0
  %1185 = vmatpush1.msra.mxu0 0.0
  %1186 = vmatprep.subr.mxu0 0.0
  %1187 = vmatpush1.msra.mxu0 0.0
  %1188 = vmatprep.subr.mxu0 0.0
  %1189 = vmatpush1.msra.mxu0 0.0
  %1190 = vmatprep.subr.mxu0 0.0
  %1191 = vmatpush1.msra.mxu0 0.0
  %1192 = vmatprep.subr.mxu0 0.0
  %1193 = vmatpush1.msra.mxu0 0.0
  %1194 = vmatprep.subr.mxu0 0.0
  %1195 = vmatpush1.msra.mxu0 0.0
  %1196 = vmatprep.subr.mxu0 0.0
  %1197 = vmatpush1.msra.mxu0 0.0
  %1198 = vmatprep.subr.mxu0 0.0
  %1199 = vmatpush1.msra.mxu0 0.0
  %1200 = vmatprep.subr.mxu0 0.0
  %1201 = vmatpush1.msra.mxu0 0.0
  %1202 = vmatprep.subr.mxu0 0.0
  %1203 = vmatpush1.msra.mxu0 0.0
  %1204 = vmatprep.subr.mxu0 0.0
  %1205 = vmatpush1.msra.mxu0 0.0
  %1206 = vmatprep.subr.mxu0 0.0
  %1207 = vmatpush1.msra.mxu0 0.0
  %1208 = vmatprep.subr.mxu0 0.0
  %1209 = vmatpush1.msra.mxu0 0.0
  %1210 = vmatprep.subr.mxu0 0.0
  %1211 = vmatpush1.msra.mxu0 0.0
  %1212 = vmatprep.subr.mxu0 0.0
  %1213 = vmatpush1.msra.mxu0 0.0
  %1214 = vmatprep.subr.mxu0 0.0
  %1215 = vmatpush1.msra.mxu0 0.0
  %1216 = vmatprep.subr.mxu0 0.0
  %1217 = vmatpush1.msra.mxu0 0.0
  %1218 = vmatprep.subr.mxu0 0.0
  %1219 = vmatpush1.msra.mxu0 0.0
  %1220 = vmatprep.subr.mxu0 0.0
  %1221 = vmatpush1.msra.mxu0 0.0
  %1222 = vmatprep.subr.mxu0 0.0
  %1223 = vmatpush1.msra.mxu0 0.0
  %1224 = vmatprep.subr.mxu0 0.0
  %1225 = vmatpush1.msra.mxu0 0.0
  %1226 = vmatprep.subr.mxu0 0.0
  %1227 = vmatpush1.msra.mxu0 0.0
  %1228 = vmatprep.subr.mxu0 0.0
  %1229 = vmatpush1.msra.mxu0 0.0
  %1230 = vmatprep.subr.mxu0 0.0
  %1231 = vmatpush1.msra.mxu0 0.0
  %1232 = vmatprep.subr.mxu0 0.0
  %1233 = vmatpush1.msra.mxu0 0.0
  %1234 = vmatprep.subr.mxu0 0.0
  %1235 = vmatpush1.msra.mxu0 0.0
  %1236 = vmatprep.subr.mxu0 0.0
  %1237 = vmatpush1.msra.mxu0 0.0
  %1238 = vmatprep.subr.mxu0 0.0
  %1239 = vmatpush1.msra.mxu0 0.0
  %1240 = vmatprep.subr.mxu0 0.0
  %1241 = vmatpush1.msra.mxu0 0.0
  %1242 = vmatprep.subr.mxu0 0.0
  %1243 = vmatpush1.msra.mxu0 0.0
  %1244 = vmatprep.mubr.f32.mxu0 0.0
  %1245 = vmatmul.mubr.f32.gmra.mrb[0].mxu0 %v1178
  %v1246 = vpop.f32.mrb[0].mxu0
  %v1247 = vadd.f32 %v1174, %v1246
  %v1248 = vpop.f32.mrb[0].mxu0
  %1249 = vdwg.mxu0
  %v1250 = vadd.f32 %v1247, %v210
  %v1251 = vxor.u32 %v1250, 2147483648
  %v1252 = vmul.f32 %v1251, 1.442695
  %v1253 = vpow.pop %v1252
  %v1254 = vadd.f32 %v1253, 1.0
  %v1255 = vrcp.pop %v1254
  %v1256 = vmul.f32 1.0, %v1255
  %v1257 = vtanh.pop %v1250
  %v1258 = vmul.f32 %v1256, %v1095
  %1260 = vrot.lane.b32.xlu0 %v1257, 64
  %v1261 = vpop.permute.xlu0 %1260
  %v1263 = vmul.f32 %v1256, %v1261
  %1265 = vrot.lane.b32.xlu0 %v1263, 32
  %v1266 = vpop.permute.xlu0 %1265
  %v1268 = vadd.f32 %v1258, %v1266
  %v1269 = vtanh.pop %v1268
  %1271 = vrot.lane.b32.xlu0 %v1269, 64
  %v1272 = vpop.permute.xlu0 %1271
  %v1274 = vmul.f32 %v1256, %v1272
  %1276 = vrot.lane.b32.xlu0 %v1274, 32
  %v1277 = vpop.permute.xlu0 %1276
  %v1278 = vsel %vm58, %v1277, 0
  %1280 = vmatprep.subr.mxu0 0.0
  %1281 = vmatpush1.msra.mxu0 %v53
  %1282 = vmatprep.subr.mxu0 0.0
  %1283 = vmatpush1.msra.mxu0 %v54
  %1284 = vmatprep.subr.mxu0 0.0
  %1285 = vmatpush1.msra.mxu0 %v55
  %1286 = vmatprep.subr.mxu0 0.0
  %1287 = vmatpush1.msra.mxu0 %v56
  %1288 = vmatprep.subr.mxu0 0.0
  %1289 = vmatpush1.msra.mxu0 0.0
  %1290 = vmatprep.subr.mxu0 0.0
  %1291 = vmatpush1.msra.mxu0 0.0
  %1292 = vmatprep.subr.mxu0 0.0
  %1293 = vmatpush1.msra.mxu0 0.0
  %1294 = vmatprep.subr.mxu0 0.0
  %1295 = vmatpush1.msra.mxu0 0.0
  %1296 = vmatprep.subr.mxu0 0.0
  %1297 = vmatpush1.msra.mxu0 0.0
  %1298 = vmatprep.subr.mxu0 0.0
  %1299 = vmatpush1.msra.mxu0 0.0
  %1300 = vmatprep.subr.mxu0 0.0
  %1301 = vmatpush1.msra.mxu0 0.0
  %1302 = vmatprep.subr.mxu0 0.0
  %1303 = vmatpush1.msra.mxu0 0.0
  %1304 = vmatprep.subr.mxu0 0.0
  %1305 = vmatpush1.msra.mxu0 0.0
  %1306 = vmatprep.subr.mxu0 0.0
  %1307 = vmatpush1.msra.mxu0 0.0
  %1308 = vmatprep.subr.mxu0 0.0
  %1309 = vmatpush1.msra.mxu0 0.0
  %1310 = vmatprep.subr.mxu0 0.0
  %1311 = vmatpush1.msra.mxu0 0.0
  %1312 = vmatprep.subr.mxu0 0.0
  %1313 = vmatpush1.msra.mxu0 0.0
  %1314 = vmatprep.subr.mxu0 0.0
  %1315 = vmatpush1.msra.mxu0 0.0
  %1316 = vmatprep.subr.mxu0 0.0
  %1317 = vmatpush1.msra.mxu0 0.0
  %1318 = vmatprep.subr.mxu0 0.0
  %1319 = vmatpush1.msra.mxu0 0.0
  %1320 = vmatprep.subr.mxu0 0.0
  %1321 = vmatpush1.msra.mxu0 0.0
  %1322 = vmatprep.subr.mxu0 0.0
  %1323 = vmatpush1.msra.mxu0 0.0
  %1324 = vmatprep.subr.mxu0 0.0
  %1325 = vmatpush1.msra.mxu0 0.0
  %1326 = vmatprep.subr.mxu0 0.0
  %1327 = vmatpush1.msra.mxu0 0.0
  %1328 = vmatprep.subr.mxu0 0.0
  %1329 = vmatpush1.msra.mxu0 0.0
  %1330 = vmatprep.subr.mxu0 0.0
  %1331 = vmatpush1.msra.mxu0 0.0
  %1332 = vmatprep.subr.mxu0 0.0
  %1333 = vmatpush1.msra.mxu0 0.0
  %1334 = vmatprep.subr.mxu0 0.0
  %1335 = vmatpush1.msra.mxu0 0.0
  %1336 = vmatprep.subr.mxu0 0.0
  %1337 = vmatpush1.msra.mxu0 0.0
  %1338 = vmatprep.subr.mxu0 0.0
  %1339 = vmatpush1.msra.mxu0 0.0
  %1340 = vmatprep.subr.mxu0 0.0
  %1341 = vmatpush1.msra.mxu0 0.0
  %1342 = vmatprep.subr.mxu0 0.0
  %1343 = vmatpush1.msra.mxu0 0.0
  %1344 = vmatprep.mubr.f32.mxu0 0.0
  %1345 = vmatmul.mubr.f32.gmra.mrb[0].mxu0 %v1278
  %v1346 = vpop.f32.mrb[0].mxu0
  %v1347 = vadd.f32 0.0, %v1346
  %v1348 = vpop.f32.mrb[0].mxu0
  %1349 = vdwg.mxu0
  %v1351 = vsel %vm132, %v51, 0
  %1353 = vmatprep.subr.mxu0 0.0
  %1354 = vmatpush1.msra.mxu0 %v52
  %1355 = vmatprep.subr.mxu0 0.0
  %1356 = vmatpush1.msra.mxu0 0.0
  %1357 = vmatprep.subr.mxu0 0.0
  %1358 = vmatpush1.msra.mxu0 0.0
  %1359 = vmatprep.subr.mxu0 0.0
  %1360 = vmatpush1.msra.mxu0 0.0
  %1361 = vmatprep.subr.mxu0 0.0
  %1362 = vmatpush1.msra.mxu0 0.0
  %1363 = vmatprep.subr.mxu0 0.0
  %1364 = vmatpush1.msra.mxu0 0.0
  %1365 = vmatprep.subr.mxu0 0.0
  %1366 = vmatpush1.msra.mxu0 0.0
  %1367 = vmatprep.subr.mxu0 0.0
  %1368 = vmatpush1.msra.mxu0 0.0
  %1369 = vmatprep.subr.mxu0 0.0
  %1370 = vmatpush1.msra.mxu0 0.0
  %1371 = vmatprep.subr.mxu0 0.0
  %1372 = vmatpush1.msra.mxu0 0.0
  %1373 = vmatprep.subr.mxu0 0.0
  %1374 = vmatpush1.msra.mxu0 0.0
  %1375 = vmatprep.subr.mxu0 0.0
  %1376 = vmatpush1.msra.mxu0 0.0
  %1377 = vmatprep.subr.mxu0 0.0
  %1378 = vmatpush1.msra.mxu0 0.0
  %1379 = vmatprep.subr.mxu0 0.0
  %1380 = vmatpush1.msra.mxu0 0.0
  %1381 = vmatprep.subr.mxu0 0.0
  %1382 = vmatpush1.msra.mxu0 0.0
  %1383 = vmatprep.subr.mxu0 0.0
  %1384 = vmatpush1.msra.mxu0 0.0
  %1385 = vmatprep.subr.mxu0 0.0
  %1386 = vmatpush1.msra.mxu0 0.0
  %1387 = vmatprep.subr.mxu0 0.0
  %1388 = vmatpush1.msra.mxu0 0.0
  %1389 = vmatprep.subr.mxu0 0.0
  %1390 = vmatpush1.msra.mxu0 0.0
  %1391 = vmatprep.subr.mxu0 0.0
  %1392 = vmatpush1.msra.mxu0 0.0
  %1393 = vmatprep.subr.mxu0 0.0
  %1394 = vmatpush1.msra.mxu0 0.0
  %1395 = vmatprep.subr.mxu0 0.0
  %1396 = vmatpush1.msra.mxu0 0.0
  %1397 = vmatprep.subr.mxu0 0.0
  %1398 = vmatpush1.msra.mxu0 0.0
  %1399 = vmatprep.subr.mxu0 0.0
  %1400 = vmatpush1.msra.mxu0 0.0
  %1401 = vmatprep.subr.mxu0 0.0
  %1402 = vmatpush1.msra.mxu0 0.0
  %1403 = vmatprep.subr.mxu0 0.0
  %1404 = vmatpush1.msra.mxu0 0.0
  %1405 = vmatprep.subr.mxu0 0.0
  %1406 = vmatpush1.msra.mxu0 0.0
  %1407 = vmatprep.subr.mxu0 0.0
  %1408 = vmatpush1.msra.mxu0 0.0
  %1409 = vmatprep.subr.mxu0 0.0
  %1410 = vmatpush1.msra.mxu0 0.0
  %1411 = vmatprep.subr.mxu0 0.0
  %1412 = vmatpush1.msra.mxu0 0.0
  %1413 = vmatprep.subr.mxu0 0.0
  %1414 = vmatpush1.msra.mxu0 0.0
  %1415 = vmatprep.subr.mxu0 0.0
  %1416 = vmatpush1.msra.mxu0 0.0
  %1417 = vmatprep.mubr.f32.mxu0 0.0
  %1418 = vmatmul.mubr.f32.gmra.mrb[0].mxu0 %v1351
  %v1419 = vpop.f32.mrb[0].mxu0
  %v1420 = vadd.f32 %v1347, %v1419
  %v1421 = vpop.f32.mrb[0].mxu0
  %1422 = vdwg.mxu0
  %v1423 = vadd.f32 %v1420, %v210
  %v1424 = vxor.u32 %v1423, 2147483648
  %v1425 = vmul.f32 %v1424, 1.442695
  %v1426 = vpow.pop %v1425
  %v1427 = vadd.f32 %v1426, 1.0
  %v1428 = vrcp.pop %v1427
  %v1429 = vmul.f32 1.0, %v1428
  %v1430 = vtanh.pop %v1423
  %v1431 = vmul.f32 %v1429, %v1268
  %1433 = vrot.lane.b32.xlu0 %v1430, 64
  %v1434 = vpop.permute.xlu0 %1433
  %v1436 = vmul.f32 %v1429, %v1434
  %1438 = vrot.lane.b32.xlu0 %v1436, 32
  %v1439 = vpop.permute.xlu0 %1438
  %v1441 = vadd.f32 %v1431, %v1439
  %v1442 = vtanh.pop %v1441
  %1444 = vrot.lane.b32.xlu0 %v1442, 64
  %v1445 = vpop.permute.xlu0 %1444
  %v1447 = vmul.f32 %v1429, %v1445
  %v1448 = vld [vmem:[%s4] sm:$0xff]
  %v1449 = vld [vmem:[%s4 + $0x8] sm:$0xff]
  %v1450 = vld [vmem:[%s4 + $0x10] sm:$0xff]
  %v1451 = vld [vmem:[%s4 + $0x18] sm:$0xff]
  %v1452 = vld [vmem:[%s5] sm:$0xff]
  %v1453 = vld [vmem:[%s5 + $0x8] sm:$0xff]
  %v1454 = vld [vmem:[%s5 + $0x10] sm:$0xff]
  %v1455 = vld [vmem:[%s5 + $0x18] sm:$0xff]
  %v1456 = vld [vmem:[%s6] sm:$0x1]
  %1457 = vmatprep.subr.mxu0 0.0
  %1458 = vmatpush1.msra.mxu0 %v1452
  %1459 = vmatprep.subr.mxu0 0.0
  %1460 = vmatpush1.msra.mxu0 %v1453
  %1461 = vmatprep.subr.mxu0 0.0
  %1462 = vmatpush1.msra.mxu0 %v1454
  %1463 = vmatprep.subr.mxu0 0.0
  %1464 = vmatpush1.msra.mxu0 %v1455
  %1465 = vmatprep.subr.mxu0 0.0
  %1466 = vmatpush1.msra.mxu0 0.0
  %1467 = vmatprep.subr.mxu0 0.0
  %1468 = vmatpush1.msra.mxu0 0.0
  %1469 = vmatprep.subr.mxu0 0.0
  %1470 = vmatpush1.msra.mxu0 0.0
  %1471 = vmatprep.subr.mxu0 0.0
  %1472 = vmatpush1.msra.mxu0 0.0
  %1473 = vmatprep.subr.mxu0 0.0
  %1474 = vmatpush1.msra.mxu0 0.0
  %1475 = vmatprep.subr.mxu0 0.0
  %1476 = vmatpush1.msra.mxu0 0.0
  %1477 = vmatprep.subr.mxu0 0.0
  %1478 = vmatpush1.msra.mxu0 0.0
  %1479 = vmatprep.subr.mxu0 0.0
  %1480 = vmatpush1.msra.mxu0 0.0
  %1481 = vmatprep.subr.mxu0 0.0
  %1482 = vmatpush1.msra.mxu0 0.0
  %1483 = vmatprep.subr.mxu0 0.0
  %1484 = vmatpush1.msra.mxu0 0.0
  %1485 = vmatprep.subr.mxu0 0.0
  %1486 = vmatpush1.msra.mxu0 0.0
  %1487 = vmatprep.subr.mxu0 0.0
  %1488 = vmatpush1.msra.mxu0 0.0
  %1489 = vmatprep.subr.mxu0 0.0
  %1490 = vmatpush1.msra.mxu0 0.0
  %1491 = vmatprep.subr.mxu0 0.0
  %1492 = vmatpush1.msra.mxu0 0.0
  %1493 = vmatprep.subr.mxu0 0.0
  %1494 = vmatpush1.msra.mxu0 0.0
  %1495 = vmatprep.subr.mxu0 0.0
  %1496 = vmatpush1.msra.mxu0 0.0
  %1497 = vmatprep.subr.mxu0 0.0
  %1498 = vmatpush1.msra.mxu0 0.0
  %1499 = vmatprep.subr.mxu0 0.0
  %1500 = vmatpush1.msra.mxu0 0.0
  %1501 = vmatprep.subr.mxu0 0.0
  %1502 = vmatpush1.msra.mxu0 0.0
  %1503 = vmatprep.subr.mxu0 0.0
  %1504 = vmatpush1.msra.mxu0 0.0
  %1505 = vmatprep.subr.mxu0 0.0
  %1506 = vmatpush1.msra.mxu0 0.0
  %1507 = vmatprep.subr.mxu0 0.0
  %1508 = vmatpush1.msra.mxu0 0.0
  %1509 = vmatprep.subr.mxu0 0.0
  %1510 = vmatpush1.msra.mxu0 0.0
  %1511 = vmatprep.subr.mxu0 0.0
  %1512 = vmatpush1.msra.mxu0 0.0
  %1513 = vmatprep.subr.mxu0 0.0
  %1514 = vmatpush1.msra.mxu0 0.0
  %1515 = vmatprep.subr.mxu0 0.0
  %1516 = vmatpush1.msra.mxu0 0.0
  %1517 = vmatprep.subr.mxu0 0.0
  %1518 = vmatpush1.msra.mxu0 0.0
  %1519 = vmatprep.subr.mxu0 0.0
  %1520 = vmatpush1.msra.mxu0 0.0
  %1521 = vmatprep.mubr.f32.mxu0 0.0
  %1522 = vmatmul.mubr.f32.gmra.mrb[0].mxu0 %v60
  %v1523 = vpop.f32.mrb[0].mxu0
  %v1524 = vadd.f32 0.0, %v1523
  %v1525 = vpop.f32.mrb[0].mxu0
  %1526 = vdwg.mxu0
  %1527 = vmatprep.subr.mxu0 0.0
  %1528 = vmatpush1.msra.mxu0 %v1448
  %1529 = vmatprep.subr.mxu0 0.0
  %1530 = vmatpush1.msra.mxu0 %v1449
  %1531 = vmatprep.subr.mxu0 0.0
  %1532 = vmatpush1.msra.mxu0 %v1450
  %1533 = vmatprep.subr.mxu0 0.0
  %1534 = vmatpush1.msra.mxu0 %v1451
  %1535 = vmatprep.subr.mxu0 0.0
  %1536 = vmatpush1.msra.mxu0 0.0
  %1537 = vmatprep.subr.mxu0 0.0
  %1538 = vmatpush1.msra.mxu0 0.0
  %1539 = vmatprep.subr.mxu0 0.0
  %1540 = vmatpush1.msra.mxu0 0.0
  %1541 = vmatprep.subr.mxu0 0.0
  %1542 = vmatpush1.msra.mxu0 0.0
  %1543 = vmatprep.subr.mxu0 0.0
  %1544 = vmatpush1.msra.mxu0 0.0
  %1545 = vmatprep.subr.mxu0 0.0
  %1546 = vmatpush1.msra.mxu0 0.0
  %1547 = vmatprep.subr.mxu0 0.0
  %1548 = vmatpush1.msra.mxu0 0.0
  %1549 = vmatprep.subr.mxu0 0.0
  %1550 = vmatpush1.msra.mxu0 0.0
  %1551 = vmatprep.subr.mxu0 0.0
  %1552 = vmatpush1.msra.mxu0 0.0
  %1553 = vmatprep.subr.mxu0 0.0
  %1554 = vmatpush1.msra.mxu0 0.0
  %1555 = vmatprep.subr.mxu0 0.0
  %1556 = vmatpush1.msra.mxu0 0.0
  %1557 = vmatprep.subr.mxu0 0.0
  %1558 = vmatpush1.msra.mxu0 0.0
  %1559 = vmatprep.subr.mxu0 0.0
  %1560 = vmatpush1.msra.mxu0 0.0
  %1561 = vmatprep.subr.mxu0 0.0
  %1562 = vmatpush1.msra.mxu0 0.0
  %1563 = vmatprep.subr.mxu0 0.0
  %1564 = vmatpush1.msra.mxu0 0.0
  %1565 = vmatprep.subr.mxu0 0.0
  %1566 = vmatpush1.msra.mxu0 0.0
  %1567 = vmatprep.subr.mxu0 0.0
  %1568 = vmatpush1.msra.mxu0 0.0
  %1569 = vmatprep.subr.mxu0 0.0
  %1570 = vmatpush1.msra.mxu0 0.0
  %1571 = vmatprep.subr.mxu0 0.0
  %1572 = vmatpush1.msra.mxu0 0.0
  %1573 = vmatprep.subr.mxu0 0.0
  %1574 = vmatpush1.msra.mxu0 0.0
  %1575 = vmatprep.subr.mxu0 0.0
  %1576 = vmatpush1.msra.mxu0 0.0
  %1577 = vmatprep.subr.mxu0 0.0
  %1578 = vmatpush1.msra.mxu0 0.0
  %1579 = vmatprep.subr.mxu0 0.0
  %1580 = vmatpush1.msra.mxu0 0.0
  %1581 = vmatprep.subr.mxu0 0.0
  %1582 = vmatpush1.msra.mxu0 0.0
  %1583 = vmatprep.subr.mxu0 0.0
  %1584 = vmatpush1.msra.mxu0 0.0
  %1585 = vmatprep.subr.mxu0 0.0
  %1586 = vmatpush1.msra.mxu0 0.0
  %1587 = vmatprep.subr.mxu0 0.0
  %1588 = vmatpush1.msra.mxu0 0.0
  %1589 = vmatprep.subr.mxu0 0.0
  %1590 = vmatpush1.msra.mxu0 0.0
  %1591 = vmatprep.mubr.f32.mxu0 0.0
  %1592 = vmatmul.mubr.f32.gmra.mrb[0].mxu0 %v240
  %v1593 = vpop.f32.mrb[0].mxu0
  %v1594 = vadd.f32 %v1524, %v1593
  %v1595 = vpop.f32.mrb[0].mxu0
  %1596 = vdwg.mxu0
  %v1598 = vlaneseq
  %v1599 = vshrl.u32 %v1598, 7
  %v1600 = vsub.s32 0, %v1599
  %v1601 = vrot.slane %v1456, %v1600
  %v1603 = vadd.f32 %v1594, %v1601
  %v1604 = vxor.u32 %v1603, 2147483648
  %v1605 = vmul.f32 %v1604, 1.442695
  %v1606 = vpow.pop %v1605
  %v1607 = vadd.f32 %v1606, 1.0
  %v1608 = vrcp.pop %v1607
  %v1609 = vmul.f32 1.0, %v1608
  %v1610 = vtanh.pop %v1603
  %v1611 = vmul.f32 %v1609, 0.0
  %1613 = vrot.lane.b32.xlu0 %v1610, 64
  %v1614 = vpop.permute.xlu0 %1613
  %v1616 = vmul.f32 %v1609, %v1614
  %1618 = vrot.lane.b32.xlu0 %v1616, 32
  %v1619 = vpop.permute.xlu0 %1618
  %v1621 = vadd.f32 %v1611, %v1619
  %v1622 = vtanh.pop %v1621
  %1624 = vrot.lane.b32.xlu0 %v1622, 64
  %v1625 = vpop.permute.xlu0 %1624
  %v1627 = vmul.f32 %v1609, %v1625
  %1629 = vrot.lane.b32.xlu0 %v1627, 32
  %v1630 = vpop.permute.xlu0 %1629
  %v1631 = vsel %vm58, %v1630, 0
  %1633 = vmatprep.subr.mxu0 0.0
  %1634 = vmatpush1.msra.mxu0 %v1452
  %1635 = vmatprep.subr.mxu0 0.0
  %1636 = vmatpush1.msra.mxu0 %v1453
  %1637 = vmatprep.subr.mxu0 0.0
  %1638 = vmatpush1.msra.mxu0 %v1454
  %1639 = vmatprep.subr.mxu0 0.0
  %1640 = vmatpush1.msra.mxu0 %v1455
  %1641 = vmatprep.subr.mxu0 0.0
  %1642 = vmatpush1.msra.mxu0 0.0
  %1643 = vmatprep.subr.mxu0 0.0
  %1644 = vmatpush1.msra.mxu0 0.0
  %1645 = vmatprep.subr.mxu0 0.0
  %1646 = vmatpush1.msra.mxu0 0.0
  %1647 = vmatprep.subr.mxu0 0.0
  %1648 = vmatpush1.msra.mxu0 0.0
  %1649 = vmatprep.subr.mxu0 0.0
  %1650 = vmatpush1.msra.mxu0 0.0
  %1651 = vmatprep.subr.mxu0 0.0
  %1652 = vmatpush1.msra.mxu0 0.0
  %1653 = vmatprep.subr.mxu0 0.0
  %1654 = vmatpush1.msra.mxu0 0.0
  %1655 = vmatprep.subr.mxu0 0.0
  %1656 = vmatpush1.msra.mxu0 0.0
  %1657 = vmatprep.subr.mxu0 0.0
  %1658 = vmatpush1.msra.mxu0 0.0
  %1659 = vmatprep.subr.mxu0 0.0
  %1660 = vmatpush1.msra.mxu0 0.0
  %1661 = vmatprep.subr.mxu0 0.0
  %1662 = vmatpush1.msra.mxu0 0.0
  %1663 = vmatprep.subr.mxu0 0.0
  %1664 = vmatpush1.msra.mxu0 0.0
  %1665 = vmatprep.subr.mxu0 0.0
  %1666 = vmatpush1.msra.mxu0 0.0
  %1667 = vmatprep.subr.mxu0 0.0
  %1668 = vmatpush1.msra.mxu0 0.0
  %1669 = vmatprep.subr.mxu0 0.0
  %1670 = vmatpush1.msra.mxu0 0.0
  %1671 = vmatprep.subr.mxu0 0.0
  %1672 = vmatpush1.msra.mxu0 0.0
  %1673 = vmatprep.subr.mxu0 0.0
  %1674 = vmatpush1.msra.mxu0 0.0
  %1675 = vmatprep.subr.mxu0 0.0
  %1676 = vmatpush1.msra.mxu0 0.0
  %1677 = vmatprep.subr.mxu0 0.0
  %1678 = vmatpush1.msra.mxu0 0.0
  %1679 = vmatprep.subr.mxu0 0.0
  %1680 = vmatpush1.msra.mxu0 0.0
  %1681 = vmatprep.subr.mxu0 0.0
  %1682 = vmatpush1.msra.mxu0 0.0
  %1683 = vmatprep.subr.mxu0 0.0
  %1684 = vmatpush1.msra.mxu0 0.0
  %1685 = vmatprep.subr.mxu0 0.0
  %1686 = vmatpush1.msra.mxu0 0.0
  %1687 = vmatprep.subr.mxu0 0.0
  %1688 = vmatpush1.msra.mxu0 0.0
  %1689 = vmatprep.subr.mxu0 0.0
  %1690 = vmatpush1.msra.mxu0 0.0
  %1691 = vmatprep.subr.mxu0 0.0
  %1692 = vmatpush1.msra.mxu0 0.0
  %1693 = vmatprep.subr.mxu0 0.0
  %1694 = vmatpush1.msra.mxu0 0.0
  %1695 = vmatprep.subr.mxu0 0.0
  %1696 = vmatpush1.msra.mxu0 0.0
  %1697 = vmatprep.mubr.f32.mxu0 0.0
  %1698 = vmatmul.mubr.f32.gmra.mrb[0].mxu0 %v1631
  %v1699 = vpop.f32.mrb[0].mxu0
  %v1700 = vadd.f32 0.0, %v1699
  %v1701 = vpop.f32.mrb[0].mxu0
  %1702 = vdwg.mxu0
  %1703 = vmatprep.subr.mxu0 0.0
  %1704 = vmatpush1.msra.mxu0 %v1448
  %1705 = vmatprep.subr.mxu0 0.0
  %1706 = vmatpush1.msra.mxu0 %v1449
  %1707 = vmatprep.subr.mxu0 0.0
  %1708 = vmatpush1.msra.mxu0 %v1450
  %1709 = vmatprep.subr.mxu0 0.0
  %1710 = vmatpush1.msra.mxu0 %v1451
  %1711 = vmatprep.subr.mxu0 0.0
  %1712 = vmatpush1.msra.mxu0 0.0
  %1713 = vmatprep.subr.mxu0 0.0
  %1714 = vmatpush1.msra.mxu0 0.0
  %1715 = vmatprep.subr.mxu0 0.0
  %1716 = vmatpush1.msra.mxu0 0.0
  %1717 = vmatprep.subr.mxu0 0.0
  %1718 = vmatpush1.msra.mxu0 0.0
  %1719 = vmatprep.subr.mxu0 0.0
  %1720 = vmatpush1.msra.mxu0 0.0
  %1721 = vmatprep.subr.mxu0 0.0
  %1722 = vmatpush1.msra.mxu0 0.0
  %1723 = vmatprep.subr.mxu0 0.0
  %1724 = vmatpush1.msra.mxu0 0.0
  %1725 = vmatprep.subr.mxu0 0.0
  %1726 = vmatpush1.msra.mxu0 0.0
  %1727 = vmatprep.subr.mxu0 0.0
  %1728 = vmatpush1.msra.mxu0 0.0
  %1729 = vmatprep.subr.mxu0 0.0
  %1730 = vmatpush1.msra.mxu0 0.0
  %1731 = vmatprep.subr.mxu0 0.0
  %1732 = vmatpush1.msra.mxu0 0.0
  %1733 = vmatprep.subr.mxu0 0.0
  %1734 = vmatpush1.msra.mxu0 0.0
  %1735 = vmatprep.subr.mxu0 0.0
  %1736 = vmatpush1.msra.mxu0 0.0
  %1737 = vmatprep.subr.mxu0 0.0
  %1738 = vmatpush1.msra.mxu0 0.0
  %1739 = vmatprep.subr.mxu0 0.0
  %1740 = vmatpush1.msra.mxu0 0.0
  %1741 = vmatprep.subr.mxu0 0.0
  %1742 = vmatpush1.msra.mxu0 0.0
  %1743 = vmatprep.subr.mxu0 0.0
  %1744 = vmatpush1.msra.mxu0 0.0
  %1745 = vmatprep.subr.mxu0 0.0
  %1746 = vmatpush1.msra.mxu0 0.0
  %1747 = vmatprep.subr.mxu0 0.0
  %1748 = vmatpush1.msra.mxu0 0.0
  %1749 = vmatprep.subr.mxu0 0.0
  %1750 = vmatpush1.msra.mxu0 0.0
  %1751 = vmatprep.subr.mxu0 0.0
  %1752 = vmatpush1.msra.mxu0 0.0
  %1753 = vmatprep.subr.mxu0 0.0
  %1754 = vmatpush1.msra.mxu0 0.0
  %1755 = vmatprep.subr.mxu0 0.0
  %1756 = vmatpush1.msra.mxu0 0.0
  %1757 = vmatprep.subr.mxu0 0.0
  %1758 = vmatpush1.msra.mxu0 0.0
  %1759 = vmatprep.subr.mxu0 0.0
  %1760 = vmatpush1.msra.mxu0 0.0
  %1761 = vmatprep.subr.mxu0 0.0
  %1762 = vmatpush1.msra.mxu0 0.0
  %1763 = vmatprep.subr.mxu0 0.0
  %1764 = vmatpush1.msra.mxu0 0.0
  %1765 = vmatprep.subr.mxu0 0.0
  %1766 = vmatpush1.msra.mxu0 0.0
  %1767 = vmatprep.mubr.f32.mxu0 0.0
  %1768 = vmatmul.mubr.f32.gmra.mrb[0].mxu0 %v413
  %v1769 = vpop.f32.mrb[0].mxu0
  %v1770 = vadd.f32 %v1700, %v1769
  %v1771 = vpop.f32.mrb[0].mxu0
  %1772 = vdwg.mxu0
  %v1773 = vadd.f32 %v1770, %v1601
  %v1774 = vxor.u32 %v1773, 2147483648
  %v1775 = vmul.f32 %v1774, 1.442695
  %v1776 = vpow.pop %v1775
  %v1777 = vadd.f32 %v1776, 1.0
  %v1778 = vrcp.pop %v1777
  %v1779 = vmul.f32 1.0, %v1778
  %v1780 = vtanh.pop %v1773
  %v1781 = vmul.f32 %v1779, %v1621
  %1783 = vrot.lane.b32.xlu0 %v1780, 64
  %v1784 = vpop.permute.xlu0 %1783
  %v1786 = vmul.f32 %v1779, %v1784
  %1788 = vrot.lane.b32.xlu0 %v1786, 32
  %v1789 = vpop.permute.xlu0 %1788
  %v1791 = vadd.f32 %v1781, %v1789
  %v1792 = vtanh.pop %v1791
  %1794 = vrot.lane.b32.xlu0 %v1792, 64
  %v1795 = vpop.permute.xlu0 %1794
  %v1797 = vmul.f32 %v1779, %v1795
  %1799 = vrot.lane.b32.xlu0 %v1797, 32
  %v1800 = vpop.permute.xlu0 %1799
  %v1801 = vsel %vm58, %v1800, 0
  %1803 = vmatprep.subr.mxu0 0.0
  %1804 = vmatpush1.msra.mxu0 %v1452
  %1805 = vmatprep.subr.mxu0 0.0
  %1806 = vmatpush1.msra.mxu0 %v1453
  %1807 = vmatprep.subr.mxu0 0.0
  %1808 = vmatpush1.msra.mxu0 %v1454
  %1809 = vmatprep.subr.mxu0 0.0
  %1810 = vmatpush1.msra.mxu0 %v1455
  %1811 = vmatprep.subr.mxu0 0.0
  %1812 = vmatpush1.msra.mxu0 0.0
  %1813 = vmatprep.subr.mxu0 0.0
  %1814 = vmatpush1.msra.mxu0 0.0
  %1815 = vmatprep.subr.mxu0 0.0
  %1816 = vmatpush1.msra.mxu0 0.0
  %1817 = vmatprep.subr.mxu0 0.0
  %1818 = vmatpush1.msra.mxu0 0.0
  %1819 = vmatprep.subr.mxu0 0.0
  %1820 = vmatpush1.msra.mxu0 0.0
  %1821 = vmatprep.subr.mxu0 0.0
  %1822 = vmatpush1.msra.mxu0 0.0
  %1823 = vmatprep.subr.mxu0 0.0
  %1824 = vmatpush1.msra.mxu0 0.0
  %1825 = vmatprep.subr.mxu0 0.0
  %1826 = vmatpush1.msra.mxu0 0.0
  %1827 = vmatprep.subr.mxu0 0.0
  %1828 = vmatpush1.msra.mxu0 0.0
  %1829 = vmatprep.subr.mxu0 0.0
  %1830 = vmatpush1.msra.mxu0 0.0
  %1831 = vmatprep.subr.mxu0 0.0
  %1832 = vmatpush1.msra.mxu0 0.0
  %1833 = vmatprep.subr.mxu0 0.0
  %1834 = vmatpush1.msra.mxu0 0.0
  %1835 = vmatprep.subr.mxu0 0.0
  %1836 = vmatpush1.msra.mxu0 0.0
  %1837 = vmatprep.subr.mxu0 0.0
  %1838 = vmatpush1.msra.mxu0 0.0
  %1839 = vmatprep.subr.mxu0 0.0
  %1840 = vmatpush1.msra.mxu0 0.0
  %1841 = vmatprep.subr.mxu0 0.0
  %1842 = vmatpush1.msra.mxu0 0.0
  %1843 = vmatprep.subr.mxu0 0.0
  %1844 = vmatpush1.msra.mxu0 0.0
  %1845 = vmatprep.subr.mxu0 0.0
  %1846 = vmatpush1.msra.mxu0 0.0
  %1847 = vmatprep.subr.mxu0 0.0
  %1848 = vmatpush1.msra.mxu0 0.0
  %1849 = vmatprep.subr.mxu0 0.0
  %1850 = vmatpush1.msra.mxu0 0.0
  %1851 = vmatprep.subr.mxu0 0.0
  %1852 = vmatpush1.msra.mxu0 0.0
  %1853 = vmatprep.subr.mxu0 0.0
  %1854 = vmatpush1.msra.mxu0 0.0
  %1855 = vmatprep.subr.mxu0 0.0
  %1856 = vmatpush1.msra.mxu0 0.0
  %1857 = vmatprep.subr.mxu0 0.0
  %1858 = vmatpush1.msra.mxu0 0.0
  %1859 = vmatprep.subr.mxu0 0.0
  %1860 = vmatpush1.msra.mxu0 0.0
  %1861 = vmatprep.subr.mxu0 0.0
  %1862 = vmatpush1.msra.mxu0 0.0
  %1863 = vmatprep.subr.mxu0 0.0
  %1864 = vmatpush1.msra.mxu0 0.0
  %1865 = vmatprep.subr.mxu0 0.0
  %1866 = vmatpush1.msra.mxu0 0.0
  %1867 = vmatprep.mubr.f32.mxu0 0.0
  %1868 = vmatmul.mubr.f32.gmra.mrb[0].mxu0 %v1801
  %v1869 = vpop.f32.mrb[0].mxu0
  %v1870 = vadd.f32 0.0, %v1869
  %v1871 = vpop.f32.mrb[0].mxu0
  %1872 = vdwg.mxu0
  %1873 = vmatprep.subr.mxu0 0.0
  %1874 = vmatpush1.msra.mxu0 %v1448
  %1875 = vmatprep.subr.mxu0 0.0
  %1876 = vmatpush1.msra.mxu0 %v1449
  %1877 = vmatprep.subr.mxu0 0.0
  %1878 = vmatpush1.msra.mxu0 %v1450
  %1879 = vmatprep.subr.mxu0 0.0
  %1880 = vmatpush1.msra.mxu0 %v1451
  %1881 = vmatprep.subr.mxu0 0.0
  %1882 = vmatpush1.msra.mxu0 0.0
  %1883 = vmatprep.subr.mxu0 0.0
  %1884 = vmatpush1.msra.mxu0 0.0
  %1885 = vmatprep.subr.mxu0 0.0
  %1886 = vmatpush1.msra.mxu0 0.0
  %1887 = vmatprep.subr.mxu0 0.0
  %1888 = vmatpush1.msra.mxu0 0.0
  %1889 = vmatprep.subr.mxu0 0.0
  %1890 = vmatpush1.msra.mxu0 0.0
  %1891 = vmatprep.subr.mxu0 0.0
  %1892 = vmatpush1.msra.mxu0 0.0
  %1893 = vmatprep.subr.mxu0 0.0
  %1894 = vmatpush1.msra.mxu0 0.0
  %1895 = vmatprep.subr.mxu0 0.0
  %1896 = vmatpush1.msra.mxu0 0.0
  %1897 = vmatprep.subr.mxu0 0.0
  %1898 = vmatpush1.msra.mxu0 0.0
  %1899 = vmatprep.subr.mxu0 0.0
  %1900 = vmatpush1.msra.mxu0 0.0
  %1901 = vmatprep.subr.mxu0 0.0
  %1902 = vmatpush1.msra.mxu0 0.0
  %1903 = vmatprep.subr.mxu0 0.0
  %1904 = vmatpush1.msra.mxu0 0.0
  %1905 = vmatprep.subr.mxu0 0.0
  %1906 = vmatpush1.msra.mxu0 0.0
  %1907 = vmatprep.subr.mxu0 0.0
  %1908 = vmatpush1.msra.mxu0 0.0
  %1909 = vmatprep.subr.mxu0 0.0
  %1910 = vmatpush1.msra.mxu0 0.0
  %1911 = vmatprep.subr.mxu0 0.0
  %1912 = vmatpush1.msra.mxu0 0.0
  %1913 = vmatprep.subr.mxu0 0.0
  %1914 = vmatpush1.msra.mxu0 0.0
  %1915 = vmatprep.subr.mxu0 0.0
  %1916 = vmatpush1.msra.mxu0 0.0
  %1917 = vmatprep.subr.mxu0 0.0
  %1918 = vmatpush1.msra.mxu0 0.0
  %1919 = vmatprep.subr.mxu0 0.0
  %1920 = vmatpush1.msra.mxu0 0.0
  %1921 = vmatprep.subr.mxu0 0.0
  %1922 = vmatpush1.msra.mxu0 0.0
  %1923 = vmatprep.subr.mxu0 0.0
  %1924 = vmatpush1.msra.mxu0 0.0
  %1925 = vmatprep.subr.mxu0 0.0
  %1926 = vmatpush1.msra.mxu0 0.0
  %1927 = vmatprep.subr.mxu0 0.0
  %1928 = vmatpush1.msra.mxu0 0.0
  %1929 = vmatprep.subr.mxu0 0.0
  %1930 = vmatpush1.msra.mxu0 0.0
  %1931 = vmatprep.subr.mxu0 0.0
  %1932 = vmatpush1.msra.mxu0 0.0
  %1933 = vmatprep.subr.mxu0 0.0
  %1934 = vmatpush1.msra.mxu0 0.0
  %1935 = vmatprep.subr.mxu0 0.0
  %1936 = vmatpush1.msra.mxu0 0.0
  %1937 = vmatprep.mubr.f32.mxu0 0.0
  %1938 = vmatmul.mubr.f32.gmra.mrb[0].mxu0 %v586
  %v1939 = vpop.f32.mrb[0].mxu0
  %v1940 = vadd.f32 %v1870, %v1939
  %v1941 = vpop.f32.mrb[0].mxu0
  %1942 = vdwg.mxu0
  %v1943 = vadd.f32 %v1940, %v1601
  %v1944 = vxor.u32 %v1943, 2147483648
  %v1945 = vmul.f32 %v1944, 1.442695
  %v1946 = vpow.pop %v1945
  %v1947 = vadd.f32 %v1946, 1.0
  %v1948 = vrcp.pop %v1947
  %v1949 = vmul.f32 1.0, %v1948
  %v1950 = vtanh.pop %v1943
  %v1951 = vmul.f32 %v1949, %v1791
  %1953 = vrot.lane.b32.xlu0 %v1950, 64
  %v1954 = vpop.permute.xlu0 %1953
  %v1956 = vmul.f32 %v1949, %v1954
  %1958 = vrot.lane.b32.xlu0 %v1956, 32
  %v1959 = vpop.permute.xlu0 %1958
  %v1961 = vadd.f32 %v1951, %v1959
  %v1962 = vtanh.pop %v1961
  %1964 = vrot.lane.b32.xlu0 %v1962, 64
  %v1965 = vpop.permute.xlu0 %1964
  %v1967 = vmul.f32 %v1949, %v1965
  %1969 = vrot.lane.b32.xlu0 %v1967, 32
  %v1970 = vpop.permute.xlu0 %1969
  %v1971 = vsel %vm58, %v1970, 0
  %1973 = vmatprep.subr.mxu0 0.0
  %1974 = vmatpush1.msra.mxu0 %v1452
  %1975 = vmatprep.subr.mxu0 0.0
  %1976 = vmatpush1.msra.mxu0 %v1453
  %1977 = vmatprep.subr.mxu0 0.0
  %1978 = vmatpush1.msra.mxu0 %v1454
  %1979 = vmatprep.subr.mxu0 0.0
  %1980 = vmatpush1.msra.mxu0 %v1455
  %1981 = vmatprep.subr.mxu0 0.0
  %1982 = vmatpush1.msra.mxu0 0.0
  %1983 = vmatprep.subr.mxu0 0.0
  %1984 = vmatpush1.msra.mxu0 0.0
  %1985 = vmatprep.subr.mxu0 0.0
  %1986 = vmatpush1.msra.mxu0 0.0
  %1987 = vmatprep.subr.mxu0 0.0
  %1988 = vmatpush1.msra.mxu0 0.0
  %1989 = vmatprep.subr.mxu0 0.0
  %1990 = vmatpush1.msra.mxu0 0.0
  %1991 = vmatprep.subr.mxu0 0.0
  %1992 = vmatpush1.msra.mxu0 0.0
  %1993 = vmatprep.subr.mxu0 0.0
  %1994 = vmatpush1.msra.mxu0 0.0
  %1995 = vmatprep.subr.mxu0 0.0
  %1996 = vmatpush1.msra.mxu0 0.0
  %1997 = vmatprep.subr.mxu0 0.0
  %1998 = vmatpush1.msra.mxu0 0.0
  %1999 = vmatprep.subr.mxu0 0.0
  %2000 = vmatpush1.msra.mxu0 0.0
  %2001 = vmatprep.subr.mxu0 0.0
  %2002 = vmatpush1.msra.mxu0 0.0
  %2003 = vmatprep.subr.mxu0 0.0
  %2004 = vmatpush1.msra.mxu0 0.0
  %2005 = vmatprep.subr.mxu0 0.0
  %2006 = vmatpush1.msra.mxu0 0.0
  %2007 = vmatprep.subr.mxu0 0.0
  %2008 = vmatpush1.msra.mxu0 0.0
  %2009 = vmatprep.subr.mxu0 0.0
  %2010 = vmatpush1.msra.mxu0 0.0
  %2011 = vmatprep.subr.mxu0 0.0
  %2012 = vmatpush1.msra.mxu0 0.0
  %2013 = vmatprep.subr.mxu0 0.0
  %2014 = vmatpush1.msra.mxu0 0.0
  %2015 = vmatprep.subr.mxu0 0.0
  %2016 = vmatpush1.msra.mxu0 0.0
  %2017 = vmatprep.subr.mxu0 0.0
  %2018 = vmatpush1.msra.mxu0 0.0
  %2019 = vmatprep.subr.mxu0 0.0
  %2020 = vmatpush1.msra.mxu0 0.0
  %2021 = vmatprep.subr.mxu0 0.0
  %2022 = vmatpush1.msra.mxu0 0.0
  %2023 = vmatprep.subr.mxu0 0.0
  %2024 = vmatpush1.msra.mxu0 0.0
  %2025 = vmatprep.subr.mxu0 0.0
  %2026 = vmatpush1.msra.mxu0 0.0
  %2027 = vmatprep.subr.mxu0 0.0
  %2028 = vmatpush1.msra.mxu0 0.0
  %2029 = vmatprep.subr.mxu0 0.0
  %2030 = vmatpush1.msra.mxu0 0.0
  %2031 = vmatprep.subr.mxu0 0.0
  %2032 = vmatpush1.msra.mxu0 0.0
  %2033 = vmatprep.subr.mxu0 0.0
  %2034 = vmatpush1.msra.mxu0 0.0
  %2035 = vmatprep.subr.mxu0 0.0
  %2036 = vmatpush1.msra.mxu0 0.0
  %2037 = vmatprep.mubr.f32.mxu0 0.0
  %2038 = vmatmul.mubr.f32.gmra.mrb[0].mxu0 %v1971
  %v2039 = vpop.f32.mrb[0].mxu0
  %v2040 = vadd.f32 0.0, %v2039
  %v2041 = vpop.f32.mrb[0].mxu0
  %2042 = vdwg.mxu0
  %2043 = vmatprep.subr.mxu0 0.0
  %2044 = vmatpush1.msra.mxu0 %v1448
  %2045 = vmatprep.subr.mxu0 0.0
  %2046 = vmatpush1.msra.mxu0 %v1449
  %2047 = vmatprep.subr.mxu0 0.0
  %2048 = vmatpush1.msra.mxu0 %v1450
  %2049 = vmatprep.subr.mxu0 0.0
  %2050 = vmatpush1.msra.mxu0 %v1451
  %2051 = vmatprep.subr.mxu0 0.0
  %2052 = vmatpush1.msra.mxu0 0.0
  %2053 = vmatprep.subr.mxu0 0.0
  %2054 = vmatpush1.msra.mxu0 0.0
  %2055 = vmatprep.subr.mxu0 0.0
  %2056 = vmatpush1.msra.mxu0 0.0
  %2057 = vmatprep.subr.mxu0 0.0
  %2058 = vmatpush1.msra.mxu0 0.0
  %2059 = vmatprep.subr.mxu0 0.0
  %2060 = vmatpush1.msra.mxu0 0.0
  %2061 = vmatprep.subr.mxu0 0.0
  %2062 = vmatpush1.msra.mxu0 0.0
  %2063 = vmatprep.subr.mxu0 0.0
  %2064 = vmatpush1.msra.mxu0 0.0
  %2065 = vmatprep.subr.mxu0 0.0
  %2066 = vmatpush1.msra.mxu0 0.0
  %2067 = vmatprep.subr.mxu0 0.0
  %2068 = vmatpush1.msra.mxu0 0.0
  %2069 = vmatprep.subr.mxu0 0.0
  %2070 = vmatpush1.msra.mxu0 0.0
  %2071 = vmatprep.subr.mxu0 0.0
  %2072 = vmatpush1.msra.mxu0 0.0
  %2073 = vmatprep.subr.mxu0 0.0
  %2074 = vmatpush1.msra.mxu0 0.0
  %2075 = vmatprep.subr.mxu0 0.0
  %2076 = vmatpush1.msra.mxu0 0.0
  %2077 = vmatprep.subr.mxu0 0.0
  %2078 = vmatpush1.msra.mxu0 0.0
  %2079 = vmatprep.subr.mxu0 0.0
  %2080 = vmatpush1.msra.mxu0 0.0
  %2081 = vmatprep.subr.mxu0 0.0
  %2082 = vmatpush1.msra.mxu0 0.0
  %2083 = vmatprep.subr.mxu0 0.0
  %2084 = vmatpush1.msra.mxu0 0.0
  %2085 = vmatprep.subr.mxu0 0.0
  %2086 = vmatpush1.msra.mxu0 0.0
  %2087 = vmatprep.subr.mxu0 0.0
  %2088 = vmatpush1.msra.mxu0 0.0
  %2089 = vmatprep.subr.mxu0 0.0
  %2090 = vmatpush1.msra.mxu0 0.0
  %2091 = vmatprep.subr.mxu0 0.0
  %2092 = vmatpush1.msra.mxu0 0.0
  %2093 = vmatprep.subr.mxu0 0.0
  %2094 = vmatpush1.msra.mxu0 0.0
  %2095 = vmatprep.subr.mxu0 0.0
  %2096 = vmatpush1.msra.mxu0 0.0
  %2097 = vmatprep.subr.mxu0 0.0
  %2098 = vmatpush1.msra.mxu0 0.0
  %2099 = vmatprep.subr.mxu0 0.0
  %2100 = vmatpush1.msra.mxu0 0.0
  %2101 = vmatprep.subr.mxu0 0.0
  %2102 = vmatpush1.msra.mxu0 0.0
  %2103 = vmatprep.subr.mxu0 0.0
  %2104 = vmatpush1.msra.mxu0 0.0
  %2105 = vmatprep.subr.mxu0 0.0
  %2106 = vmatpush1.msra.mxu0 0.0
  %2107 = vmatprep.mubr.f32.mxu0 0.0
  %2108 = vmatmul.mubr.f32.gmra.mrb[0].mxu0 %v759
  %v2109 = vpop.f32.mrb[0].mxu0
  %v2110 = vadd.f32 %v2040, %v2109
  %v2111 = vpop.f32.mrb[0].mxu0
  %2112 = vdwg.mxu0
  %v2113 = vadd.f32 %v2110, %v1601
  %v2114 = vxor.u32 %v2113, 2147483648
  %v2115 = vmul.f32 %v2114, 1.442695
  %v2116 = vpow.pop %v2115
  %v2117 = vadd.f32 %v2116, 1.0
  %v2118 = vrcp.pop %v2117
  %v2119 = vmul.f32 1.0, %v2118
  %v2120 = vtanh.pop %v2113
  %v2121 = vmul.f32 %v2119, %v1961
  %2123 = vrot.lane.b32.xlu0 %v2120, 64
  %v2124 = vpop.permute.xlu0 %2123
  %v2126 = vmul.f32 %v2119, %v2124
  %2128 = vrot.lane.b32.xlu0 %v2126, 32
  %v2129 = vpop.permute.xlu0 %2128
  %v2131 = vadd.f32 %v2121, %v2129
  %v2132 = vtanh.pop %v2131
  %2134 = vrot.lane.b32.xlu0 %v2132, 64
  %v2135 = vpop.permute.xlu0 %2134
  %v2137 = vmul.f32 %v2119, %v2135
  %2139 = vrot.lane.b32.xlu0 %v2137, 32
  %v2140 = vpop.permute.xlu0 %2139
  %v2141 = vsel %vm58, %v2140, 0
  %2143 = vmatprep.subr.mxu0 0.0
  %2144 = vmatpush1.msra.mxu0 %v1452
  %2145 = vmatprep.subr.mxu0 0.0
  %2146 = vmatpush1.msra.mxu0 %v1453
  %2147 = vmatprep.subr.mxu0 0.0
  %2148 = vmatpush1.msra.mxu0 %v1454
  %2149 = vmatprep.subr.mxu0 0.0
  %2150 = vmatpush1.msra.mxu0 %v1455
  %2151 = vmatprep.subr.mxu0 0.0
  %2152 = vmatpush1.msra.mxu0 0.0
  %2153 = vmatprep.subr.mxu0 0.0
  %2154 = vmatpush1.msra.mxu0 0.0
  %2155 = vmatprep.subr.mxu0 0.0
  %2156 = vmatpush1.msra.mxu0 0.0
  %2157 = vmatprep.subr.mxu0 0.0
  %2158 = vmatpush1.msra.mxu0 0.0
  %2159 = vmatprep.subr.mxu0 0.0
  %2160 = vmatpush1.msra.mxu0 0.0
  %2161 = vmatprep.subr.mxu0 0.0
  %2162 = vmatpush1.msra.mxu0 0.0
  %2163 = vmatprep.subr.mxu0 0.0
  %2164 = vmatpush1.msra.mxu0 0.0
  %2165 = vmatprep.subr.mxu0 0.0
  %2166 = vmatpush1.msra.mxu0 0.0
  %2167 = vmatprep.subr.mxu0 0.0
  %2168 = vmatpush1.msra.mxu0 0.0
  %2169 = vmatprep.subr.mxu0 0.0
  %2170 = vmatpush1.msra.mxu0 0.0
  %2171 = vmatprep.subr.mxu0 0.0
  %2172 = vmatpush1.msra.mxu0 0.0
  %2173 = vmatprep.subr.mxu0 0.0
  %2174 = vmatpush1.msra.mxu0 0.0
  %2175 = vmatprep.subr.mxu0 0.0
  %2176 = vmatpush1.msra.mxu0 0.0
  %2177 = vmatprep.subr.mxu0 0.0
  %2178 = vmatpush1.msra.mxu0 0.0
  %2179 = vmatprep.subr.mxu0 0.0
  %2180 = vmatpush1.msra.mxu0 0.0
  %2181 = vmatprep.subr.mxu0 0.0
  %2182 = vmatpush1.msra.mxu0 0.0
  %2183 = vmatprep.subr.mxu0 0.0
  %2184 = vmatpush1.msra.mxu0 0.0
  %2185 = vmatprep.subr.mxu0 0.0
  %2186 = vmatpush1.msra.mxu0 0.0
  %2187 = vmatprep.subr.mxu0 0.0
  %2188 = vmatpush1.msra.mxu0 0.0
  %2189 = vmatprep.subr.mxu0 0.0
  %2190 = vmatpush1.msra.mxu0 0.0
  %2191 = vmatprep.subr.mxu0 0.0
  %2192 = vmatpush1.msra.mxu0 0.0
  %2193 = vmatprep.subr.mxu0 0.0
  %2194 = vmatpush1.msra.mxu0 0.0
  %2195 = vmatprep.subr.mxu0 0.0
  %2196 = vmatpush1.msra.mxu0 0.0
  %2197 = vmatprep.subr.mxu0 0.0
  %2198 = vmatpush1.msra.mxu0 0.0
  %2199 = vmatprep.subr.mxu0 0.0
  %2200 = vmatpush1.msra.mxu0 0.0
  %2201 = vmatprep.subr.mxu0 0.0
  %2202 = vmatpush1.msra.mxu0 0.0
  %2203 = vmatprep.subr.mxu0 0.0
  %2204 = vmatpush1.msra.mxu0 0.0
  %2205 = vmatprep.subr.mxu0 0.0
  %2206 = vmatpush1.msra.mxu0 0.0
  %2207 = vmatprep.mubr.f32.mxu0 0.0
  %2208 = vmatmul.mubr.f32.gmra.mrb[0].mxu0 %v2141
  %v2209 = vpop.f32.mrb[0].mxu0
  %v2210 = vadd.f32 0.0, %v2209
  %v2211 = vpop.f32.mrb[0].mxu0
  %2212 = vdwg.mxu0
  %2213 = vmatprep.subr.mxu0 0.0
  %2214 = vmatpush1.msra.mxu0 %v1448
  %2215 = vmatprep.subr.mxu0 0.0
  %2216 = vmatpush1.msra.mxu0 %v1449
  %2217 = vmatprep.subr.mxu0 0.0
  %2218 = vmatpush1.msra.mxu0 %v1450
  %2219 = vmatprep.subr.mxu0 0.0
  %2220 = vmatpush1.msra.mxu0 %v1451
  %2221 = vmatprep.subr.mxu0 0.0
  %2222 = vmatpush1.msra.mxu0 0.0
  %2223 = vmatprep.subr.mxu0 0.0
  %2224 = vmatpush1.msra.mxu0 0.0
  %2225 = vmatprep.subr.mxu0 0.0
  %2226 = vmatpush1.msra.mxu0 0.0
  %2227 = vmatprep.subr.mxu0 0.0
  %2228 = vmatpush1.msra.mxu0 0.0
  %2229 = vmatprep.subr.mxu0 0.0
  %2230 = vmatpush1.msra.mxu0 0.0
  %2231 = vmatprep.subr.mxu0 0.0
  %2232 = vmatpush1.msra.mxu0 0.0
  %2233 = vmatprep.subr.mxu0 0.0
  %2234 = vmatpush1.msra.mxu0 0.0
  %2235 = vmatprep.subr.mxu0 0.0
  %2236 = vmatpush1.msra.mxu0 0.0
  %2237 = vmatprep.subr.mxu0 0.0
  %2238 = vmatpush1.msra.mxu0 0.0
  %2239 = vmatprep.subr.mxu0 0.0
  %2240 = vmatpush1.msra.mxu0 0.0
  %2241 = vmatprep.subr.mxu0 0.0
  %2242 = vmatpush1.msra.mxu0 0.0
  %2243 = vmatprep.subr.mxu0 0.0
  %2244 = vmatpush1.msra.mxu0 0.0
  %2245 = vmatprep.subr.mxu0 0.0
  %2246 = vmatpush1.msra.mxu0 0.0
  %2247 = vmatprep.subr.mxu0 0.0
  %2248 = vmatpush1.msra.mxu0 0.0
  %2249 = vmatprep.subr.mxu0 0.0
  %2250 = vmatpush1.msra.mxu0 0.0
  %2251 = vmatprep.subr.mxu0 0.0
  %2252 = vmatpush1.msra.mxu0 0.0
  %2253 = vmatprep.subr.mxu0 0.0
  %2254 = vmatpush1.msra.mxu0 0.0
  %2255 = vmatprep.subr.mxu0 0.0
  %2256 = vmatpush1.msra.mxu0 0.0
  %2257 = vmatprep.subr.mxu0 0.0
  %2258 = vmatpush1.msra.mxu0 0.0
  %2259 = vmatprep.subr.mxu0 0.0
  %2260 = vmatpush1.msra.mxu0 0.0
  %2261 = vmatprep.subr.mxu0 0.0
  %2262 = vmatpush1.msra.mxu0 0.0
  %2263 = vmatprep.subr.mxu0 0.0
  %2264 = vmatpush1.msra.mxu0 0.0
  %2265 = vmatprep.subr.mxu0 0.0
  %2266 = vmatpush1.msra.mxu0 0.0
  %2267 = vmatprep.subr.mxu0 0.0
  %2268 = vmatpush1.msra.mxu0 0.0
  %2269 = vmatprep.subr.mxu0 0.0
  %2270 = vmatpush1.msra.mxu0 0.0
  %2271 = vmatprep.subr.mxu0 0.0
  %2272 = vmatpush1.msra.mxu0 0.0
  %2273 = vmatprep.subr.mxu0 0.0
  %2274 = vmatpush1.msra.mxu0 0.0
  %2275 = vmatprep.subr.mxu0 0.0
  %2276 = vmatpush1.msra.mxu0 0.0
  %2277 = vmatprep.mubr.f32.mxu0 0.0
  %2278 = vmatmul.mubr.f32.gmra.mrb[0].mxu0 %v932
  %v2279 = vpop.f32.mrb[0].mxu0
  %v2280 = vadd.f32 %v2210, %v2279
  %v2281 = vpop.f32.mrb[0].mxu0
  %2282 = vdwg.mxu0
  %v2283 = vadd.f32 %v2280, %v1601
  %v2284 = vxor.u32 %v2283, 2147483648
  %v2285 = vmul.f32 %v2284, 1.442695
  %v2286 = vpow.pop %v2285
  %v2287 = vadd.f32 %v2286, 1.0
  %v2288 = vrcp.pop %v2287
  %v2289 = vmul.f32 1.0, %v2288
  %v2290 = vtanh.pop %v2283
  %v2291 = vmul.f32 %v2289, %v2131
  %2293 = vrot.lane.b32.xlu0 %v2290, 64
  %v2294 = vpop.permute.xlu0 %2293
  %v2296 = vmul.f32 %v2289, %v2294
  %2298 = vrot.lane.b32.xlu0 %v2296, 32
  %v2299 = vpop.permute.xlu0 %2298
  %v2301 = vadd.f32 %v2291, %v2299
  %v2302 = vtanh.pop %v2301
  %2304 = vrot.lane.b32.xlu0 %v2302, 64
  %v2305 = vpop.permute.xlu0 %2304
  %v2307 = vmul.f32 %v2289, %v2305
  %2309 = vrot.lane.b32.xlu0 %v2307, 32
  %v2310 = vpop.permute.xlu0 %2309
  %v2311 = vsel %vm58, %v2310, 0
  %2313 = vmatprep.subr.mxu0 0.0
  %2314 = vmatpush1.msra.mxu0 %v1452
  %2315 = vmatprep.subr.mxu0 0.0
  %2316 = vmatpush1.msra.mxu0 %v1453
  %2317 = vmatprep.subr.mxu0 0.0
  %2318 = vmatpush1.msra.mxu0 %v1454
  %2319 = vmatprep.subr.mxu0 0.0
  %2320 = vmatpush1.msra.mxu0 %v1455
  %2321 = vmatprep.subr.mxu0 0.0
  %2322 = vmatpush1.msra.mxu0 0.0
  %2323 = vmatprep.subr.mxu0 0.0
  %2324 = vmatpush1.msra.mxu0 0.0
  %2325 = vmatprep.subr.mxu0 0.0
  %2326 = vmatpush1.msra.mxu0 0.0
  %2327 = vmatprep.subr.mxu0 0.0
  %2328 = vmatpush1.msra.mxu0 0.0
  %2329 = vmatprep.subr.mxu0 0.0
  %2330 = vmatpush1.msra.mxu0 0.0
  %2331 = vmatprep.subr.mxu0 0.0
  %2332 = vmatpush1.msra.mxu0 0.0
  %2333 = vmatprep.subr.mxu0 0.0
  %2334 = vmatpush1.msra.mxu0 0.0
  %2335 = vmatprep.subr.mxu0 0.0
  %2336 = vmatpush1.msra.mxu0 0.0
  %2337 = vmatprep.subr.mxu0 0.0
  %2338 = vmatpush1.msra.mxu0 0.0
  %2339 = vmatprep.subr.mxu0 0.0
  %2340 = vmatpush1.msra.mxu0 0.0
  %2341 = vmatprep.subr.mxu0 0.0
  %2342 = vmatpush1.msra.mxu0 0.0
  %2343 = vmatprep.subr.mxu0 0.0
  %2344 = vmatpush1.msra.mxu0 0.0
  %2345 = vmatprep.subr.mxu0 0.0
  %2346 = vmatpush1.msra.mxu0 0.0
  %2347 = vmatprep.subr.mxu0 0.0
  %2348 = vmatpush1.msra.mxu0 0.0
  %2349 = vmatprep.subr.mxu0 0.0
  %2350 = vmatpush1.msra.mxu0 0.0
  %2351 = vmatprep.subr.mxu0 0.0
  %2352 = vmatpush1.msra.mxu0 0.0
  %2353 = vmatprep.subr.mxu0 0.0
  %2354 = vmatpush1.msra.mxu0 0.0
  %2355 = vmatprep.subr.mxu0 0.0
  %2356 = vmatpush1.msra.mxu0 0.0
  %2357 = vmatprep.subr.mxu0 0.0
  %2358 = vmatpush1.msra.mxu0 0.0
  %2359 = vmatprep.subr.mxu0 0.0
  %2360 = vmatpush1.msra.mxu0 0.0
  %2361 = vmatprep.subr.mxu0 0.0
  %2362 = vmatpush1.msra.mxu0 0.0
  %2363 = vmatprep.subr.mxu0 0.0
  %2364 = vmatpush1.msra.mxu0 0.0
  %2365 = vmatprep.subr.mxu0 0.0
  %2366 = vmatpush1.msra.mxu0 0.0
  %2367 = vmatprep.subr.mxu0 0.0
  %2368 = vmatpush1.msra.mxu0 0.0
  %2369 = vmatprep.subr.mxu0 0.0
  %2370 = vmatpush1.msra.mxu0 0.0
  %2371 = vmatprep.subr.mxu0 0.0
  %2372 = vmatpush1.msra.mxu0 0.0
  %2373 = vmatprep.subr.mxu0 0.0
  %2374 = vmatpush1.msra.mxu0 0.0
  %2375 = vmatprep.subr.mxu0 0.0
  %2376 = vmatpush1.msra.mxu0 0.0
  %2377 = vmatprep.mubr.f32.mxu0 0.0
  %2378 = vmatmul.mubr.f32.gmra.mrb[0].mxu0 %v2311
  %v2379 = vpop.f32.mrb[0].mxu0
  %v2380 = vadd.f32 0.0, %v2379
  %v2381 = vpop.f32.mrb[0].mxu0
  %2382 = vdwg.mxu0
  %2383 = vmatprep.subr.mxu0 0.0
  %2384 = vmatpush1.msra.mxu0 %v1448
  %2385 = vmatprep.subr.mxu0 0.0
  %2386 = vmatpush1.msra.mxu0 %v1449
  %2387 = vmatprep.subr.mxu0 0.0
  %2388 = vmatpush1.msra.mxu0 %v1450
  %2389 = vmatprep.subr.mxu0 0.0
  %2390 = vmatpush1.msra.mxu0 %v1451
  %2391 = vmatprep.subr.mxu0 0.0
  %2392 = vmatpush1.msra.mxu0 0.0
  %2393 = vmatprep.subr.mxu0 0.0
  %2394 = vmatpush1.msra.mxu0 0.0
  %2395 = vmatprep.subr.mxu0 0.0
  %2396 = vmatpush1.msra.mxu0 0.0
  %2397 = vmatprep.subr.mxu0 0.0
  %2398 = vmatpush1.msra.mxu0 0.0
  %2399 = vmatprep.subr.mxu0 0.0
  %2400 = vmatpush1.msra.mxu0 0.0
  %2401 = vmatprep.subr.mxu0 0.0
  %2402 = vmatpush1.msra.mxu0 0.0
  %2403 = vmatprep.subr.mxu0 0.0
  %2404 = vmatpush1.msra.mxu0 0.0
  %2405 = vmatprep.subr.mxu0 0.0
  %2406 = vmatpush1.msra.mxu0 0.0
  %2407 = vmatprep.subr.mxu0 0.0
  %2408 = vmatpush1.msra.mxu0 0.0
  %2409 = vmatprep.subr.mxu0 0.0
  %2410 = vmatpush1.msra.mxu0 0.0
  %2411 = vmatprep.subr.mxu0 0.0
  %2412 = vmatpush1.msra.mxu0 0.0
  %2413 = vmatprep.subr.mxu0 0.0
  %2414 = vmatpush1.msra.mxu0 0.0
  %2415 = vmatprep.subr.mxu0 0.0
  %2416 = vmatpush1.msra.mxu0 0.0
  %2417 = vmatprep.subr.mxu0 0.0
  %2418 = vmatpush1.msra.mxu0 0.0
  %2419 = vmatprep.subr.mxu0 0.0
  %2420 = vmatpush1.msra.mxu0 0.0
  %2421 = vmatprep.subr.mxu0 0.0
  %2422 = vmatpush1.msra.mxu0 0.0
  %2423 = vmatprep.subr.mxu0 0.0
  %2424 = vmatpush1.msra.mxu0 0.0
  %2425 = vmatprep.subr.mxu0 0.0
  %2426 = vmatpush1.msra.mxu0 0.0
  %2427 = vmatprep.subr.mxu0 0.0
  %2428 = vmatpush1.msra.mxu0 0.0
  %2429 = vmatprep.subr.mxu0 0.0
  %2430 = vmatpush1.msra.mxu0 0.0
  %2431 = vmatprep.subr.mxu0 0.0
  %2432 = vmatpush1.msra.mxu0 0.0
  %2433 = vmatprep.subr.mxu0 0.0
  %2434 = vmatpush1.msra.mxu0 0.0
  %2435 = vmatprep.subr.mxu0 0.0
  %2436 = vmatpush1.msra.mxu0 0.0
  %2437 = vmatprep.subr.mxu0 0.0
  %2438 = vmatpush1.msra.mxu0 0.0
  %2439 = vmatprep.subr.mxu0 0.0
  %2440 = vmatpush1.msra.mxu0 0.0
  %2441 = vmatprep.subr.mxu0 0.0
  %2442 = vmatpush1.msra.mxu0 0.0
  %2443 = vmatprep.subr.mxu0 0.0
  %2444 = vmatpush1.msra.mxu0 0.0
  %2445 = vmatprep.subr.mxu0 0.0
  %2446 = vmatpush1.msra.mxu0 0.0
  %2447 = vmatprep.mubr.f32.mxu0 0.0
  %2448 = vmatmul.mubr.f32.gmra.mrb[0].mxu0 %v1105
  %v2449 = vpop.f32.mrb[0].mxu0
  %v2450 = vadd.f32 %v2380, %v2449
  %v2451 = vpop.f32.mrb[0].mxu0
  %2452 = vdwg.mxu0
  %v2453 = vadd.f32 %v2450, %v1601
  %v2454 = vxor.u32 %v2453, 2147483648
  %v2455 = vmul.f32 %v2454, 1.442695
  %v2456 = vpow.pop %v2455
  %v2457 = vadd.f32 %v2456, 1.0
  %v2458 = vrcp.pop %v2457
  %v2459 = vmul.f32 1.0, %v2458
  %v2460 = vtanh.pop %v2453
  %v2461 = vmul.f32 %v2459, %v2301
  %2463 = vrot.lane.b32.xlu0 %v2460, 64
  %v2464 = vpop.permute.xlu0 %2463
  %v2466 = vmul.f32 %v2459, %v2464
  %2468 = vrot.lane.b32.xlu0 %v2466, 32
  %v2469 = vpop.permute.xlu0 %2468
  %v2471 = vadd.f32 %v2461, %v2469
  %v2472 = vtanh.pop %v2471
  %2474 = vrot.lane.b32.xlu0 %v2472, 64
  %v2475 = vpop.permute.xlu0 %2474
  %v2477 = vmul.f32 %v2459, %v2475
  %2479 = vrot.lane.b32.xlu0 %v2477, 32
  %v2480 = vpop.permute.xlu0 %2479
  %v2481 = vsel %vm58, %v2480, 0
  %2483 = vmatprep.subr.mxu0 0.0
  %2484 = vmatpush1.msra.mxu0 %v1452
  %2485 = vmatprep.subr.mxu0 0.0
  %2486 = vmatpush1.msra.mxu0 %v1453
  %2487 = vmatprep.subr.mxu0 0.0
  %2488 = vmatpush1.msra.mxu0 %v1454
  %2489 = vmatprep.subr.mxu0 0.0
  %2490 = vmatpush1.msra.mxu0 %v1455
  %2491 = vmatprep.subr.mxu0 0.0
  %2492 = vmatpush1.msra.mxu0 0.0
  %2493 = vmatprep.subr.mxu0 0.0
  %2494 = vmatpush1.msra.mxu0 0.0
  %2495 = vmatprep.subr.mxu0 0.0
  %2496 = vmatpush1.msra.mxu0 0.0
  %2497 = vmatprep.subr.mxu0 0.0
  %2498 = vmatpush1.msra.mxu0 0.0
  %2499 = vmatprep.subr.mxu0 0.0
  %2500 = vmatpush1.msra.mxu0 0.0
  %2501 = vmatprep.subr.mxu0 0.0
  %2502 = vmatpush1.msra.mxu0 0.0
  %2503 = vmatprep.subr.mxu0 0.0
  %2504 = vmatpush1.msra.mxu0 0.0
  %2505 = vmatprep.subr.mxu0 0.0
  %2506 = vmatpush1.msra.mxu0 0.0
  %2507 = vmatprep.subr.mxu0 0.0
  %2508 = vmatpush1.msra.mxu0 0.0
  %2509 = vmatprep.subr.mxu0 0.0
  %2510 = vmatpush1.msra.mxu0 0.0
  %2511 = vmatprep.subr.mxu0 0.0
  %2512 = vmatpush1.msra.mxu0 0.0
  %2513 = vmatprep.subr.mxu0 0.0
  %2514 = vmatpush1.msra.mxu0 0.0
  %2515 = vmatprep.subr.mxu0 0.0
  %2516 = vmatpush1.msra.mxu0 0.0
  %2517 = vmatprep.subr.mxu0 0.0
  %2518 = vmatpush1.msra.mxu0 0.0
  %2519 = vmatprep.subr.mxu0 0.0
  %2520 = vmatpush1.msra.mxu0 0.0
  %2521 = vmatprep.subr.mxu0 0.0
  %2522 = vmatpush1.msra.mxu0 0.0
  %2523 = vmatprep.subr.mxu0 0.0
  %2524 = vmatpush1.msra.mxu0 0.0
  %2525 = vmatprep.subr.mxu0 0.0
  %2526 = vmatpush1.msra.mxu0 0.0
  %2527 = vmatprep.subr.mxu0 0.0
  %2528 = vmatpush1.msra.mxu0 0.0
  %2529 = vmatprep.subr.mxu0 0.0
  %2530 = vmatpush1.msra.mxu0 0.0
  %2531 = vmatprep.subr.mxu0 0.0
  %2532 = vmatpush1.msra.mxu0 0.0
  %2533 = vmatprep.subr.mxu0 0.0
  %2534 = vmatpush1.msra.mxu0 0.0
  %2535 = vmatprep.subr.mxu0 0.0
  %2536 = vmatpush1.msra.mxu0 0.0
  %2537 = vmatprep.subr.mxu0 0.0
  %2538 = vmatpush1.msra.mxu0 0.0
  %2539 = vmatprep.subr.mxu0 0.0
  %2540 = vmatpush1.msra.mxu0 0.0
  %2541 = vmatprep.subr.mxu0 0.0
  %2542 = vmatpush1.msra.mxu0 0.0
  %2543 = vmatprep.subr.mxu0 0.0
  %2544 = vmatpush1.msra.mxu0 0.0
  %2545 = vmatprep.subr.mxu0 0.0
  %2546 = vmatpush1.msra.mxu0 0.0
  %2547 = vmatprep.mubr.f32.mxu0 0.0
  %2548 = vmatmul.mubr.f32.gmra.mrb[0].mxu0 %v2481
  %v2549 = vpop.f32.mrb[0].mxu0
  %v2550 = vadd.f32 0.0, %v2549
  %v2551 = vpop.f32.mrb[0].mxu0
  %2552 = vdwg.mxu0
  %2553 = vmatprep.subr.mxu0 0.0
  %2554 = vmatpush1.msra.mxu0 %v1448
  %2555 = vmatprep.subr.mxu0 0.0
  %2556 = vmatpush1.msra.mxu0 %v1449
  %2557 = vmatprep.subr.mxu0 0.0
  %2558 = vmatpush1.msra.mxu0 %v1450
  %2559 = vmatprep.subr.mxu0 0.0
  %2560 = vmatpush1.msra.mxu0 %v1451
  %2561 = vmatprep.subr.mxu0 0.0
  %2562 = vmatpush1.msra.mxu0 0.0
  %2563 = vmatprep.subr.mxu0 0.0
  %2564 = vmatpush1.msra.mxu0 0.0
  %2565 = vmatprep.subr.mxu0 0.0
  %2566 = vmatpush1.msra.mxu0 0.0
  %2567 = vmatprep.subr.mxu0 0.0
  %2568 = vmatpush1.msra.mxu0 0.0
  %2569 = vmatprep.subr.mxu0 0.0
  %2570 = vmatpush1.msra.mxu0 0.0
  %2571 = vmatprep.subr.mxu0 0.0
  %2572 = vmatpush1.msra.mxu0 0.0
  %2573 = vmatprep.subr.mxu0 0.0
  %2574 = vmatpush1.msra.mxu0 0.0
  %2575 = vmatprep.subr.mxu0 0.0
  %2576 = vmatpush1.msra.mxu0 0.0
  %2577 = vmatprep.subr.mxu0 0.0
  %2578 = vmatpush1.msra.mxu0 0.0
  %2579 = vmatprep.subr.mxu0 0.0
  %2580 = vmatpush1.msra.mxu0 0.0
  %2581 = vmatprep.subr.mxu0 0.0
  %2582 = vmatpush1.msra.mxu0 0.0
  %2583 = vmatprep.subr.mxu0 0.0
  %2584 = vmatpush1.msra.mxu0 0.0
  %2585 = vmatprep.subr.mxu0 0.0
  %2586 = vmatpush1.msra.mxu0 0.0
  %2587 = vmatprep.subr.mxu0 0.0
  %2588 = vmatpush1.msra.mxu0 0.0
  %2589 = vmatprep.subr.mxu0 0.0
  %2590 = vmatpush1.msra.mxu0 0.0
  %2591 = vmatprep.subr.mxu0 0.0
  %2592 = vmatpush1.msra.mxu0 0.0
  %2593 = vmatprep.subr.mxu0 0.0
  %2594 = vmatpush1.msra.mxu0 0.0
  %2595 = vmatprep.subr.mxu0 0.0
  %2596 = vmatpush1.msra.mxu0 0.0
  %2597 = vmatprep.subr.mxu0 0.0
  %2598 = vmatpush1.msra.mxu0 0.0
  %2599 = vmatprep.subr.mxu0 0.0
  %2600 = vmatpush1.msra.mxu0 0.0
  %2601 = vmatprep.subr.mxu0 0.0
  %2602 = vmatpush1.msra.mxu0 0.0
  %2603 = vmatprep.subr.mxu0 0.0
  %2604 = vmatpush1.msra.mxu0 0.0
  %2605 = vmatprep.subr.mxu0 0.0
  %2606 = vmatpush1.msra.mxu0 0.0
  %2607 = vmatprep.subr.mxu0 0.0
  %2608 = vmatpush1.msra.mxu0 0.0
  %2609 = vmatprep.subr.mxu0 0.0
  %2610 = vmatpush1.msra.mxu0 0.0
  %2611 = vmatprep.subr.mxu0 0.0
  %2612 = vmatpush1.msra.mxu0 0.0
  %2613 = vmatprep.subr.mxu0 0.0
  %2614 = vmatpush1.msra.mxu0 0.0
  %2615 = vmatprep.subr.mxu0 0.0
  %2616 = vmatpush1.msra.mxu0 0.0
  %2617 = vmatprep.mubr.f32.mxu0 0.0
  %2618 = vmatmul.mubr.f32.gmra.mrb[0].mxu0 %v1278
  %v2619 = vpop.f32.mrb[0].mxu0
  %v2620 = vadd.f32 %v2550, %v2619
  %v2621 = vpop.f32.mrb[0].mxu0
  %2622 = vdwg.mxu0
  %v2623 = vadd.f32 %v2620, %v1601
  %v2624 = vxor.u32 %v2623, 2147483648
  %v2625 = vmul.f32 %v2624, 1.442695
  %v2626 = vpow.pop %v2625
  %v2627 = vadd.f32 %v2626, 1.0
  %v2628 = vrcp.pop %v2627
  %v2629 = vmul.f32 1.0, %v2628
  %v2630 = vtanh.pop %v2623
  %v2631 = vmul.f32 %v2629, %v2471
  %2633 = vrot.lane.b32.xlu0 %v2630, 64
  %v2634 = vpop.permute.xlu0 %2633
  %v2636 = vmul.f32 %v2629, %v2634
  %2638 = vrot.lane.b32.xlu0 %v2636, 32
  %v2639 = vpop.permute.xlu0 %2638
  %v2641 = vadd.f32 %v2631, %v2639
  %v2642 = vtanh.pop %v2641
  %2644 = vrot.lane.b32.xlu0 %v2642, 64
  %v2645 = vpop.permute.xlu0 %2644
  %v2647 = vmul.f32 %v2629, %v2645
  %2649 = vrot.lane.b32.xlu0 %v2647, 32
  %v2650 = vpop.permute.xlu0 %2649
  %v2651 = vsel %vm58, %v2650, 0
  %2653 = vmatprep.subr.mxu0 0.0
  %2654 = vmatpush1.msra.mxu0 %v1452
  %2655 = vmatprep.subr.mxu0 0.0
  %2656 = vmatpush1.msra.mxu0 %v1453
  %2657 = vmatprep.subr.mxu0 0.0
  %2658 = vmatpush1.msra.mxu0 %v1454
  %2659 = vmatprep.subr.mxu0 0.0
  %2660 = vmatpush1.msra.mxu0 %v1455
  %2661 = vmatprep.subr.mxu0 0.0
  %2662 = vmatpush1.msra.mxu0 0.0
  %2663 = vmatprep.subr.mxu0 0.0
  %2664 = vmatpush1.msra.mxu0 0.0
  %2665 = vmatprep.subr.mxu0 0.0
  %2666 = vmatpush1.msra.mxu0 0.0
  %2667 = vmatprep.subr.mxu0 0.0
  %2668 = vmatpush1.msra.mxu0 0.0
  %2669 = vmatprep.subr.mxu0 0.0
  %2670 = vmatpush1.msra.mxu0 0.0
  %2671 = vmatprep.subr.mxu0 0.0
  %2672 = vmatpush1.msra.mxu0 0.0
  %2673 = vmatprep.subr.mxu0 0.0
  %2674 = vmatpush1.msra.mxu0 0.0
  %2675 = vmatprep.subr.mxu0 0.0
  %2676 = vmatpush1.msra.mxu0 0.0
  %2677 = vmatprep.subr.mxu0 0.0
  %2678 = vmatpush1.msra.mxu0 0.0
  %2679 = vmatprep.subr.mxu0 0.0
  %2680 = vmatpush1.msra.mxu0 0.0
  %2681 = vmatprep.subr.mxu0 0.0
  %2682 = vmatpush1.msra.mxu0 0.0
  %2683 = vmatprep.subr.mxu0 0.0
  %2684 = vmatpush1.msra.mxu0 0.0
  %2685 = vmatprep.subr.mxu0 0.0
  %2686 = vmatpush1.msra.mxu0 0.0
  %2687 = vmatprep.subr.mxu0 0.0
  %2688 = vmatpush1.msra.mxu0 0.0
  %2689 = vmatprep.subr.mxu0 0.0
  %2690 = vmatpush1.msra.mxu0 0.0
  %2691 = vmatprep.subr.mxu0 0.0
  %2692 = vmatpush1.msra.mxu0 0.0
  %2693 = vmatprep.subr.mxu0 0.0
  %2694 = vmatpush1.msra.mxu0 0.0
  %2695 = vmatprep.subr.mxu0 0.0
  %2696 = vmatpush1.msra.mxu0 0.0
  %2697 = vmatprep.subr.mxu0 0.0
  %2698 = vmatpush1.msra.mxu0 0.0
  %2699 = vmatprep.subr.mxu0 0.0
  %2700 = vmatpush1.msra.mxu0 0.0
  %2701 = vmatprep.subr.mxu0 0.0
  %2702 = vmatpush1.msra.mxu0 0.0
  %2703 = vmatprep.subr.mxu0 0.0
  %2704 = vmatpush1.msra.mxu0 0.0
  %2705 = vmatprep.subr.mxu0 0.0
  %2706 = vmatpush1.msra.mxu0 0.0
  %2707 = vmatprep.subr.mxu0 0.0
  %2708 = vmatpush1.msra.mxu0 0.0
  %2709 = vmatprep.subr.mxu0 0.0
  %2710 = vmatpush1.msra.mxu0 0.0
  %2711 = vmatprep.subr.mxu0 0.0
  %2712 = vmatpush1.msra.mxu0 0.0
  %2713 = vmatprep.subr.mxu0 0.0
  %2714 = vmatpush1.msra.mxu0 0.0
  %2715 = vmatprep.subr.mxu0 0.0
  %2716 = vmatpush1.msra.mxu0 0.0
  %2717 = vmatprep.mubr.f32.mxu0 0.0
  %2718 = vmatmul.mubr.f32.gmra.mrb[0].mxu0 %v2651
  %v2719 = vpop.f32.mrb[0].mxu0
  %v2720 = vadd.f32 0.0, %v2719
  %v2721 = vpop.f32.mrb[0].mxu0
  %2722 = vdwg.mxu0
  %2724 = vrot.lane.b32.xlu0 %v1447, 32
  %v2725 = vpop.permute.xlu0 %2724
  %v2726 = vsel %vm58, %v2725, 0
  %2728 = vmatprep.subr.mxu0 0.0
  %2729 = vmatpush1.msra.mxu0 %v1448
  %2730 = vmatprep.subr.mxu0 0.0
  %2731 = vmatpush1.msra.mxu0 %v1449
  %2732 = vmatprep.subr.mxu0 0.0
  %2733 = vmatpush1.msra.mxu0 %v1450
  %2734 = vmatprep.subr.mxu0 0.0
  %2735 = vmatpush1.msra.mxu0 %v1451
  %2736 = vmatprep.subr.mxu0 0.0
  %2737 = vmatpush1.msra.mxu0 0.0
  %2738 = vmatprep.subr.mxu0 0.0
  %2739 = vmatpush1.msra.mxu0 0.0
  %2740 = vmatprep.subr.mxu0 0.0
  %2741 = vmatpush1.msra.mxu0 0.0
  %2742 = vmatprep.subr.mxu0 0.0
  %2743 = vmatpush1.msra.mxu0 0.0
  %2744 = vmatprep.subr.mxu0 0.0
  %2745 = vmatpush1.msra.mxu0 0.0
  %2746 = vmatprep.subr.mxu0 0.0
  %2747 = vmatpush1.msra.mxu0 0.0
  %2748 = vmatprep.subr.mxu0 0.0
  %2749 = vmatpush1.msra.mxu0 0.0
  %2750 = vmatprep.subr.mxu0 0.0
  %2751 = vmatpush1.msra.mxu0 0.0
  %2752 = vmatprep.subr.mxu0 0.0
  %2753 = vmatpush1.msra.mxu0 0.0
  %2754 = vmatprep.subr.mxu0 0.0
  %2755 = vmatpush1.msra.mxu0 0.0
  %2756 = vmatprep.subr.mxu0 0.0
  %2757 = vmatpush1.msra.mxu0 0.0
  %2758 = vmatprep.subr.mxu0 0.0
  %2759 = vmatpush1.msra.mxu0 0.0
  %2760 = vmatprep.subr.mxu0 0.0
  %2761 = vmatpush1.msra.mxu0 0.0
  %2762 = vmatprep.subr.mxu0 0.0
  %2763 = vmatpush1.msra.mxu0 0.0
  %2764 = vmatprep.subr.mxu0 0.0
  %2765 = vmatpush1.msra.mxu0 0.0
  %2766 = vmatprep.subr.mxu0 0.0
  %2767 = vmatpush1.msra.mxu0 0.0
  %2768 = vmatprep.subr.mxu0 0.0
  %2769 = vmatpush1.msra.mxu0 0.0
  %2770 = vmatprep.subr.mxu0 0.0
  %2771 = vmatpush1.msra.mxu0 0.0
  %2772 = vmatprep.subr.mxu0 0.0
  %2773 = vmatpush1.msra.mxu0 0.0
  %2774 = vmatprep.subr.mxu0 0.0
  %2775 = vmatpush1.msra.mxu0 0.0
  %2776 = vmatprep.subr.mxu0 0.0
  %2777 = vmatpush1.msra.mxu0 0.0
  %2778 = vmatprep.subr.mxu0 0.0
  %2779 = vmatpush1.msra.mxu0 0.0
  %2780 = vmatprep.subr.mxu0 0.0
  %2781 = vmatpush1.msra.mxu0 0.0
  %2782 = vmatprep.subr.mxu0 0.0
  %2783 = vmatpush1.msra.mxu0 0.0
  %2784 = vmatprep.subr.mxu0 0.0
  %2785 = vmatpush1.msra.mxu0 0.0
  %2786 = vmatprep.subr.mxu0 0.0
  %2787 = vmatpush1.msra.mxu0 0.0
  %2788 = vmatprep.subr.mxu0 0.0
  %2789 = vmatpush1.msra.mxu0 0.0
  %2790 = vmatprep.subr.mxu0 0.0
  %2791 = vmatpush1.msra.mxu0 0.0
  %2792 = vmatprep.mubr.f32.mxu0 0.0
  %2793 = vmatmul.mubr.f32.gmra.mrb[0].mxu0 %v2726
  %v2794 = vpop.f32.mrb[0].mxu0
  %v2795 = vadd.f32 %v2720, %v2794
  %v2796 = vpop.f32.mrb[0].mxu0
  %2797 = vdwg.mxu0
  %v2798 = vadd.f32 %v2795, %v1601
  %v2799 = vxor.u32 %v2798, 2147483648
  %v2800 = vmul.f32 %v2799, 1.442695
  %v2801 = vpow.pop %v2800
  %v2802 = vadd.f32 %v2801, 1.0
  %v2803 = vrcp.pop %v2802
  %v2804 = vmul.f32 1.0, %v2803
  %v2805 = vtanh.pop %v2798
  %v2806 = vmul.f32 %v2804, %v2641
  %2808 = vrot.lane.b32.xlu0 %v2805, 64
  %v2809 = vpop.permute.xlu0 %2808
  %v2811 = vmul.f32 %v2804, %v2809
  %2813 = vrot.lane.b32.xlu0 %v2811, 32
  %v2814 = vpop.permute.xlu0 %2813
  %v2816 = vadd.f32 %v2806, %v2814
  %v2817 = vtanh.pop %v2816
  %2819 = vrot.lane.b32.xlu0 %v2817, 64
  %v2820 = vpop.permute.xlu0 %2819
  %v2822 = vmul.f32 %v2804, %v2820
  %v2823 = vld [vmem:[%s7] sm:$0xff]
  %v2824 = vld [vmem:[%s7 + $0x8] sm:$0xff]
  %v2825 = vld [vmem:[%s7 + $0x10] sm:$0xff]
  %v2826 = vld [vmem:[%s7 + $0x18] sm:$0xff]
  %v2827 = vld [vmem:[%s8] sm:$0xff]
  %v2828 = vld [vmem:[%s8 + $0x8] sm:$0xff]
  %v2829 = vld [vmem:[%s8 + $0x10] sm:$0xff]
  %v2830 = vld [vmem:[%s8 + $0x18] sm:$0xff]
  %v2831 = vld [vmem:[%s9] sm:$0x1]
  %2832 = vmatprep.subr.mxu0 0.0
  %2833 = vmatpush1.msra.mxu0 %v2827
  %2834 = vmatprep.subr.mxu0 0.0
  %2835 = vmatpush1.msra.mxu0 %v2828
  %2836 = vmatprep.subr.mxu0 0.0
  %2837 = vmatpush1.msra.mxu0 %v2829
  %2838 = vmatprep.subr.mxu0 0.0
  %2839 = vmatpush1.msra.mxu0 %v2830
  %2840 = vmatprep.subr.mxu0 0.0
  %2841 = vmatpush1.msra.mxu0 0.0
  %2842 = vmatprep.subr.mxu0 0.0
  %2843 = vmatpush1.msra.mxu0 0.0
  %2844 = vmatprep.subr.mxu0 0.0
  %2845 = vmatpush1.msra.mxu0 0.0
  %2846 = vmatprep.subr.mxu0 0.0
  %2847 = vmatpush1.msra.mxu0 0.0
  %2848 = vmatprep.subr.mxu0 0.0
  %2849 = vmatpush1.msra.mxu0 0.0
  %2850 = vmatprep.subr.mxu0 0.0
  %2851 = vmatpush1.msra.mxu0 0.0
  %2852 = vmatprep.subr.mxu0 0.0
  %2853 = vmatpush1.msra.mxu0 0.0
  %2854 = vmatprep.subr.mxu0 0.0
  %2855 = vmatpush1.msra.mxu0 0.0
  %2856 = vmatprep.subr.mxu0 0.0
  %2857 = vmatpush1.msra.mxu0 0.0
  %2858 = vmatprep.subr.mxu0 0.0
  %2859 = vmatpush1.msra.mxu0 0.0
  %2860 = vmatprep.subr.mxu0 0.0
  %2861 = vmatpush1.msra.mxu0 0.0
  %2862 = vmatprep.subr.mxu0 0.0
  %2863 = vmatpush1.msra.mxu0 0.0
  %2864 = vmatprep.subr.mxu0 0.0
  %2865 = vmatpush1.msra.mxu0 0.0
  %2866 = vmatprep.subr.mxu0 0.0
  %2867 = vmatpush1.msra.mxu0 0.0
  %2868 = vmatprep.subr.mxu0 0.0
  %2869 = vmatpush1.msra.mxu0 0.0
  %2870 = vmatprep.subr.mxu0 0.0
  %2871 = vmatpush1.msra.mxu0 0.0
  %2872 = vmatprep.subr.mxu0 0.0
  %2873 = vmatpush1.msra.mxu0 0.0
  %2874 = vmatprep.subr.mxu0 0.0
  %2875 = vmatpush1.msra.mxu0 0.0
  %2876 = vmatprep.subr.mxu0 0.0
  %2877 = vmatpush1.msra.mxu0 0.0
  %2878 = vmatprep.subr.mxu0 0.0
  %2879 = vmatpush1.msra.mxu0 0.0
  %2880 = vmatprep.subr.mxu0 0.0
  %2881 = vmatpush1.msra.mxu0 0.0
  %2882 = vmatprep.subr.mxu0 0.0
  %2883 = vmatpush1.msra.mxu0 0.0
  %2884 = vmatprep.subr.mxu0 0.0
  %2885 = vmatpush1.msra.mxu0 0.0
  %2886 = vmatprep.subr.mxu0 0.0
  %2887 = vmatpush1.msra.mxu0 0.0
  %2888 = vmatprep.subr.mxu0 0.0
  %2889 = vmatpush1.msra.mxu0 0.0
  %2890 = vmatprep.subr.mxu0 0.0
  %2891 = vmatpush1.msra.mxu0 0.0
  %2892 = vmatprep.subr.mxu0 0.0
  %2893 = vmatpush1.msra.mxu0 0.0
  %2894 = vmatprep.subr.mxu0 0.0
  %2895 = vmatpush1.msra.mxu0 0.0
  %2896 = vmatprep.mubr.f32.mxu0 0.0
  %2897 = vmatmul.mubr.f32.gmra.mrb[0].mxu0 %v60
  %v2898 = vpop.f32.mrb[0].mxu0
  %v2899 = vadd.f32 0.0, %v2898
  %v2900 = vpop.f32.mrb[0].mxu0
  %2901 = vdwg.mxu0
  %2902 = vmatprep.subr.mxu0 0.0
  %2903 = vmatpush1.msra.mxu0 %v2823
  %2904 = vmatprep.subr.mxu0 0.0
  %2905 = vmatpush1.msra.mxu0 %v2824
  %2906 = vmatprep.subr.mxu0 0.0
  %2907 = vmatpush1.msra.mxu0 %v2825
  %2908 = vmatprep.subr.mxu0 0.0
  %2909 = vmatpush1.msra.mxu0 %v2826
  %2910 = vmatprep.subr.mxu0 0.0
  %2911 = vmatpush1.msra.mxu0 0.0
  %2912 = vmatprep.subr.mxu0 0.0
  %2913 = vmatpush1.msra.mxu0 0.0
  %2914 = vmatprep.subr.mxu0 0.0
  %2915 = vmatpush1.msra.mxu0 0.0
  %2916 = vmatprep.subr.mxu0 0.0
  %2917 = vmatpush1.msra.mxu0 0.0
  %2918 = vmatprep.subr.mxu0 0.0
  %2919 = vmatpush1.msra.mxu0 0.0
  %2920 = vmatprep.subr.mxu0 0.0
  %2921 = vmatpush1.msra.mxu0 0.0
  %2922 = vmatprep.subr.mxu0 0.0
  %2923 = vmatpush1.msra.mxu0 0.0
  %2924 = vmatprep.subr.mxu0 0.0
  %2925 = vmatpush1.msra.mxu0 0.0
  %2926 = vmatprep.subr.mxu0 0.0
  %2927 = vmatpush1.msra.mxu0 0.0
  %2928 = vmatprep.subr.mxu0 0.0
  %2929 = vmatpush1.msra.mxu0 0.0
  %2930 = vmatprep.subr.mxu0 0.0
  %2931 = vmatpush1.msra.mxu0 0.0
  %2932 = vmatprep.subr.mxu0 0.0
  %2933 = vmatpush1.msra.mxu0 0.0
  %2934 = vmatprep.subr.mxu0 0.0
  %2935 = vmatpush1.msra.mxu0 0.0
  %2936 = vmatprep.subr.mxu0 0.0
  %2937 = vmatpush1.msra.mxu0 0.0
  %2938 = vmatprep.subr.mxu0 0.0
  %2939 = vmatpush1.msra.mxu0 0.0
  %2940 = vmatprep.subr.mxu0 0.0
  %2941 = vmatpush1.msra.mxu0 0.0
  %2942 = vmatprep.subr.mxu0 0.0
  %2943 = vmatpush1.msra.mxu0 0.0
  %2944 = vmatprep.subr.mxu0 0.0
  %2945 = vmatpush1.msra.mxu0 0.0
  %2946 = vmatprep.subr.mxu0 0.0
  %2947 = vmatpush1.msra.mxu0 0.0
  %2948 = vmatprep.subr.mxu0 0.0
  %2949 = vmatpush1.msra.mxu0 0.0
  %2950 = vmatprep.subr.mxu0 0.0
  %2951 = vmatpush1.msra.mxu0 0.0
  %2952 = vmatprep.subr.mxu0 0.0
  %2953 = vmatpush1.msra.mxu0 0.0
  %2954 = vmatprep.subr.mxu0 0.0
  %2955 = vmatpush1.msra.mxu0 0.0
  %2956 = vmatprep.subr.mxu0 0.0
  %2957 = vmatpush1.msra.mxu0 0.0
  %2958 = vmatprep.subr.mxu0 0.0
  %2959 = vmatpush1.msra.mxu0 0.0
  %2960 = vmatprep.subr.mxu0 0.0
  %2961 = vmatpush1.msra.mxu0 0.0
  %2962 = vmatprep.subr.mxu0 0.0
  %2963 = vmatpush1.msra.mxu0 0.0
  %2964 = vmatprep.subr.mxu0 0.0
  %2965 = vmatpush1.msra.mxu0 0.0
  %2966 = vmatprep.mubr.f32.mxu0 0.0
  %2967 = vmatmul.mubr.f32.gmra.mrb[0].mxu0 %v240
  %v2968 = vpop.f32.mrb[0].mxu0
  %v2969 = vadd.f32 %v2899, %v2968
  %v2970 = vpop.f32.mrb[0].mxu0
  %2971 = vdwg.mxu0
  %v2973 = vlaneseq
  %v2974 = vshrl.u32 %v2973, 7
  %v2975 = vsub.s32 0, %v2974
  %v2976 = vrot.slane %v2831, %v2975
  %v2978 = vadd.f32 %v2969, %v2976
  %v2979 = vxor.u32 %v2978, 2147483648
  %v2980 = vmul.f32 %v2979, 1.442695
  %v2981 = vpow.pop %v2980
  %v2982 = vadd.f32 %v2981, 1.0
  %v2983 = vrcp.pop %v2982
  %v2984 = vmul.f32 1.0, %v2983
  %v2985 = vtanh.pop %v2978
  %v2986 = vmul.f32 %v2984, 0.0
  %2988 = vrot.lane.b32.xlu0 %v2985, 64
  %v2989 = vpop.permute.xlu0 %2988
  %v2991 = vmul.f32 %v2984, %v2989
  %2993 = vrot.lane.b32.xlu0 %v2991, 32
  %v2994 = vpop.permute.xlu0 %2993
  %v2996 = vadd.f32 %v2986, %v2994
  %v2997 = vtanh.pop %v2996
  %2999 = vrot.lane.b32.xlu0 %v2997, 64
  %v3000 = vpop.permute.xlu0 %2999
  %v3002 = vmul.f32 %v2984, %v3000
  %3004 = vrot.lane.b32.xlu0 %v3002, 32
  %v3005 = vpop.permute.xlu0 %3004
  %v3006 = vsel %vm58, %v3005, 0
  %3008 = vmatprep.subr.mxu0 0.0
  %3009 = vmatpush1.msra.mxu0 %v2827
  %3010 = vmatprep.subr.mxu0 0.0
  %3011 = vmatpush1.msra.mxu0 %v2828
  %3012 = vmatprep.subr.mxu0 0.0
  %3013 = vmatpush1.msra.mxu0 %v2829
  %3014 = vmatprep.subr.mxu0 0.0
  %3015 = vmatpush1.msra.mxu0 %v2830
  %3016 = vmatprep.subr.mxu0 0.0
  %3017 = vmatpush1.msra.mxu0 0.0
  %3018 = vmatprep.subr.mxu0 0.0
  %3019 = vmatpush1.msra.mxu0 0.0
  %3020 = vmatprep.subr.mxu0 0.0
  %3021 = vmatpush1.msra.mxu0 0.0
  %3022 = vmatprep.subr.mxu0 0.0
  %3023 = vmatpush1.msra.mxu0 0.0
  %3024 = vmatprep.subr.mxu0 0.0
  %3025 = vmatpush1.msra.mxu0 0.0
  %3026 = vmatprep.subr.mxu0 0.0
  %3027 = vmatpush1.msra.mxu0 0.0
  %3028 = vmatprep.subr.mxu0 0.0
  %3029 = vmatpush1.msra.mxu0 0.0
  %3030 = vmatprep.subr.mxu0 0.0
  %3031 = vmatpush1.msra.mxu0 0.0
  %3032 = vmatprep.subr.mxu0 0.0
  %3033 = vmatpush1.msra.mxu0 0.0
  %3034 = vmatprep.subr.mxu0 0.0
  %3035 = vmatpush1.msra.mxu0 0.0
  %3036 = vmatprep.subr.mxu0 0.0
  %3037 = vmatpush1.msra.mxu0 0.0
  %3038 = vmatprep.subr.mxu0 0.0
  %3039 = vmatpush1.msra.mxu0 0.0
  %3040 = vmatprep.subr.mxu0 0.0
  %3041 = vmatpush1.msra.mxu0 0.0
  %3042 = vmatprep.subr.mxu0 0.0
  %3043 = vmatpush1.msra.mxu0 0.0
  %3044 = vmatprep.subr.mxu0 0.0
  %3045 = vmatpush1.msra.mxu0 0.0
  %3046 = vmatprep.subr.mxu0 0.0
  %3047 = vmatpush1.msra.mxu0 0.0
  %3048 = vmatprep.subr.mxu0 0.0
  %3049 = vmatpush1.msra.mxu0 0.0
  %3050 = vmatprep.subr.mxu0 0.0
  %3051 = vmatpush1.msra.mxu0 0.0
  %3052 = vmatprep.subr.mxu0 0.0
  %3053 = vmatpush1.msra.mxu0 0.0
  %3054 = vmatprep.subr.mxu0 0.0
  %3055 = vmatpush1.msra.mxu0 0.0
  %3056 = vmatprep.subr.mxu0 0.0
  %3057 = vmatpush1.msra.mxu0 0.0
  %3058 = vmatprep.subr.mxu0 0.0
  %3059 = vmatpush1.msra.mxu0 0.0
  %3060 = vmatprep.subr.mxu0 0.0
  %3061 = vmatpush1.msra.mxu0 0.0
  %3062 = vmatprep.subr.mxu0 0.0
  %3063 = vmatpush1.msra.mxu0 0.0
  %3064 = vmatprep.subr.mxu0 0.0
  %3065 = vmatpush1.msra.mxu0 0.0
  %3066 = vmatprep.subr.mxu0 0.0
  %3067 = vmatpush1.msra.mxu0 0.0
  %3068 = vmatprep.subr.mxu0 0.0
  %3069 = vmatpush1.msra.mxu0 0.0
  %3070 = vmatprep.subr.mxu0 0.0
  %3071 = vmatpush1.msra.mxu0 0.0
  %3072 = vmatprep.mubr.f32.mxu0 0.0
  %3073 = vmatmul.mubr.f32.gmra.mrb[0].mxu0 %v3006
  %v3074 = vpop.f32.mrb[0].mxu0
  %v3075 = vadd.f32 0.0, %v3074
  %v3076 = vpop.f32.mrb[0].mxu0
  %3077 = vdwg.mxu0
  %3078 = vmatprep.subr.mxu0 0.0
  %3079 = vmatpush1.msra.mxu0 %v2823
  %3080 = vmatprep.subr.mxu0 0.0
  %3081 = vmatpush1.msra.mxu0 %v2824
  %3082 = vmatprep.subr.mxu0 0.0
  %3083 = vmatpush1.msra.mxu0 %v2825
  %3084 = vmatprep.subr.mxu0 0.0
  %3085 = vmatpush1.msra.mxu0 %v2826
  %3086 = vmatprep.subr.mxu0 0.0
  %3087 = vmatpush1.msra.mxu0 0.0
  %3088 = vmatprep.subr.mxu0 0.0
  %3089 = vmatpush1.msra.mxu0 0.0
  %3090 = vmatprep.subr.mxu0 0.0
  %3091 = vmatpush1.msra.mxu0 0.0
  %3092 = vmatprep.subr.mxu0 0.0
  %3093 = vmatpush1.msra.mxu0 0.0
  %3094 = vmatprep.subr.mxu0 0.0
  %3095 = vmatpush1.msra.mxu0 0.0
  %3096 = vmatprep.subr.mxu0 0.0
  %3097 = vmatpush1.msra.mxu0 0.0
  %3098 = vmatprep.subr.mxu0 0.0
  %3099 = vmatpush1.msra.mxu0 0.0
  %3100 = vmatprep.subr.mxu0 0.0
  %3101 = vmatpush1.msra.mxu0 0.0
  %3102 = vmatprep.subr.mxu0 0.0
  %3103 = vmatpush1.msra.mxu0 0.0
  %3104 = vmatprep.subr.mxu0 0.0
  %3105 = vmatpush1.msra.mxu0 0.0
  %3106 = vmatprep.subr.mxu0 0.0
  %3107 = vmatpush1.msra.mxu0 0.0
  %3108 = vmatprep.subr.mxu0 0.0
  %3109 = vmatpush1.msra.mxu0 0.0
  %3110 = vmatprep.subr.mxu0 0.0
  %3111 = vmatpush1.msra.mxu0 0.0
  %3112 = vmatprep.subr.mxu0 0.0
  %3113 = vmatpush1.msra.mxu0 0.0
  %3114 = vmatprep.subr.mxu0 0.0
  %3115 = vmatpush1.msra.mxu0 0.0
  %3116 = vmatprep.subr.mxu0 0.0
  %3117 = vmatpush1.msra.mxu0 0.0
  %3118 = vmatprep.subr.mxu0 0.0
  %3119 = vmatpush1.msra.mxu0 0.0
  %3120 = vmatprep.subr.mxu0 0.0
  %3121 = vmatpush1.msra.mxu0 0.0
  %3122 = vmatprep.subr.mxu0 0.0
  %3123 = vmatpush1.msra.mxu0 0.0
  %3124 = vmatprep.subr.mxu0 0.0
  %3125 = vmatpush1.msra.mxu0 0.0
  %3126 = vmatprep.subr.mxu0 0.0
  %3127 = vmatpush1.msra.mxu0 0.0
  %3128 = vmatprep.subr.mxu0 0.0
  %3129 = vmatpush1.msra.mxu0 0.0
  %3130 = vmatprep.subr.mxu0 0.0
  %3131 = vmatpush1.msra.mxu0 0.0
  %3132 = vmatprep.subr.mxu0 0.0
  %3133 = vmatpush1.msra.mxu0 0.0
  %3134 = vmatprep.subr.mxu0 0.0
  %3135 = vmatpush1.msra.mxu0 0.0
  %3136 = vmatprep.subr.mxu0 0.0
  %3137 = vmatpush1.msra.mxu0 0.0
  %3138 = vmatprep.subr.mxu0 0.0
  %3139 = vmatpush1.msra.mxu0 0.0
  %3140 = vmatprep.subr.mxu0 0.0
  %3141 = vmatpush1.msra.mxu0 0.0
  %3142 = vmatprep.mubr.f32.mxu0 0.0
  %3143 = vmatmul.mubr.f32.gmra.mrb[0].mxu0 %v413
  %v3144 = vpop.f32.mrb[0].mxu0
  %v3145 = vadd.f32 %v3075, %v3144
  %v3146 = vpop.f32.mrb[0].mxu0
  %3147 = vdwg.mxu0
  %v3148 = vadd.f32 %v3145, %v2976
  %v3149 = vxor.u32 %v3148, 2147483648
  %v3150 = vmul.f32 %v3149, 1.442695
  %v3151 = vpow.pop %v3150
  %v3152 = vadd.f32 %v3151, 1.0
  %v3153 = vrcp.pop %v3152
  %v3154 = vmul.f32 1.0, %v3153
  %v3155 = vtanh.pop %v3148
  %v3156 = vmul.f32 %v3154, %v2996
  %3158 = vrot.lane.b32.xlu0 %v3155, 64
  %v3159 = vpop.permute.xlu0 %3158
  %v3161 = vmul.f32 %v3154, %v3159
  %3163 = vrot.lane.b32.xlu0 %v3161, 32
  %v3164 = vpop.permute.xlu0 %3163
  %v3166 = vadd.f32 %v3156, %v3164
  %v3167 = vtanh.pop %v3166
  %3169 = vrot.lane.b32.xlu0 %v3167, 64
  %v3170 = vpop.permute.xlu0 %3169
  %v3172 = vmul.f32 %v3154, %v3170
  %3174 = vrot.lane.b32.xlu0 %v3172, 32
  %v3175 = vpop.permute.xlu0 %3174
  %v3176 = vsel %vm58, %v3175, 0
  %3178 = vmatprep.subr.mxu0 0.0
  %3179 = vmatpush1.msra.mxu0 %v2827
  %3180 = vmatprep.subr.mxu0 0.0
  %3181 = vmatpush1.msra.mxu0 %v2828
  %3182 = vmatprep.subr.mxu0 0.0
  %3183 = vmatpush1.msra.mxu0 %v2829
  %3184 = vmatprep.subr.mxu0 0.0
  %3185 = vmatpush1.msra.mxu0 %v2830
  %3186 = vmatprep.subr.mxu0 0.0
  %3187 = vmatpush1.msra.mxu0 0.0
  %3188 = vmatprep.subr.mxu0 0.0
  %3189 = vmatpush1.msra.mxu0 0.0
  %3190 = vmatprep.subr.mxu0 0.0
  %3191 = vmatpush1.msra.mxu0 0.0
  %3192 = vmatprep.subr.mxu0 0.0
  %3193 = vmatpush1.msra.mxu0 0.0
  %3194 = vmatprep.subr.mxu0 0.0
  %3195 = vmatpush1.msra.mxu0 0.0
  %3196 = vmatprep.subr.mxu0 0.0
  %3197 = vmatpush1.msra.mxu0 0.0
  %3198 = vmatprep.subr.mxu0 0.0
  %3199 = vmatpush1.msra.mxu0 0.0
  %3200 = vmatprep.subr.mxu0 0.0
  %3201 = vmatpush1.msra.mxu0 0.0
  %3202 = vmatprep.subr.mxu0 0.0
  %3203 = vmatpush1.msra.mxu0 0.0
  %3204 = vmatprep.subr.mxu0 0.0
  %3205 = vmatpush1.msra.mxu0 0.0
  %3206 = vmatprep.subr.mxu0 0.0
  %3207 = vmatpush1.msra.mxu0 0.0
  %3208 = vmatprep.subr.mxu0 0.0
  %3209 = vmatpush1.msra.mxu0 0.0
  %3210 = vmatprep.subr.mxu0 0.0
  %3211 = vmatpush1.msra.mxu0 0.0
  %3212 = vmatprep.subr.mxu0 0.0
  %3213 = vmatpush1.msra.mxu0 0.0
  %3214 = vmatprep.subr.mxu0 0.0
  %3215 = vmatpush1.msra.mxu0 0.0
  %3216 = vmatprep.subr.mxu0 0.0
  %3217 = vmatpush1.msra.mxu0 0.0
  %3218 = vmatprep.subr.mxu0 0.0
  %3219 = vmatpush1.msra.mxu0 0.0
  %3220 = vmatprep.subr.mxu0 0.0
  %3221 = vmatpush1.msra.mxu0 0.0
  %3222 = vmatprep.subr.mxu0 0.0
  %3223 = vmatpush1.msra.mxu0 0.0
  %3224 = vmatprep.subr.mxu0 0.0
  %3225 = vmatpush1.msra.mxu0 0.0
  %3226 = vmatprep.subr.mxu0 0.0
  %3227 = vmatpush1.msra.mxu0 0.0
  %3228 = vmatprep.subr.mxu0 0.0
  %3229 = vmatpush1.msra.mxu0 0.0
  %3230 = vmatprep.subr.mxu0 0.0
  %3231 = vmatpush1.msra.mxu0 0.0
  %3232 = vmatprep.subr.mxu0 0.0
  %3233 = vmatpush1.msra.mxu0 0.0
  %3234 = vmatprep.subr.mxu0 0.0
  %3235 = vmatpush1.msra.mxu0 0.0
  %3236 = vmatprep.subr.mxu0 0.0
  %3237 = vmatpush1.msra.mxu0 0.0
  %3238 = vmatprep.subr.mxu0 0.0
  %3239 = vmatpush1.msra.mxu0 0.0
  %3240 = vmatprep.subr.mxu0 0.0
  %3241 = vmatpush1.msra.mxu0 0.0
  %3242 = vmatprep.mubr.f32.mxu0 0.0
  %3243 = vmatmul.mubr.f32.gmra.mrb[0].mxu0 %v3176
  %v3244 = vpop.f32.mrb[0].mxu0
  %v3245 = vadd.f32 0.0, %v3244
  %v3246 = vpop.f32.mrb[0].mxu0
  %3247 = vdwg.mxu0
  %3248 = vmatprep.subr.mxu0 0.0
  %3249 = vmatpush1.msra.mxu0 %v2823
  %3250 = vmatprep.subr.mxu0 0.0
  %3251 = vmatpush1.msra.mxu0 %v2824
  %3252 = vmatprep.subr.mxu0 0.0
  %3253 = vmatpush1.msra.mxu0 %v2825
  %3254 = vmatprep.subr.mxu0 0.0
  %3255 = vmatpush1.msra.mxu0 %v2826
  %3256 = vmatprep.subr.mxu0 0.0
  %3257 = vmatpush1.msra.mxu0 0.0
  %3258 = vmatprep.subr.mxu0 0.0
  %3259 = vmatpush1.msra.mxu0 0.0
  %3260 = vmatprep.subr.mxu0 0.0
  %3261 = vmatpush1.msra.mxu0 0.0
  %3262 = vmatprep.subr.mxu0 0.0
  %3263 = vmatpush1.msra.mxu0 0.0
  %3264 = vmatprep.subr.mxu0 0.0
  %3265 = vmatpush1.msra.mxu0 0.0
  %3266 = vmatprep.subr.mxu0 0.0
  %3267 = vmatpush1.msra.mxu0 0.0
  %3268 = vmatprep.subr.mxu0 0.0
  %3269 = vmatpush1.msra.mxu0 0.0
  %3270 = vmatprep.subr.mxu0 0.0
  %3271 = vmatpush1.msra.mxu0 0.0
  %3272 = vmatprep.subr.mxu0 0.0
  %3273 = vmatpush1.msra.mxu0 0.0
  %3274 = vmatprep.subr.mxu0 0.0
  %3275 = vmatpush1.msra.mxu0 0.0
  %3276 = vmatprep.subr.mxu0 0.0
  %3277 = vmatpush1.msra.mxu0 0.0
  %3278 = vmatprep.subr.mxu0 0.0
  %3279 = vmatpush1.msra.mxu0 0.0
  %3280 = vmatprep.subr.mxu0 0.0
  %3281 = vmatpush1.msra.mxu0 0.0
  %3282 = vmatprep.subr.mxu0 0.0
  %3283 = vmatpush1.msra.mxu0 0.0
  %3284 = vmatprep.subr.mxu0 0.0
  %3285 = vmatpush1.msra.mxu0 0.0
  %3286 = vmatprep.subr.mxu0 0.0
  %3287 = vmatpush1.msra.mxu0 0.0
  %3288 = vmatprep.subr.mxu0 0.0
  %3289 = vmatpush1.msra.mxu0 0.0
  %3290 = vmatprep.subr.mxu0 0.0
  %3291 = vmatpush1.msra.mxu0 0.0
  %3292 = vmatprep.subr.mxu0 0.0
  %3293 = vmatpush1.msra.mxu0 0.0
  %3294 = vmatprep.subr.mxu0 0.0
  %3295 = vmatpush1.msra.mxu0 0.0
  %3296 = vmatprep.subr.mxu0 0.0
  %3297 = vmatpush1.msra.mxu0 0.0
  %3298 = vmatprep.subr.mxu0 0.0
  %3299 = vmatpush1.msra.mxu0 0.0
  %3300 = vmatprep.subr.mxu0 0.0
  %3301 = vmatpush1.msra.mxu0 0.0
  %3302 = vmatprep.subr.mxu0 0.0
  %3303 = vmatpush1.msra.mxu0 0.0
  %3304 = vmatprep.subr.mxu0 0.0
  %3305 = vmatpush1.msra.mxu0 0.0
  %3306 = vmatprep.subr.mxu0 0.0
  %3307 = vmatpush1.msra.mxu0 0.0
  %3308 = vmatprep.subr.mxu0 0.0
  %3309 = vmatpush1.msra.mxu0 0.0
  %3310 = vmatprep.subr.mxu0 0.0
  %3311 = vmatpush1.msra.mxu0 0.0
  %3312 = vmatprep.mubr.f32.mxu0 0.0
  %3313 = vmatmul.mubr.f32.gmra.mrb[0].mxu0 %v586
  %v3314 = vpop.f32.mrb[0].mxu0
  %v3315 = vadd.f32 %v3245, %v3314
  %v3316 = vpop.f32.mrb[0].mxu0
  %3317 = vdwg.mxu0
  %v3318 = vadd.f32 %v3315, %v2976
  %v3319 = vxor.u32 %v3318, 2147483648
  %v3320 = vmul.f32 %v3319, 1.442695
  %v3321 = vpow.pop %v3320
  %v3322 = vadd.f32 %v3321, 1.0
  %v3323 = vrcp.pop %v3322
  %v3324 = vmul.f32 1.0, %v3323
  %v3325 = vtanh.pop %v3318
  %v3326 = vmul.f32 %v3324, %v3166
  %3328 = vrot.lane.b32.xlu0 %v3325, 64
  %v3329 = vpop.permute.xlu0 %3328
  %v3331 = vmul.f32 %v3324, %v3329
  %3333 = vrot.lane.b32.xlu0 %v3331, 32
  %v3334 = vpop.permute.xlu0 %3333
  %v3336 = vadd.f32 %v3326, %v3334
  %v3337 = vtanh.pop %v3336
  %3339 = vrot.lane.b32.xlu0 %v3337, 64
  %v3340 = vpop.permute.xlu0 %3339
  %v3342 = vmul.f32 %v3324, %v3340
  %3344 = vrot.lane.b32.xlu0 %v3342, 32
  %v3345 = vpop.permute.xlu0 %3344
  %v3346 = vsel %vm58, %v3345, 0
  %3348 = vmatprep.subr.mxu0 0.0
  %3349 = vmatpush1.msra.mxu0 %v2827
  %3350 = vmatprep.subr.mxu0 0.0
  %3351 = vmatpush1.msra.mxu0 %v2828
  %3352 = vmatprep.subr.mxu0 0.0
  %3353 = vmatpush1.msra.mxu0 %v2829
  %3354 = vmatprep.subr.mxu0 0.0
  %3355 = vmatpush1.msra.mxu0 %v2830
  %3356 = vmatprep.subr.mxu0 0.0
  %3357 = vmatpush1.msra.mxu0 0.0
  %3358 = vmatprep.subr.mxu0 0.0
  %3359 = vmatpush1.msra.mxu0 0.0
  %3360 = vmatprep.subr.mxu0 0.0
  %3361 = vmatpush1.msra.mxu0 0.0
  %3362 = vmatprep.subr.mxu0 0.0
  %3363 = vmatpush1.msra.mxu0 0.0
  %3364 = vmatprep.subr.mxu0 0.0
  %3365 = vmatpush1.msra.mxu0 0.0
  %3366 = vmatprep.subr.mxu0 0.0
  %3367 = vmatpush1.msra.mxu0 0.0
  %3368 = vmatprep.subr.mxu0 0.0
  %3369 = vmatpush1.msra.mxu0 0.0
  %3370 = vmatprep.subr.mxu0 0.0
  %3371 = vmatpush1.msra.mxu0 0.0
  %3372 = vmatprep.subr.mxu0 0.0
  %3373 = vmatpush1.msra.mxu0 0.0
  %3374 = vmatprep.subr.mxu0 0.0
  %3375 = vmatpush1.msra.mxu0 0.0
  %3376 = vmatprep.subr.mxu0 0.0
  %3377 = vmatpush1.msra.mxu0 0.0
  %3378 = vmatprep.subr.mxu0 0.0
  %3379 = vmatpush1.msra.mxu0 0.0
  %3380 = vmatprep.subr.mxu0 0.0
  %3381 = vmatpush1.msra.mxu0 0.0
  %3382 = vmatprep.subr.mxu0 0.0
  %3383 = vmatpush1.msra.mxu0 0.0
  %3384 = vmatprep.subr.mxu0 0.0
  %3385 = vmatpush1.msra.mxu0 0.0
  %3386 = vmatprep.subr.mxu0 0.0
  %3387 = vmatpush1.msra.mxu0 0.0
  %3388 = vmatprep.subr.mxu0 0.0
  %3389 = vmatpush1.msra.mxu0 0.0
  %3390 = vmatprep.subr.mxu0 0.0
  %3391 = vmatpush1.msra.mxu0 0.0
  %3392 = vmatprep.subr.mxu0 0.0
  %3393 = vmatpush1.msra.mxu0 0.0
  %3394 = vmatprep.subr.mxu0 0.0
  %3395 = vmatpush1.msra.mxu0 0.0
  %3396 = vmatprep.subr.mxu0 0.0
  %3397 = vmatpush1.msra.mxu0 0.0
  %3398 = vmatprep.subr.mxu0 0.0
  %3399 = vmatpush1.msra.mxu0 0.0
  %3400 = vmatprep.subr.mxu0 0.0
  %3401 = vmatpush1.msra.mxu0 0.0
  %3402 = vmatprep.subr.mxu0 0.0
  %3403 = vmatpush1.msra.mxu0 0.0
  %3404 = vmatprep.subr.mxu0 0.0
  %3405 = vmatpush1.msra.mxu0 0.0
  %3406 = vmatprep.subr.mxu0 0.0
  %3407 = vmatpush1.msra.mxu0 0.0
  %3408 = vmatprep.subr.mxu0 0.0
  %3409 = vmatpush1.msra.mxu0 0.0
  %3410 = vmatprep.subr.mxu0 0.0
  %3411 = vmatpush1.msra.mxu0 0.0
  %3412 = vmatprep.mubr.f32.mxu0 0.0
  %3413 = vmatmul.mubr.f32.gmra.mrb[0].mxu0 %v3346
  %v3414 = vpop.f32.mrb[0].mxu0
  %v3415 = vadd.f32 0.0, %v3414
  %v3416 = vpop.f32.mrb[0].mxu0
  %3417 = vdwg.mxu0
  %3418 = vmatprep.subr.mxu0 0.0
  %3419 = vmatpush1.msra.mxu0 %v2823
  %3420 = vmatprep.subr.mxu0 0.0
  %3421 = vmatpush1.msra.mxu0 %v2824
  %3422 = vmatprep.subr.mxu0 0.0
  %3423 = vmatpush1.msra.mxu0 %v2825
  %3424 = vmatprep.subr.mxu0 0.0
  %3425 = vmatpush1.msra.mxu0 %v2826
  %3426 = vmatprep.subr.mxu0 0.0
  %3427 = vmatpush1.msra.mxu0 0.0
  %3428 = vmatprep.subr.mxu0 0.0
  %3429 = vmatpush1.msra.mxu0 0.0
  %3430 = vmatprep.subr.mxu0 0.0
  %3431 = vmatpush1.msra.mxu0 0.0
  %3432 = vmatprep.subr.mxu0 0.0
  %3433 = vmatpush1.msra.mxu0 0.0
  %3434 = vmatprep.subr.mxu0 0.0
  %3435 = vmatpush1.msra.mxu0 0.0
  %3436 = vmatprep.subr.mxu0 0.0
  %3437 = vmatpush1.msra.mxu0 0.0
  %3438 = vmatprep.subr.mxu0 0.0
  %3439 = vmatpush1.msra.mxu0 0.0
  %3440 = vmatprep.subr.mxu0 0.0
  %3441 = vmatpush1.msra.mxu0 0.0
  %3442 = vmatprep.subr.mxu0 0.0
  %3443 = vmatpush1.msra.mxu0 0.0
  %3444 = vmatprep.subr.mxu0 0.0
  %3445 = vmatpush1.msra.mxu0 0.0
  %3446 = vmatprep.subr.mxu0 0.0
  %3447 = vmatpush1.msra.mxu0 0.0
  %3448 = vmatprep.subr.mxu0 0.0
  %3449 = vmatpush1.msra.mxu0 0.0
  %3450 = vmatprep.subr.mxu0 0.0
  %3451 = vmatpush1.msra.mxu0 0.0
  %3452 = vmatprep.subr.mxu0 0.0
  %3453 = vmatpush1.msra.mxu0 0.0
  %3454 = vmatprep.subr.mxu0 0.0
  %3455 = vmatpush1.msra.mxu0 0.0
  %3456 = vmatprep.subr.mxu0 0.0
  %3457 = vmatpush1.msra.mxu0 0.0
  %3458 = vmatprep.subr.mxu0 0.0
  %3459 = vmatpush1.msra.mxu0 0.0
  %3460 = vmatprep.subr.mxu0 0.0
  %3461 = vmatpush1.msra.mxu0 0.0
  %3462 = vmatprep.subr.mxu0 0.0
  %3463 = vmatpush1.msra.mxu0 0.0
  %3464 = vmatprep.subr.mxu0 0.0
  %3465 = vmatpush1.msra.mxu0 0.0
  %3466 = vmatprep.subr.mxu0 0.0
  %3467 = vmatpush1.msra.mxu0 0.0
  %3468 = vmatprep.subr.mxu0 0.0
  %3469 = vmatpush1.msra.mxu0 0.0
  %3470 = vmatprep.subr.mxu0 0.0
  %3471 = vmatpush1.msra.mxu0 0.0
  %3472 = vmatprep.subr.mxu0 0.0
  %3473 = vmatpush1.msra.mxu0 0.0
  %3474 = vmatprep.subr.mxu0 0.0
  %3475 = vmatpush1.msra.mxu0 0.0
  %3476 = vmatprep.subr.mxu0 0.0
  %3477 = vmatpush1.msra.mxu0 0.0
  %3478 = vmatprep.subr.mxu0 0.0
  %3479 = vmatpush1.msra.mxu0 0.0
  %3480 = vmatprep.subr.mxu0 0.0
  %3481 = vmatpush1.msra.mxu0 0.0
  %3482 = vmatprep.mubr.f32.mxu0 0.0
  %3483 = vmatmul.mubr.f32.gmra.mrb[0].mxu0 %v759
  %v3484 = vpop.f32.mrb[0].mxu0
  %v3485 = vadd.f32 %v3415, %v3484
  %v3486 = vpop.f32.mrb[0].mxu0
  %3487 = vdwg.mxu0
  %v3488 = vadd.f32 %v3485, %v2976
  %v3489 = vxor.u32 %v3488, 2147483648
  %v3490 = vmul.f32 %v3489, 1.442695
  %v3491 = vpow.pop %v3490
  %v3492 = vadd.f32 %v3491, 1.0
  %v3493 = vrcp.pop %v3492
  %v3494 = vmul.f32 1.0, %v3493
  %v3495 = vtanh.pop %v3488
  %v3496 = vmul.f32 %v3494, %v3336
  %3498 = vrot.lane.b32.xlu0 %v3495, 64
  %v3499 = vpop.permute.xlu0 %3498
  %v3501 = vmul.f32 %v3494, %v3499
  %3503 = vrot.lane.b32.xlu0 %v3501, 32
  %v3504 = vpop.permute.xlu0 %3503
  %v3506 = vadd.f32 %v3496, %v3504
  %v3507 = vtanh.pop %v3506
  %3509 = vrot.lane.b32.xlu0 %v3507, 64
  %v3510 = vpop.permute.xlu0 %3509
  %v3512 = vmul.f32 %v3494, %v3510
  %3514 = vrot.lane.b32.xlu0 %v3512, 32
  %v3515 = vpop.permute.xlu0 %3514
  %v3516 = vsel %vm58, %v3515, 0
  %3518 = vmatprep.subr.mxu0 0.0
  %3519 = vmatpush1.msra.mxu0 %v2827
  %3520 = vmatprep.subr.mxu0 0.0
  %3521 = vmatpush1.msra.mxu0 %v2828
  %3522 = vmatprep.subr.mxu0 0.0
  %3523 = vmatpush1.msra.mxu0 %v2829
  %3524 = vmatprep.subr.mxu0 0.0
  %3525 = vmatpush1.msra.mxu0 %v2830
  %3526 = vmatprep.subr.mxu0 0.0
  %3527 = vmatpush1.msra.mxu0 0.0
  %3528 = vmatprep.subr.mxu0 0.0
  %3529 = vmatpush1.msra.mxu0 0.0
  %3530 = vmatprep.subr.mxu0 0.0
  %3531 = vmatpush1.msra.mxu0 0.0
  %3532 = vmatprep.subr.mxu0 0.0
  %3533 = vmatpush1.msra.mxu0 0.0
  %3534 = vmatprep.subr.mxu0 0.0
  %3535 = vmatpush1.msra.mxu0 0.0
  %3536 = vmatprep.subr.mxu0 0.0
  %3537 = vmatpush1.msra.mxu0 0.0
  %3538 = vmatprep.subr.mxu0 0.0
  %3539 = vmatpush1.msra.mxu0 0.0
  %3540 = vmatprep.subr.mxu0 0.0
  %3541 = vmatpush1.msra.mxu0 0.0
  %3542 = vmatprep.subr.mxu0 0.0
  %3543 = vmatpush1.msra.mxu0 0.0
  %3544 = vmatprep.subr.mxu0 0.0
  %3545 = vmatpush1.msra.mxu0 0.0
  %3546 = vmatprep.subr.mxu0 0.0
  %3547 = vmatpush1.msra.mxu0 0.0
  %3548 = vmatprep.subr.mxu0 0.0
  %3549 = vmatpush1.msra.mxu0 0.0
  %3550 = vmatprep.subr.mxu0 0.0
  %3551 = vmatpush1.msra.mxu0 0.0
  %3552 = vmatprep.subr.mxu0 0.0
  %3553 = vmatpush1.msra.mxu0 0.0
  %3554 = vmatprep.subr.mxu0 0.0
  %3555 = vmatpush1.msra.mxu0 0.0
  %3556 = vmatprep.subr.mxu0 0.0
  %3557 = vmatpush1.msra.mxu0 0.0
  %3558 = vmatprep.subr.mxu0 0.0
  %3559 = vmatpush1.msra.mxu0 0.0
  %3560 = vmatprep.subr.mxu0 0.0
  %3561 = vmatpush1.msra.mxu0 0.0
  %3562 = vmatprep.subr.mxu0 0.0
  %3563 = vmatpush1.msra.mxu0 0.0
  %3564 = vmatprep.subr.mxu0 0.0
  %3565 = vmatpush1.msra.mxu0 0.0
  %3566 = vmatprep.subr.mxu0 0.0
  %3567 = vmatpush1.msra.mxu0 0.0
  %3568 = vmatprep.subr.mxu0 0.0
  %3569 = vmatpush1.msra.mxu0 0.0
  %3570 = vmatprep.subr.mxu0 0.0
  %3571 = vmatpush1.msra.mxu0 0.0
  %3572 = vmatprep.subr.mxu0 0.0
  %3573 = vmatpush1.msra.mxu0 0.0
  %3574 = vmatprep.subr.mxu0 0.0
  %3575 = vmatpush1.msra.mxu0 0.0
  %3576 = vmatprep.subr.mxu0 0.0
  %3577 = vmatpush1.msra.mxu0 0.0
  %3578 = vmatprep.subr.mxu0 0.0
  %3579 = vmatpush1.msra.mxu0 0.0
  %3580 = vmatprep.subr.mxu0 0.0
  %3581 = vmatpush1.msra.mxu0 0.0
  %3582 = vmatprep.mubr.f32.mxu0 0.0
  %3583 = vmatmul.mubr.f32.gmra.mrb[0].mxu0 %v3516
  %v3584 = vpop.f32.mrb[0].mxu0
  %v3585 = vadd.f32 0.0, %v3584
  %v3586 = vpop.f32.mrb[0].mxu0
  %3587 = vdwg.mxu0
  %3588 = vmatprep.subr.mxu0 0.0
  %3589 = vmatpush1.msra.mxu0 %v2823
  %3590 = vmatprep.subr.mxu0 0.0
  %3591 = vmatpush1.msra.mxu0 %v2824
  %3592 = vmatprep.subr.mxu0 0.0
  %3593 = vmatpush1.msra.mxu0 %v2825
  %3594 = vmatprep.subr.mxu0 0.0
  %3595 = vmatpush1.msra.mxu0 %v2826
  %3596 = vmatprep.subr.mxu0 0.0
  %3597 = vmatpush1.msra.mxu0 0.0
  %3598 = vmatprep.subr.mxu0 0.0
  %3599 = vmatpush1.msra.mxu0 0.0
  %3600 = vmatprep.subr.mxu0 0.0
  %3601 = vmatpush1.msra.mxu0 0.0
  %3602 = vmatprep.subr.mxu0 0.0
  %3603 = vmatpush1.msra.mxu0 0.0
  %3604 = vmatprep.subr.mxu0 0.0
  %3605 = vmatpush1.msra.mxu0 0.0
  %3606 = vmatprep.subr.mxu0 0.0
  %3607 = vmatpush1.msra.mxu0 0.0
  %3608 = vmatprep.subr.mxu0 0.0
  %3609 = vmatpush1.msra.mxu0 0.0
  %3610 = vmatprep.subr.mxu0 0.0
  %3611 = vmatpush1.msra.mxu0 0.0
  %3612 = vmatprep.subr.mxu0 0.0
  %3613 = vmatpush1.msra.mxu0 0.0
  %3614 = vmatprep.subr.mxu0 0.0
  %3615 = vmatpush1.msra.mxu0 0.0
  %3616 = vmatprep.subr.mxu0 0.0
  %3617 = vmatpush1.msra.mxu0 0.0
  %3618 = vmatprep.subr.mxu0 0.0
  %3619 = vmatpush1.msra.mxu0 0.0
  %3620 = vmatprep.subr.mxu0 0.0
  %3621 = vmatpush1.msra.mxu0 0.0
  %3622 = vmatprep.subr.mxu0 0.0
  %3623 = vmatpush1.msra.mxu0 0.0
  %3624 = vmatprep.subr.mxu0 0.0
  %3625 = vmatpush1.msra.mxu0 0.0
  %3626 = vmatprep.subr.mxu0 0.0
  %3627 = vmatpush1.msra.mxu0 0.0
  %3628 = vmatprep.subr.mxu0 0.0
  %3629 = vmatpush1.msra.mxu0 0.0
  %3630 = vmatprep.subr.mxu0 0.0
  %3631 = vmatpush1.msra.mxu0 0.0
  %3632 = vmatprep.subr.mxu0 0.0
  %3633 = vmatpush1.msra.mxu0 0.0
  %3634 = vmatprep.subr.mxu0 0.0
  %3635 = vmatpush1.msra.mxu0 0.0
  %3636 = vmatprep.subr.mxu0 0.0
  %3637 = vmatpush1.msra.mxu0 0.0
  %3638 = vmatprep.subr.mxu0 0.0
  %3639 = vmatpush1.msra.mxu0 0.0
  %3640 = vmatprep.subr.mxu0 0.0
  %3641 = vmatpush1.msra.mxu0 0.0
  %3642 = vmatprep.subr.mxu0 0.0
  %3643 = vmatpush1.msra.mxu0 0.0
  %3644 = vmatprep.subr.mxu0 0.0
  %3645 = vmatpush1.msra.mxu0 0.0
  %3646 = vmatprep.subr.mxu0 0.0
  %3647 = vmatpush1.msra.mxu0 0.0
  %3648 = vmatprep.subr.mxu0 0.0
  %3649 = vmatpush1.msra.mxu0 0.0
  %3650 = vmatprep.subr.mxu0 0.0
  %3651 = vmatpush1.msra.mxu0 0.0
  %3652 = vmatprep.mubr.f32.mxu0 0.0
  %3653 = vmatmul.mubr.f32.gmra.mrb[0].mxu0 %v932
  %v3654 = vpop.f32.mrb[0].mxu0
  %v3655 = vadd.f32 %v3585, %v3654
  %v3656 = vpop.f32.mrb[0].mxu0
  %3657 = vdwg.mxu0
  %v3658 = vadd.f32 %v3655, %v2976
  %v3659 = vxor.u32 %v3658, 2147483648
  %v3660 = vmul.f32 %v3659, 1.442695
  %v3661 = vpow.pop %v3660
  %v3662 = vadd.f32 %v3661, 1.0
  %v3663 = vrcp.pop %v3662
  %v3664 = vmul.f32 1.0, %v3663
  %v3665 = vtanh.pop %v3658
  %v3666 = vmul.f32 %v3664, %v3506
  %3668 = vrot.lane.b32.xlu0 %v3665, 64
  %v3669 = vpop.permute.xlu0 %3668
  %v3671 = vmul.f32 %v3664, %v3669
  %3673 = vrot.lane.b32.xlu0 %v3671, 32
  %v3674 = vpop.permute.xlu0 %3673
  %v3676 = vadd.f32 %v3666, %v3674
  %v3677 = vtanh.pop %v3676
  %3679 = vrot.lane.b32.xlu0 %v3677, 64
  %v3680 = vpop.permute.xlu0 %3679
  %v3682 = vmul.f32 %v3664, %v3680
  %3684 = vrot.lane.b32.xlu0 %v3682, 32
  %v3685 = vpop.permute.xlu0 %3684
  %v3686 = vsel %vm58, %v3685, 0
  %3688 = vmatprep.subr.mxu0 0.0
  %3689 = vmatpush1.msra.mxu0 %v2827
  %3690 = vmatprep.subr.mxu0 0.0
  %3691 = vmatpush1.msra.mxu0 %v2828
  %3692 = vmatprep.subr.mxu0 0.0
  %3693 = vmatpush1.msra.mxu0 %v2829
  %3694 = vmatprep.subr.mxu0 0.0
  %3695 = vmatpush1.msra.mxu0 %v2830
  %3696 = vmatprep.subr.mxu0 0.0
  %3697 = vmatpush1.msra.mxu0 0.0
  %3698 = vmatprep.subr.mxu0 0.0
  %3699 = vmatpush1.msra.mxu0 0.0
  %3700 = vmatprep.subr.mxu0 0.0
  %3701 = vmatpush1.msra.mxu0 0.0
  %3702 = vmatprep.subr.mxu0 0.0
  %3703 = vmatpush1.msra.mxu0 0.0
  %3704 = vmatprep.subr.mxu0 0.0
  %3705 = vmatpush1.msra.mxu0 0.0
  %3706 = vmatprep.subr.mxu0 0.0
  %3707 = vmatpush1.msra.mxu0 0.0
  %3708 = vmatprep.subr.mxu0 0.0
  %3709 = vmatpush1.msra.mxu0 0.0
  %3710 = vmatprep.subr.mxu0 0.0
  %3711 = vmatpush1.msra.mxu0 0.0
  %3712 = vmatprep.subr.mxu0 0.0
  %3713 = vmatpush1.msra.mxu0 0.0
  %3714 = vmatprep.subr.mxu0 0.0
  %3715 = vmatpush1.msra.mxu0 0.0
  %3716 = vmatprep.subr.mxu0 0.0
  %3717 = vmatpush1.msra.mxu0 0.0
  %3718 = vmatprep.subr.mxu0 0.0
  %3719 = vmatpush1.msra.mxu0 0.0
  %3720 = vmatprep.subr.mxu0 0.0
  %3721 = vmatpush1.msra.mxu0 0.0
  %3722 = vmatprep.subr.mxu0 0.0
  %3723 = vmatpush1.msra.mxu0 0.0
  %3724 = vmatprep.subr.mxu0 0.0
  %3725 = vmatpush1.msra.mxu0 0.0
  %3726 = vmatprep.subr.mxu0 0.0
  %3727 = vmatpush1.msra.mxu0 0.0
  %3728 = vmatprep.subr.mxu0 0.0
  %3729 = vmatpush1.msra.mxu0 0.0
  %3730 = vmatprep.subr.mxu0 0.0
  %3731 = vmatpush1.msra.mxu0 0.0
  %3732 = vmatprep.subr.mxu0 0.0
  %3733 = vmatpush1.msra.mxu0 0.0
  %3734 = vmatprep.subr.mxu0 0.0
  %3735 = vmatpush1.msra.mxu0 0.0
  %3736 = vmatprep.subr.mxu0 0.0
  %3737 = vmatpush1.msra.mxu0 0.0
  %3738 = vmatprep.subr.mxu0 0.0
  %3739 = vmatpush1.msra.mxu0 0.0
  %3740 = vmatprep.subr.mxu0 0.0
  %3741 = vmatpush1.msra.mxu0 0.0
  %3742 = vmatprep.subr.mxu0 0.0
  %3743 = vmatpush1.msra.mxu0 0.0
  %3744 = vmatprep.subr.mxu0 0.0
  %3745 = vmatpush1.msra.mxu0 0.0
  %3746 = vmatprep.subr.mxu0 0.0
  %3747 = vmatpush1.msra.mxu0 0.0
  %3748 = vmatprep.subr.mxu0 0.0
  %3749 = vmatpush1.msra.mxu0 0.0
  %3750 = vmatprep.subr.mxu0 0.0
  %3751 = vmatpush1.msra.mxu0 0.0
  %3752 = vmatprep.mubr.f32.mxu0 0.0
  %3753 = vmatmul.mubr.f32.gmra.mrb[0].mxu0 %v3686
  %v3754 = vpop.f32.mrb[0].mxu0
  %v3755 = vadd.f32 0.0, %v3754
  %v3756 = vpop.f32.mrb[0].mxu0
  %3757 = vdwg.mxu0
  %3758 = vmatprep.subr.mxu0 0.0
  %3759 = vmatpush1.msra.mxu0 %v2823
  %3760 = vmatprep.subr.mxu0 0.0
  %3761 = vmatpush1.msra.mxu0 %v2824
  %3762 = vmatprep.subr.mxu0 0.0
  %3763 = vmatpush1.msra.mxu0 %v2825
  %3764 = vmatprep.subr.mxu0 0.0
  %3765 = vmatpush1.msra.mxu0 %v2826
  %3766 = vmatprep.subr.mxu0 0.0
  %3767 = vmatpush1.msra.mxu0 0.0
  %3768 = vmatprep.subr.mxu0 0.0
  %3769 = vmatpush1.msra.mxu0 0.0
  %3770 = vmatprep.subr.mxu0 0.0
  %3771 = vmatpush1.msra.mxu0 0.0
  %3772 = vmatprep.subr.mxu0 0.0
  %3773 = vmatpush1.msra.mxu0 0.0
  %3774 = vmatprep.subr.mxu0 0.0
  %3775 = vmatpush1.msra.mxu0 0.0
  %3776 = vmatprep.subr.mxu0 0.0
  %3777 = vmatpush1.msra.mxu0 0.0
  %3778 = vmatprep.subr.mxu0 0.0
  %3779 = vmatpush1.msra.mxu0 0.0
  %3780 = vmatprep.subr.mxu0 0.0
  %3781 = vmatpush1.msra.mxu0 0.0
  %3782 = vmatprep.subr.mxu0 0.0
  %3783 = vmatpush1.msra.mxu0 0.0
  %3784 = vmatprep.subr.mxu0 0.0
  %3785 = vmatpush1.msra.mxu0 0.0
  %3786 = vmatprep.subr.mxu0 0.0
  %3787 = vmatpush1.msra.mxu0 0.0
  %3788 = vmatprep.subr.mxu0 0.0
  %3789 = vmatpush1.msra.mxu0 0.0
  %3790 = vmatprep.subr.mxu0 0.0
  %3791 = vmatpush1.msra.mxu0 0.0
  %3792 = vmatprep.subr.mxu0 0.0
  %3793 = vmatpush1.msra.mxu0 0.0
  %3794 = vmatprep.subr.mxu0 0.0
  %3795 = vmatpush1.msra.mxu0 0.0
  %3796 = vmatprep.subr.mxu0 0.0
  %3797 = vmatpush1.msra.mxu0 0.0
  %3798 = vmatprep.subr.mxu0 0.0
  %3799 = vmatpush1.msra.mxu0 0.0
  %3800 = vmatprep.subr.mxu0 0.0
  %3801 = vmatpush1.msra.mxu0 0.0
  %3802 = vmatprep.subr.mxu0 0.0
  %3803 = vmatpush1.msra.mxu0 0.0
  %3804 = vmatprep.subr.mxu0 0.0
  %3805 = vmatpush1.msra.mxu0 0.0
  %3806 = vmatprep.subr.mxu0 0.0
  %3807 = vmatpush1.msra.mxu0 0.0
  %3808 = vmatprep.subr.mxu0 0.0
  %3809 = vmatpush1.msra.mxu0 0.0
  %3810 = vmatprep.subr.mxu0 0.0
  %3811 = vmatpush1.msra.mxu0 0.0
  %3812 = vmatprep.subr.mxu0 0.0
  %3813 = vmatpush1.msra.mxu0 0.0
  %3814 = vmatprep.subr.mxu0 0.0
  %3815 = vmatpush1.msra.mxu0 0.0
  %3816 = vmatprep.subr.mxu0 0.0
  %3817 = vmatpush1.msra.mxu0 0.0
  %3818 = vmatprep.subr.mxu0 0.0
  %3819 = vmatpush1.msra.mxu0 0.0
  %3820 = vmatprep.subr.mxu0 0.0
  %3821 = vmatpush1.msra.mxu0 0.0
  %3822 = vmatprep.mubr.f32.mxu0 0.0
  %3823 = vmatmul.mubr.f32.gmra.mrb[0].mxu0 %v1105
  %v3824 = vpop.f32.mrb[0].mxu0
  %v3825 = vadd.f32 %v3755, %v3824
  %v3826 = vpop.f32.mrb[0].mxu0
  %3827 = vdwg.mxu0
  %v3828 = vadd.f32 %v3825, %v2976
  %v3829 = vxor.u32 %v3828, 2147483648
  %v3830 = vmul.f32 %v3829, 1.442695
  %v3831 = vpow.pop %v3830
  %v3832 = vadd.f32 %v3831, 1.0
  %v3833 = vrcp.pop %v3832
  %v3834 = vmul.f32 1.0, %v3833
  %v3835 = vtanh.pop %v3828
  %v3836 = vmul.f32 %v3834, %v3676
  %3838 = vrot.lane.b32.xlu0 %v3835, 64
  %v3839 = vpop.permute.xlu0 %3838
  %v3841 = vmul.f32 %v3834, %v3839
  %3843 = vrot.lane.b32.xlu0 %v3841, 32
  %v3844 = vpop.permute.xlu0 %3843
  %v3846 = vadd.f32 %v3836, %v3844
  %v3847 = vtanh.pop %v3846
  %3849 = vrot.lane.b32.xlu0 %v3847, 64
  %v3850 = vpop.permute.xlu0 %3849
  %v3852 = vmul.f32 %v3834, %v3850
  %3854 = vrot.lane.b32.xlu0 %v3852, 32
  %v3855 = vpop.permute.xlu0 %3854
  %v3856 = vsel %vm58, %v3855, 0
  %3858 = vmatprep.subr.mxu0 0.0
  %3859 = vmatpush1.msra.mxu0 %v2827
  %3860 = vmatprep.subr.mxu0 0.0
  %3861 = vmatpush1.msra.mxu0 %v2828
  %3862 = vmatprep.subr.mxu0 0.0
  %3863 = vmatpush1.msra.mxu0 %v2829
  %3864 = vmatprep.subr.mxu0 0.0
  %3865 = vmatpush1.msra.mxu0 %v2830
  %3866 = vmatprep.subr.mxu0 0.0
  %3867 = vmatpush1.msra.mxu0 0.0
  %3868 = vmatprep.subr.mxu0 0.0
  %3869 = vmatpush1.msra.mxu0 0.0
  %3870 = vmatprep.subr.mxu0 0.0
  %3871 = vmatpush1.msra.mxu0 0.0
  %3872 = vmatprep.subr.mxu0 0.0
  %3873 = vmatpush1.msra.mxu0 0.0
  %3874 = vmatprep.subr.mxu0 0.0
  %3875 = vmatpush1.msra.mxu0 0.0
  %3876 = vmatprep.subr.mxu0 0.0
  %3877 = vmatpush1.msra.mxu0 0.0
  %3878 = vmatprep.subr.mxu0 0.0
  %3879 = vmatpush1.msra.mxu0 0.0
  %3880 = vmatprep.subr.mxu0 0.0
  %3881 = vmatpush1.msra.mxu0 0.0
  %3882 = vmatprep.subr.mxu0 0.0
  %3883 = vmatpush1.msra.mxu0 0.0
  %3884 = vmatprep.subr.mxu0 0.0
  %3885 = vmatpush1.msra.mxu0 0.0
  %3886 = vmatprep.subr.mxu0 0.0
  %3887 = vmatpush1.msra.mxu0 0.0
  %3888 = vmatprep.subr.mxu0 0.0
  %3889 = vmatpush1.msra.mxu0 0.0
  %3890 = vmatprep.subr.mxu0 0.0
  %3891 = vmatpush1.msra.mxu0 0.0
  %3892 = vmatprep.subr.mxu0 0.0
  %3893 = vmatpush1.msra.mxu0 0.0
  %3894 = vmatprep.subr.mxu0 0.0
  %3895 = vmatpush1.msra.mxu0 0.0
  %3896 = vmatprep.subr.mxu0 0.0
  %3897 = vmatpush1.msra.mxu0 0.0
  %3898 = vmatprep.subr.mxu0 0.0
  %3899 = vmatpush1.msra.mxu0 0.0
  %3900 = vmatprep.subr.mxu0 0.0
  %3901 = vmatpush1.msra.mxu0 0.0
  %3902 = vmatprep.subr.mxu0 0.0
  %3903 = vmatpush1.msra.mxu0 0.0
  %3904 = vmatprep.subr.mxu0 0.0
  %3905 = vmatpush1.msra.mxu0 0.0
  %3906 = vmatprep.subr.mxu0 0.0
  %3907 = vmatpush1.msra.mxu0 0.0
  %3908 = vmatprep.subr.mxu0 0.0
  %3909 = vmatpush1.msra.mxu0 0.0
  %3910 = vmatprep.subr.mxu0 0.0
  %3911 = vmatpush1.msra.mxu0 0.0
  %3912 = vmatprep.subr.mxu0 0.0
  %3913 = vmatpush1.msra.mxu0 0.0
  %3914 = vmatprep.subr.mxu0 0.0
  %3915 = vmatpush1.msra.mxu0 0.0
  %3916 = vmatprep.subr.mxu0 0.0
  %3917 = vmatpush1.msra.mxu0 0.0
  %3918 = vmatprep.subr.mxu0 0.0
  %3919 = vmatpush1.msra.mxu0 0.0
  %3920 = vmatprep.subr.mxu0 0.0
  %3921 = vmatpush1.msra.mxu0 0.0
  %3922 = vmatprep.mubr.f32.mxu0 0.0
  %3923 = vmatmul.mubr.f32.gmra.mrb[0].mxu0 %v3856
  %v3924 = vpop.f32.mrb[0].mxu0
  %v3925 = vadd.f32 0.0, %v3924
  %v3926 = vpop.f32.mrb[0].mxu0
  %3927 = vdwg.mxu0
  %3928 = vmatprep.subr.mxu0 0.0
  %3929 = vmatpush1.msra.mxu0 %v2823
  %3930 = vmatprep.subr.mxu0 0.0
  %3931 = vmatpush1.msra.mxu0 %v2824
  %3932 = vmatprep.subr.mxu0 0.0
  %3933 = vmatpush1.msra.mxu0 %v2825
  %3934 = vmatprep.subr.mxu0 0.0
  %3935 = vmatpush1.msra.mxu0 %v2826
  %3936 = vmatprep.subr.mxu0 0.0
  %3937 = vmatpush1.msra.mxu0 0.0
  %3938 = vmatprep.subr.mxu0 0.0
  %3939 = vmatpush1.msra.mxu0 0.0
  %3940 = vmatprep.subr.mxu0 0.0
  %3941 = vmatpush1.msra.mxu0 0.0
  %3942 = vmatprep.subr.mxu0 0.0
  %3943 = vmatpush1.msra.mxu0 0.0
  %3944 = vmatprep.subr.mxu0 0.0
  %3945 = vmatpush1.msra.mxu0 0.0
  %3946 = vmatprep.subr.mxu0 0.0
  %3947 = vmatpush1.msra.mxu0 0.0
  %3948 = vmatprep.subr.mxu0 0.0
  %3949 = vmatpush1.msra.mxu0 0.0
  %3950 = vmatprep.subr.mxu0 0.0
  %3951 = vmatpush1.msra.mxu0 0.0
  %3952 = vmatprep.subr.mxu0 0.0
  %3953 = vmatpush1.msra.mxu0 0.0
  %3954 = vmatprep.subr.mxu0 0.0
  %3955 = vmatpush1.msra.mxu0 0.0
  %3956 = vmatprep.subr.mxu0 0.0
  %3957 = vmatpush1.msra.mxu0 0.0
  %3958 = vmatprep.subr.mxu0 0.0
  %3959 = vmatpush1.msra.mxu0 0.0
  %3960 = vmatprep.subr.mxu0 0.0
  %3961 = vmatpush1.msra.mxu0 0.0
  %3962 = vmatprep.subr.mxu0 0.0
  %3963 = vmatpush1.msra.mxu0 0.0
  %3964 = vmatprep.subr.mxu0 0.0
  %3965 = vmatpush1.msra.mxu0 0.0
  %3966 = vmatprep.subr.mxu0 0.0
  %3967 = vmatpush1.msra.mxu0 0.0
  %3968 = vmatprep.subr.mxu0 0.0
  %3969 = vmatpush1.msra.mxu0 0.0
  %3970 = vmatprep.subr.mxu0 0.0
  %3971 = vmatpush1.msra.mxu0 0.0
  %3972 = vmatprep.subr.mxu0 0.0
  %3973 = vmatpush1.msra.mxu0 0.0
  %3974 = vmatprep.subr.mxu0 0.0
  %3975 = vmatpush1.msra.mxu0 0.0
  %3976 = vmatprep.subr.mxu0 0.0
  %3977 = vmatpush1.msra.mxu0 0.0
  %3978 = vmatprep.subr.mxu0 0.0
  %3979 = vmatpush1.msra.mxu0 0.0
  %3980 = vmatprep.subr.mxu0 0.0
  %3981 = vmatpush1.msra.mxu0 0.0
  %3982 = vmatprep.subr.mxu0 0.0
  %3983 = vmatpush1.msra.mxu0 0.0
  %3984 = vmatprep.subr.mxu0 0.0
  %3985 = vmatpush1.msra.mxu0 0.0
  %3986 = vmatprep.subr.mxu0 0.0
  %3987 = vmatpush1.msra.mxu0 0.0
  %3988 = vmatprep.subr.mxu0 0.0
  %3989 = vmatpush1.msra.mxu0 0.0
  %3990 = vmatprep.subr.mxu0 0.0
  %3991 = vmatpush1.msra.mxu0 0.0
  %3992 = vmatprep.mubr.f32.mxu0 0.0
  %3993 = vmatmul.mubr.f32.gmra.mrb[0].mxu0 %v1278
  %v3994 = vpop.f32.mrb[0].mxu0
  %v3995 = vadd.f32 %v3925, %v3994
  %v3996 = vpop.f32.mrb[0].mxu0
  %3997 = vdwg.mxu0
  %v3998 = vadd.f32 %v3995, %v2976
  %v3999 = vxor.u32 %v3998, 2147483648
  %v4000 = vmul.f32 %v3999, 1.442695
  %v4001 = vpow.pop %v4000
  %v4002 = vadd.f32 %v4001, 1.0
  %v4003 = vrcp.pop %v4002
  %v4004 = vmul.f32 1.0, %v4003
  %v4005 = vtanh.pop %v3998
  %v4006 = vmul.f32 %v4004, %v3846
  %4008 = vrot.lane.b32.xlu0 %v4005, 64
  %v4009 = vpop.permute.xlu0 %4008
  %v4011 = vmul.f32 %v4004, %v4009
  %4013 = vrot.lane.b32.xlu0 %v4011, 32
  %v4014 = vpop.permute.xlu0 %4013
  %v4016 = vadd.f32 %v4006, %v4014
  %v4017 = vtanh.pop %v4016
  %4019 = vrot.lane.b32.xlu0 %v4017, 64
  %v4020 = vpop.permute.xlu0 %4019
  %v4022 = vmul.f32 %v4004, %v4020
  %4024 = vrot.lane.b32.xlu0 %v4022, 32
  %v4025 = vpop.permute.xlu0 %4024
  %v4026 = vsel %vm58, %v4025, 0
  %4028 = vmatprep.subr.mxu0 0.0
  %4029 = vmatpush1.msra.mxu0 %v2827
  %4030 = vmatprep.subr.mxu0 0.0
  %4031 = vmatpush1.msra.mxu0 %v2828
  %4032 = vmatprep.subr.mxu0 0.0
  %4033 = vmatpush1.msra.mxu0 %v2829
  %4034 = vmatprep.subr.mxu0 0.0
  %4035 = vmatpush1.msra.mxu0 %v2830
  %4036 = vmatprep.subr.mxu0 0.0
  %4037 = vmatpush1.msra.mxu0 0.0
  %4038 = vmatprep.subr.mxu0 0.0
  %4039 = vmatpush1.msra.mxu0 0.0
  %4040 = vmatprep.subr.mxu0 0.0
  %4041 = vmatpush1.msra.mxu0 0.0
  %4042 = vmatprep.subr.mxu0 0.0
  %4043 = vmatpush1.msra.mxu0 0.0
  %4044 = vmatprep.subr.mxu0 0.0
  %4045 = vmatpush1.msra.mxu0 0.0
  %4046 = vmatprep.subr.mxu0 0.0
  %4047 = vmatpush1.msra.mxu0 0.0
  %4048 = vmatprep.subr.mxu0 0.0
  %4049 = vmatpush1.msra.mxu0 0.0
  %4050 = vmatprep.subr.mxu0 0.0
  %4051 = vmatpush1.msra.mxu0 0.0
  %4052 = vmatprep.subr.mxu0 0.0
  %4053 = vmatpush1.msra.mxu0 0.0
  %4054 = vmatprep.subr.mxu0 0.0
  %4055 = vmatpush1.msra.mxu0 0.0
  %4056 = vmatprep.subr.mxu0 0.0
  %4057 = vmatpush1.msra.mxu0 0.0
  %4058 = vmatprep.subr.mxu0 0.0
  %4059 = vmatpush1.msra.mxu0 0.0
  %4060 = vmatprep.subr.mxu0 0.0
  %4061 = vmatpush1.msra.mxu0 0.0
  %4062 = vmatprep.subr.mxu0 0.0
  %4063 = vmatpush1.msra.mxu0 0.0
  %4064 = vmatprep.subr.mxu0 0.0
  %4065 = vmatpush1.msra.mxu0 0.0
  %4066 = vmatprep.subr.mxu0 0.0
  %4067 = vmatpush1.msra.mxu0 0.0
  %4068 = vmatprep.subr.mxu0 0.0
  %4069 = vmatpush1.msra.mxu0 0.0
  %4070 = vmatprep.subr.mxu0 0.0
  %4071 = vmatpush1.msra.mxu0 0.0
  %4072 = vmatprep.subr.mxu0 0.0
  %4073 = vmatpush1.msra.mxu0 0.0
  %4074 = vmatprep.subr.mxu0 0.0
  %4075 = vmatpush1.msra.mxu0 0.0
  %4076 = vmatprep.subr.mxu0 0.0
  %4077 = vmatpush1.msra.mxu0 0.0
  %4078 = vmatprep.subr.mxu0 0.0
  %4079 = vmatpush1.msra.mxu0 0.0
  %4080 = vmatprep.subr.mxu0 0.0
  %4081 = vmatpush1.msra.mxu0 0.0
  %4082 = vmatprep.subr.mxu0 0.0
  %4083 = vmatpush1.msra.mxu0 0.0
  %4084 = vmatprep.subr.mxu0 0.0
  %4085 = vmatpush1.msra.mxu0 0.0
  %4086 = vmatprep.subr.mxu0 0.0
  %4087 = vmatpush1.msra.mxu0 0.0
  %4088 = vmatprep.subr.mxu0 0.0
  %4089 = vmatpush1.msra.mxu0 0.0
  %4090 = vmatprep.subr.mxu0 0.0
  %4091 = vmatpush1.msra.mxu0 0.0
  %4092 = vmatprep.mubr.f32.mxu0 0.0
  %4093 = vmatmul.mubr.f32.gmra.mrb[0].mxu0 %v4026
  %v4094 = vpop.f32.mrb[0].mxu0
  %v4095 = vadd.f32 0.0, %v4094
  %v4096 = vpop.f32.mrb[0].mxu0
  %4097 = vdwg.mxu0
  %4098 = vmatprep.subr.mxu0 0.0
  %4099 = vmatpush1.msra.mxu0 %v2823
  %4100 = vmatprep.subr.mxu0 0.0
  %4101 = vmatpush1.msra.mxu0 %v2824
  %4102 = vmatprep.subr.mxu0 0.0
  %4103 = vmatpush1.msra.mxu0 %v2825
  %4104 = vmatprep.subr.mxu0 0.0
  %4105 = vmatpush1.msra.mxu0 %v2826
  %4106 = vmatprep.subr.mxu0 0.0
  %4107 = vmatpush1.msra.mxu0 0.0
  %4108 = vmatprep.subr.mxu0 0.0
  %4109 = vmatpush1.msra.mxu0 0.0
  %4110 = vmatprep.subr.mxu0 0.0
  %4111 = vmatpush1.msra.mxu0 0.0
  %4112 = vmatprep.subr.mxu0 0.0
  %4113 = vmatpush1.msra.mxu0 0.0
  %4114 = vmatprep.subr.mxu0 0.0
  %4115 = vmatpush1.msra.mxu0 0.0
  %4116 = vmatprep.subr.mxu0 0.0
  %4117 = vmatpush1.msra.mxu0 0.0
  %4118 = vmatprep.subr.mxu0 0.0
  %4119 = vmatpush1.msra.mxu0 0.0
  %4120 = vmatprep.subr.mxu0 0.0
  %4121 = vmatpush1.msra.mxu0 0.0
  %4122 = vmatprep.subr.mxu0 0.0
  %4123 = vmatpush1.msra.mxu0 0.0
  %4124 = vmatprep.subr.mxu0 0.0
  %4125 = vmatpush1.msra.mxu0 0.0
  %4126 = vmatprep.subr.mxu0 0.0
  %4127 = vmatpush1.msra.mxu0 0.0
  %4128 = vmatprep.subr.mxu0 0.0
  %4129 = vmatpush1.msra.mxu0 0.0
  %4130 = vmatprep.subr.mxu0 0.0
  %4131 = vmatpush1.msra.mxu0 0.0
  %4132 = vmatprep.subr.mxu0 0.0
  %4133 = vmatpush1.msra.mxu0 0.0
  %4134 = vmatprep.subr.mxu0 0.0
  %4135 = vmatpush1.msra.mxu0 0.0
  %4136 = vmatprep.subr.mxu0 0.0
  %4137 = vmatpush1.msra.mxu0 0.0
  %4138 = vmatprep.subr.mxu0 0.0
  %4139 = vmatpush1.msra.mxu0 0.0
  %4140 = vmatprep.subr.mxu0 0.0
  %4141 = vmatpush1.msra.mxu0 0.0
  %4142 = vmatprep.subr.mxu0 0.0
  %4143 = vmatpush1.msra.mxu0 0.0
  %4144 = vmatprep.subr.mxu0 0.0
  %4145 = vmatpush1.msra.mxu0 0.0
  %4146 = vmatprep.subr.mxu0 0.0
  %4147 = vmatpush1.msra.mxu0 0.0
  %4148 = vmatprep.subr.mxu0 0.0
  %4149 = vmatpush1.msra.mxu0 0.0
  %4150 = vmatprep.subr.mxu0 0.0
  %4151 = vmatpush1.msra.mxu0 0.0
  %4152 = vmatprep.subr.mxu0 0.0
  %4153 = vmatpush1.msra.mxu0 0.0
  %4154 = vmatprep.subr.mxu0 0.0
  %4155 = vmatpush1.msra.mxu0 0.0
  %4156 = vmatprep.subr.mxu0 0.0
  %4157 = vmatpush1.msra.mxu0 0.0
  %4158 = vmatprep.subr.mxu0 0.0
  %4159 = vmatpush1.msra.mxu0 0.0
  %4160 = vmatprep.subr.mxu0 0.0
  %4161 = vmatpush1.msra.mxu0 0.0
  %4162 = vmatprep.mubr.f32.mxu0 0.0
  %4163 = vmatmul.mubr.f32.gmra.mrb[0].mxu0 %v2726
  %v4164 = vpop.f32.mrb[0].mxu0
  %v4165 = vadd.f32 %v4095, %v4164
  %v4166 = vpop.f32.mrb[0].mxu0
  %4167 = vdwg.mxu0
  %v4168 = vadd.f32 %v4165, %v2976
  %v4169 = vxor.u32 %v4168, 2147483648
  %v4170 = vmul.f32 %v4169, 1.442695
  %v4171 = vpow.pop %v4170
  %v4172 = vadd.f32 %v4171, 1.0
  %v4173 = vrcp.pop %v4172
  %v4174 = vmul.f32 1.0, %v4173
  %v4175 = vtanh.pop %v4168
  %v4176 = vmul.f32 %v4174, %v4016
  %4178 = vrot.lane.b32.xlu0 %v4175, 64
  %v4179 = vpop.permute.xlu0 %4178
  %v4181 = vmul.f32 %v4174, %v4179
  %4183 = vrot.lane.b32.xlu0 %v4181, 32
  %v4184 = vpop.permute.xlu0 %4183
  %v4186 = vadd.f32 %v4176, %v4184
  %v4187 = vtanh.pop %v4186
  %4189 = vrot.lane.b32.xlu0 %v4187, 64
  %v4190 = vpop.permute.xlu0 %4189
  %v4192 = vmul.f32 %v4174, %v4190
  %v4193 = vld [vmem:[%s10] sm:$0xff]
  %v4194 = vld [vmem:[%s10 + $0x8] sm:$0xff]
  %v4195 = vld [vmem:[%s10 + $0x10] sm:$0xff]
  %v4196 = vld [vmem:[%s10 + $0x18] sm:$0xff]
  %v4197 = vld [vmem:[%s11] sm:$0xff]
  %v4198 = vld [vmem:[%s11 + $0x8] sm:$0xff]
  %v4199 = vld [vmem:[%s11 + $0x10] sm:$0xff]
  %v4200 = vld [vmem:[%s11 + $0x18] sm:$0xff]
  %4202 = vrot.lane.b32.xlu0 %v4192, 32
  %v4203 = vpop.permute.xlu0 %4202
  %v4204 = vsel %vm58, %v4203, 0
  %4206 = vmatprep.subr.mxu0 0.0
  %4207 = vmatpush1.msra.mxu0 %v4197
  %4208 = vmatprep.subr.mxu0 0.0
  %4209 = vmatpush1.msra.mxu0 %v4198
  %4210 = vmatprep.subr.mxu0 0.0
  %4211 = vmatpush1.msra.mxu0 %v4199
  %4212 = vmatprep.subr.mxu0 0.0
  %4213 = vmatpush1.msra.mxu0 %v4200
  %4214 = vmatprep.subr.mxu0 0.0
  %4215 = vmatpush1.msra.mxu0 0.0
  %4216 = vmatprep.subr.mxu0 0.0
  %4217 = vmatpush1.msra.mxu0 0.0
  %4218 = vmatprep.subr.mxu0 0.0
  %4219 = vmatpush1.msra.mxu0 0.0
  %4220 = vmatprep.subr.mxu0 0.0
  %4221 = vmatpush1.msra.mxu0 0.0
  %4222 = vmatprep.subr.mxu0 0.0
  %4223 = vmatpush1.msra.mxu0 0.0
  %4224 = vmatprep.subr.mxu0 0.0
  %4225 = vmatpush1.msra.mxu0 0.0
  %4226 = vmatprep.subr.mxu0 0.0
  %4227 = vmatpush1.msra.mxu0 0.0
  %4228 = vmatprep.subr.mxu0 0.0
  %4229 = vmatpush1.msra.mxu0 0.0
  %4230 = vmatprep.subr.mxu0 0.0
  %4231 = vmatpush1.msra.mxu0 0.0
  %4232 = vmatprep.subr.mxu0 0.0
  %4233 = vmatpush1.msra.mxu0 0.0
  %4234 = vmatprep.subr.mxu0 0.0
  %4235 = vmatpush1.msra.mxu0 0.0
  %4236 = vmatprep.subr.mxu0 0.0
  %4237 = vmatpush1.msra.mxu0 0.0
  %4238 = vmatprep.subr.mxu0 0.0
  %4239 = vmatpush1.msra.mxu0 0.0
  %4240 = vmatprep.subr.mxu0 0.0
  %4241 = vmatpush1.msra.mxu0 0.0
  %4242 = vmatprep.subr.mxu0 0.0
  %4243 = vmatpush1.msra.mxu0 0.0
  %4244 = vmatprep.subr.mxu0 0.0
  %4245 = vmatpush1.msra.mxu0 0.0
  %4246 = vmatprep.subr.mxu0 0.0
  %4247 = vmatpush1.msra.mxu0 0.0
  %4248 = vmatprep.subr.mxu0 0.0
  %4249 = vmatpush1.msra.mxu0 0.0
  %4250 = vmatprep.subr.mxu0 0.0
  %4251 = vmatpush1.msra.mxu0 0.0
  %4252 = vmatprep.subr.mxu0 0.0
  %4253 = vmatpush1.msra.mxu0 0.0
  %4254 = vmatprep.subr.mxu0 0.0
  %4255 = vmatpush1.msra.mxu0 0.0
  %4256 = vmatprep.subr.mxu0 0.0
  %4257 = vmatpush1.msra.mxu0 0.0
  %4258 = vmatprep.subr.mxu0 0.0
  %4259 = vmatpush1.msra.mxu0 0.0
  %4260 = vmatprep.subr.mxu0 0.0
  %4261 = vmatpush1.msra.mxu0 0.0
  %4262 = vmatprep.subr.mxu0 0.0
  %4263 = vmatpush1.msra.mxu0 0.0
  %4264 = vmatprep.subr.mxu0 0.0
  %4265 = vmatpush1.msra.mxu0 0.0
  %4266 = vmatprep.subr.mxu0 0.0
  %4267 = vmatpush1.msra.mxu0 0.0
  %4268 = vmatprep.subr.mxu0 0.0
  %4269 = vmatpush1.msra.mxu0 0.0
  %4270 = vmatprep.mubr.f32.mxu0 0.0
  %4271 = vmatmul.mubr.f32.gmra.mrb[0].mxu0 %v4204
  %v4272 = vpop.f32.mrb[0].mxu0
  %v4273 = vadd.f32 0.0, %v4272
  %v4274 = vpop.f32.mrb[0].mxu0
  %4275 = vdwg.mxu0
  %4277 = vrot.lane.b32.xlu0 %v2822, 32
  %v4278 = vpop.permute.xlu0 %4277
  %v4279 = vsel %vm58, %v4278, 0
  %4281 = vmatprep.subr.mxu0 0.0
  %4282 = vmatpush1.msra.mxu0 %v4193
  %4283 = vmatprep.subr.mxu0 0.0
  %4284 = vmatpush1.msra.mxu0 %v4194
  %4285 = vmatprep.subr.mxu0 0.0
  %4286 = vmatpush1.msra.mxu0 %v4195
  %4287 = vmatprep.subr.mxu0 0.0
  %4288 = vmatpush1.msra.mxu0 %v4196
  %4289 = vmatprep.subr.mxu0 0.0
  %4290 = vmatpush1.msra.mxu0 0.0
  %4291 = vmatprep.subr.mxu0 0.0
  %4292 = vmatpush1.msra.mxu0 0.0
  %4293 = vmatprep.subr.mxu0 0.0
  %4294 = vmatpush1.msra.mxu0 0.0
  %4295 = vmatprep.subr.mxu0 0.0
  %4296 = vmatpush1.msra.mxu0 0.0
  %4297 = vmatprep.subr.mxu0 0.0
  %4298 = vmatpush1.msra.mxu0 0.0
  %4299 = vmatprep.subr.mxu0 0.0
  %4300 = vmatpush1.msra.mxu0 0.0
  %4301 = vmatprep.subr.mxu0 0.0
  %4302 = vmatpush1.msra.mxu0 0.0
  %4303 = vmatprep.subr.mxu0 0.0
  %4304 = vmatpush1.msra.mxu0 0.0
  %4305 = vmatprep.subr.mxu0 0.0
  %4306 = vmatpush1.msra.mxu0 0.0
  %4307 = vmatprep.subr.mxu0 0.0
  %4308 = vmatpush1.msra.mxu0 0.0
  %4309 = vmatprep.subr.mxu0 0.0
  %4310 = vmatpush1.msra.mxu0 0.0
  %4311 = vmatprep.subr.mxu0 0.0
  %4312 = vmatpush1.msra.mxu0 0.0
  %4313 = vmatprep.subr.mxu0 0.0
  %4314 = vmatpush1.msra.mxu0 0.0
  %4315 = vmatprep.subr.mxu0 0.0
  %4316 = vmatpush1.msra.mxu0 0.0
  %4317 = vmatprep.subr.mxu0 0.0
  %4318 = vmatpush1.msra.mxu0 0.0
  %4319 = vmatprep.subr.mxu0 0.0
  %4320 = vmatpush1.msra.mxu0 0.0
  %4321 = vmatprep.subr.mxu0 0.0
  %4322 = vmatpush1.msra.mxu0 0.0
  %4323 = vmatprep.subr.mxu0 0.0
  %4324 = vmatpush1.msra.mxu0 0.0
  %4325 = vmatprep.subr.mxu0 0.0
  %4326 = vmatpush1.msra.mxu0 0.0
  %4327 = vmatprep.subr.mxu0 0.0
  %4328 = vmatpush1.msra.mxu0 0.0
  %4329 = vmatprep.subr.mxu0 0.0
  %4330 = vmatpush1.msra.mxu0 0.0
  %4331 = vmatprep.subr.mxu0 0.0
  %4332 = vmatpush1.msra.mxu0 0.0
  %4333 = vmatprep.subr.mxu0 0.0
  %4334 = vmatpush1.msra.mxu0 0.0
  %4335 = vmatprep.subr.mxu0 0.0
  %4336 = vmatpush1.msra.mxu0 0.0
  %4337 = vmatprep.subr.mxu0 0.0
  %4338 = vmatpush1.msra.mxu0 0.0
  %4339 = vmatprep.subr.mxu0 0.0
  %4340 = vmatpush1.msra.mxu0 0.0
  %4341 = vmatprep.subr.mxu0 0.0
  %4342 = vmatpush1.msra.mxu0 0.0
  %4343 = vmatprep.subr.mxu0 0.0
  %4344 = vmatpush1.msra.mxu0 0.0
  %4345 = vmatprep.mubr.f32.mxu0 0.0
  %4346 = vmatmul.mubr.f32.gmra.mrb[0].mxu0 %v4279
  %v4347 = vpop.f32.mrb[0].mxu0
  %v4348 = vadd.f32 %v4273, %v4347
  %v4349 = vpop.f32.mrb[0].mxu0
  %4350 = vdwg.mxu0
  %v4351 = vld [vmem:[%s12] sm:$0x1]
  %v4353 = vlaneseq
  %v4354 = vshrl.u32 %v4353, 7
  %v4355 = vsub.s32 0, %v4354
  %v4356 = vrot.slane %v4351, %v4355
  %v4358 = vadd.f32 %v4348, %v4356
  %4359 = vst [vmem:[%s13] sm:$0x3] %v4358
  // Predicated region
  $region54: #{sep_forward.1} parent=0 // pred_check
    _
  $region55: #{sep_forward.1} parent=0 // pred_check_branch
    %4361 = sbr.rel (0) target = $region57
  $region56: #{sep_forward.1} parent=0 // pred_region
    _
  $region57: #{sep_forward.1} parent=0 // pred_fallthru
    _
  // Predicated region
  $region58: #{sep_forward.1} parent=0 // pred_check
    _
  $region59: #{sep_forward.1} parent=0 // pred_check_branch
    %4363 = sbr.rel (0) target = $region61
  $region60: #{sep_forward.1} parent=0 // pred_region
    _
  $region61: #{sep_forward.1} parent=0 // pred_fallthru
    _

</llo_original>
